<compile_context>
chip_gen: v6e
topology: v6e:2x2x1
jax: 0.10.0
libtpu: 0.0.40
codegen_flags: <defaults>
</compile_context>

<pallas_src>
import functools

import jax
import jax.numpy as jnp
import numpy as np
from jax import lax
from jax.experimental import pallas as pl
from jax.experimental.pallas import tpu as pltpu

C1, C2 = 32, 64          # conv1 / conv2 output channels (fixed by the module)
K1_PAD = 16              # conv1 im2col depth: 9 taps zero-padded to a multiple of 8


def _pool2x2(y, out_h, out_w):
    """Floor-mode 2x2 / stride-2 max pool over the two LEADING dims of a
    (h, w, tb, c) value.  Only leading-dim slices/reshapes + elementwise max,
    so no sublane/lane relayout is generated."""
    y = y[: 2 * out_h, : 2 * out_w]
    y = y.reshape(out_h, 2, 2 * out_w, *y.shape[2:])
    y = jnp.maximum(y[:, 0], y[:, 1])
    y = y.reshape(out_h, out_w, 2, *y.shape[2:])
    return jnp.maximum(y[:, :, 0], y[:, :, 1])


def _cnn_kernel(dims, x_ref, w1_ref, b1_ref, w2_ref, b2_ref, wfc_ref, bfc_ref,
                o_ref):
    ho1, wo1, hp1, wp1, ho2, wo2, hp2, wp2, tb = dims

    # ---- conv1 + ReLU: one (TB*ho1*wo1, 16) @ (16, 32) MXU matmul ----
    m1 = ho1 * wo1 * tb
    lhs1 = x_ref[...].reshape(m1, K1_PAD)              # layout-free: tb % 8 == 0
    a1 = jnp.dot(lhs1, w1_ref[...], preferred_element_type=jnp.float32)
    y1 = jnp.maximum(a1 + b1_ref[...], 0.0).reshape(ho1, wo1, tb, C1)

    y1p = _pool2x2(y1, hp1, wp1)                       # (hp1, wp1, tb, 32)

    # ---- conv2 + ReLU: 9 shift-and-accumulate dots, M = TB*ho2*wo2, K = 32 ----
    # TODO(synk): a single (M, 288) @ (288, 64) im2col dot would halve the MXU
    # passes but needs an unaligned lane-dim concatenate of 32-lane slices.
    m2 = ho2 * wo2 * tb
    acc2 = jnp.broadcast_to(b2_ref[...], (m2, C2))
    for di in range(3):
        for dj in range(3):
            lhs = y1p[di:di + ho2, dj:dj + wo2].reshape(m2, C1)
            acc2 = acc2 + jnp.dot(lhs, w2_ref[di * 3 + dj],
                                  preferred_element_type=jnp.float32)
    y2 = jnp.maximum(acc2, 0.0).reshape(ho2, wo2, tb, C2)

    y2p = _pool2x2(y2, hp2, wp2)                       # (hp2, wp2, tb, 64)

    # ---- global average pool folded into the FC head ----
    feat = jnp.sum(y2p.reshape(hp2 * wp2, tb, C2), axis=0) * (1.0 / (hp2 * wp2))
    logits = jnp.dot(feat, wfc_ref[...],
                     preferred_element_type=jnp.float32) + bfc_ref[...]
    o_ref[...] = logits.astype(o_ref.dtype)


def _pick_batch_tile(batch):
    """Batch tile: multiple of 8 (full sublane fill), capped at 32 so padded
    activations fit v7x's 64 MiB VMEM, and small enough to keep >= 2 grid
    steps when possible (v7x has 2 TensorCores)."""
    tb = 8
    while tb < 32 and batch >= 4 * tb:
        tb *= 2
    return tb


def cnn_forward(x_nchw, params, *, batch_tile=None):
    B, cin, H, W = x_nchw.shape
    assert cin == 1, "CNN spec: in_channels=1"
    NC = params["wfc"].shape[1]

    ho1, wo1 = H - 2, W - 2            # conv1 valid output
    hp1, wp1 = ho1 // 2, wo1 // 2      # pool1 (floor, like MaxPool2d(2))
    ho2, wo2 = hp1 - 2, wp1 - 2        # conv2 valid output
    hp2, wp2 = ho2 // 2, wo2 // 2      # pool2
    assert hp2 >= 1 and wp2 >= 1, "input too small for this CNN"

    TB = batch_tile or _pick_batch_tile(B)
    n_steps = -(-B // TB)
    B_pad = n_steps * TB

    # ---- wrapper-side layout plumbing only (tiny, done once by XLA) ----
    img = x_nchw[:, 0]                                        # (B, H, W)
    if B_pad != B:
        img = jnp.pad(img, ((0, B_pad - B), (0, 0), (0, 0)))
    taps = [img[:, di:di + ho1, dj:dj + wo1]
            for di in range(3) for dj in range(3)]
    patches = jnp.stack(taps, axis=-1)                        # (B_pad, ho1, wo1, 9)
    patches = jnp.transpose(patches, (1, 2, 0, 3))            # (ho1, wo1, B_pad, 9)
    patches = jnp.pad(patches, ((0, 0),) * 3 + ((0, K1_PAD - 9),))

    w1 = jnp.pad(params["w1"].reshape(9, C1),                 # row = di*3 + dj
                 ((0, K1_PAD - 9), (0, 0)))                   # zero taps -> no-op
    b1 = params["b1"].reshape(1, C1)
    w2 = params["w2"].reshape(9, C1, C2)                      # HWIO -> (tap, Cin, Cout)
    b2 = params["b2"].reshape(1, C2)
    wfc = params["wfc"]                                       # (64, NC)
    bfc = params["bfc"].reshape(1, NC)

    dims = (ho1, wo1, hp1, wp1, ho2, wo2, hp2, wp2, TB)
    kernel = functools.partial(_cnn_kernel, dims)

    out = pl.pallas_call(
        kernel,
        out_shape=jax.ShapeDtypeStruct((B_pad, NC), jnp.float32),
        grid=(n_steps,),
        in_specs=[
            pl.BlockSpec((ho1, wo1, TB, K1_PAD), lambda b: (0, 0, b, 0)),
            pl.BlockSpec((K1_PAD, C1), lambda b: (0, 0)),
            pl.BlockSpec((1, C1), lambda b: (0, 0)),
            pl.BlockSpec((9, C1, C2), lambda b: (0, 0, 0)),
            pl.BlockSpec((1, C2), lambda b: (0, 0)),
            pl.BlockSpec((C2, NC), lambda b: (0, 0)),
            pl.BlockSpec((1, NC), lambda b: (0, 0)),
        ],
        out_specs=pl.BlockSpec((TB, NC), lambda b: (b, 0)),
        compiler_params=pltpu.CompilerParams(
            dimension_semantics=("parallel",),
            vmem_limit_bytes=48 * 1024 * 1024),
    )(patches, w1, b1, w2, b2, wfc, bfc)
    return out[:B]


# --------------------------- reference ---------------------------

def cnn_reference(x_nchw, params):
    x = jnp.transpose(x_nchw, (0, 2, 3, 1))

    def block(x, w, b):
        y = lax.conv_general_dilated(
            x, w, window_strides=(1, 1), padding="VALID",
            dimension_numbers=("NHWC", "HWIO", "NHWC"))
        y = jnp.maximum(y + b[None, None, None, :], 0.0)
        return lax.reduce_window(y, -jnp.inf, lax.max,
                                 (1, 2, 2, 1), (1, 2, 2, 1), "VALID")

    x = block(x, params["w1"], params["b1"])
    x = block(x, params["w2"], params["b2"])
    feat = jnp.mean(x, axis=(1, 2))
    return feat @ params["wfc"] + params["bfc"]


def init_params(key, num_classes):
    k1, k2, k3 = jax.random.split(key, 3)
    return {
        "w1": 0.2 * jax.random.normal(k1, (3, 3, 1, 32), jnp.float32),
        "b1": 0.01 * jnp.arange(32, dtype=jnp.float32),
        "w2": 0.1 * jax.random.normal(k2, (3, 3, 32, 64), jnp.float32),
        "b2": 0.01 * jnp.arange(64, dtype=jnp.float32),
        "wfc": 0.1 * jax.random.normal(k3, (64, num_classes), jnp.float32),
        "bfc": 0.01 * jnp.arange(num_classes, dtype=jnp.float32),
    }


if __name__ == "__main__":
    num_classes = 10
    key = jax.random.PRNGKey(0)
    k_x, k_p = jax.random.split(key)
    # MNIST-like input (batch=16, 1 channel, 16x16 spatial), NCHW like PyTorch.
    # batch=16 with TB=8 exercises batch tiling and a 2-step "parallel" grid.
    x = jax.random.normal(k_x, (16, 1, 16, 16), jnp.float32)
    params = init_params(k_p, num_classes)

    fwd = jax.jit(cnn_forward)
    out = jax.block_until_ready(fwd(x, params))
    ref = jax.block_until_ready(cnn_reference(x, params))

    assert out.shape == (16, num_classes)
    np.testing.assert_allclose(np.asarray(out), np.asarray(ref), rtol=1e-4, atol=1e-4)
    print("KERNEL_OK")
</pallas_src>

<mosaic_0001>
module attributes {stable_mosaic.version = 11 : i64} {
  func.func @_cnn_kernel(%arg0: i32, %arg1: memref<14x14x8x16xf32, #tpu.memory_space<vmem>>, %arg2: memref<16x32xf32, #tpu.memory_space<vmem>>, %arg3: memref<1x32xf32, #tpu.memory_space<vmem>>, %arg4: memref<9x32x64xf32, #tpu.memory_space<vmem>>, %arg5: memref<1x64xf32, #tpu.memory_space<vmem>>, %arg6: memref<64x10xf32, #tpu.memory_space<vmem>>, %arg7: memref<1x10xf32, #tpu.memory_space<vmem>>, %arg8: memref<8x10xf32, #tpu.memory_space<vmem>>) attributes {dimension_semantics = [#tpu.dimension_semantics<parallel>], iteration_bounds = array<i64: 2>, scalar_prefetch = 0 : i64, scratch_operands = 0 : i64, tpu.core_type = #tpu.core_type<tc>, window_params = [{transform_indices = @transform_0, window_bounds = array<i64: 14, 14, 8, 16>}, {pipeline_mode = #tpu.pipeline_mode<synchronous>, transform_indices = @transform_1, window_bounds = array<i64: 16, 32>}, {pipeline_mode = #tpu.pipeline_mode<synchronous>, transform_indices = @transform_2, window_bounds = array<i64: 1, 32>}, {pipeline_mode = #tpu.pipeline_mode<synchronous>, transform_indices = @transform_3, window_bounds = array<i64: 9, 32, 64>}, {pipeline_mode = #tpu.pipeline_mode<synchronous>, transform_indices = @transform_4, window_bounds = array<i64: 1, 64>}, {pipeline_mode = #tpu.pipeline_mode<synchronous>, transform_indices = @transform_5, window_bounds = array<i64: 64, 10>}, {pipeline_mode = #tpu.pipeline_mode<synchronous>, transform_indices = @transform_6, window_bounds = array<i64: 1, 10>}, {transform_indices = @transform_7, window_bounds = array<i64: 8, 10>}]} {
    %c0 = arith.constant 0 : index
    %c0_0 = arith.constant 0 : index
    %c0_1 = arith.constant 0 : index
    %c0_2 = arith.constant 0 : index
    %0 = vector.load %arg1[%c0, %c0_0, %c0_1, %c0_2] : memref<14x14x8x16xf32, #tpu.memory_space<vmem>>, vector<14x14x8x16xf32>
    %1 = vector.shape_cast %0 : vector<14x14x8x16xf32> to vector<1568x16xf32>
    %c0_3 = arith.constant 0 : index
    %c0_4 = arith.constant 0 : index
    %2 = vector.load %arg2[%c0_3, %c0_4] : memref<16x32xf32, #tpu.memory_space<vmem>>, vector<16x32xf32>
    %cst = arith.constant dense<0.000000e+00> : vector<1568x32xf32>
    %3 = tpu.matmul %1, %2, %cst {dimension_numbers = #tpu.dot_dimension_numbers<[1], [0], [0], [1], [0, 0, 1, 1], [], []>} : vector<1568x16xf32>, vector<16x32xf32>, vector<1568x32xf32> -> vector<1568x32xf32>
    %c0_5 = arith.constant 0 : index
    %c0_6 = arith.constant 0 : index
    %4 = vector.load %arg3[%c0_5, %c0_6] : memref<1x32xf32, #tpu.memory_space<vmem>>, vector<1x32xf32>
    %5 = vector.broadcast %4 : vector<1x32xf32> to vector<1568x32xf32>
    %6 = arith.addf %3, %5 : vector<1568x32xf32>
    %cst_7 = arith.constant 0.000000e+00 : f32
    %7 = vector.broadcast %cst_7 : f32 to vector<1568x32xf32>
    %8 = arith.maximumf %6, %7 : vector<1568x32xf32>
    %9 = vector.shape_cast %8 : vector<1568x32xf32> to vector<14x14x8x32xf32>
    %10 = vector.shape_cast %9 : vector<14x14x8x32xf32> to vector<7x2x14x8x32xf32>
    %11 = vector.extract_strided_slice %10 {offsets = [0, 0, 0, 0, 0], sizes = [7, 1, 14, 8, 32], strides = [1, 1, 1, 1, 1]} : vector<7x2x14x8x32xf32> to vector<7x1x14x8x32xf32>
    %12 = vector.shape_cast %11 : vector<7x1x14x8x32xf32> to vector<7x14x8x32xf32>
    %13 = vector.extract_strided_slice %10 {offsets = [0, 1, 0, 0, 0], sizes = [7, 1, 14, 8, 32], strides = [1, 1, 1, 1, 1]} : vector<7x2x14x8x32xf32> to vector<7x1x14x8x32xf32>
    %14 = vector.shape_cast %13 : vector<7x1x14x8x32xf32> to vector<7x14x8x32xf32>
    %15 = arith.maximumf %12, %14 : vector<7x14x8x32xf32>
    %16 = vector.shape_cast %15 : vector<7x14x8x32xf32> to vector<7x7x2x8x32xf32>
    %17 = vector.extract_strided_slice %16 {offsets = [0, 0, 0, 0, 0], sizes = [7, 7, 1, 8, 32], strides = [1, 1, 1, 1, 1]} : vector<7x7x2x8x32xf32> to vector<7x7x1x8x32xf32>
    %18 = vector.shape_cast %17 : vector<7x7x1x8x32xf32> to vector<7x7x8x32xf32>
    %19 = vector.extract_strided_slice %16 {offsets = [0, 0, 1, 0, 0], sizes = [7, 7, 1, 8, 32], strides = [1, 1, 1, 1, 1]} : vector<7x7x2x8x32xf32> to vector<7x7x1x8x32xf32>
    %20 = vector.shape_cast %19 : vector<7x7x1x8x32xf32> to vector<7x7x8x32xf32>
    %21 = arith.maximumf %18, %20 : vector<7x7x8x32xf32>
    %c0_8 = arith.constant 0 : index
    %c0_9 = arith.constant 0 : index
    %22 = vector.load %arg5[%c0_8, %c0_9] : memref<1x64xf32, #tpu.memory_space<vmem>>, vector<1x64xf32>
    %23 = vector.shape_cast %22 : vector<1x64xf32> to vector<1x64xf32>
    %24 = vector.broadcast %23 : vector<1x64xf32> to vector<200x64xf32>
    %25 = vector.extract_strided_slice %21 {offsets = [0, 0, 0, 0], sizes = [5, 5, 8, 32], strides = [1, 1, 1, 1]} : vector<7x7x8x32xf32> to vector<5x5x8x32xf32>
    %26 = vector.shape_cast %25 : vector<5x5x8x32xf32> to vector<200x32xf32>
    %c0_10 = arith.constant 0 : index
    %c0_11 = arith.constant 0 : index
    %c0_12 = arith.constant 0 : index
    %27 = vector.load %arg4[%c0_10, %c0_11, %c0_12] : memref<9x32x64xf32, #tpu.memory_space<vmem>>, vector<1x32x64xf32>
    %28 = vector.shape_cast %27 : vector<1x32x64xf32> to vector<32x64xf32>
    %cst_13 = arith.constant dense<0.000000e+00> : vector<200x64xf32>
    %29 = tpu.matmul %26, %28, %cst_13 {dimension_numbers = #tpu.dot_dimension_numbers<[1], [0], [0], [1], [0, 0, 1, 1], [], []>} : vector<200x32xf32>, vector<32x64xf32>, vector<200x64xf32> -> vector<200x64xf32>
    %30 = arith.addf %24, %29 : vector<200x64xf32>
    %31 = vector.extract_strided_slice %21 {offsets = [0, 1, 0, 0], sizes = [5, 5, 8, 32], strides = [1, 1, 1, 1]} : vector<7x7x8x32xf32> to vector<5x5x8x32xf32>
    %32 = vector.shape_cast %31 : vector<5x5x8x32xf32> to vector<200x32xf32>
    %c1 = arith.constant 1 : index
    %c0_14 = arith.constant 0 : index
    %c0_15 = arith.constant 0 : index
    %33 = vector.load %arg4[%c1, %c0_14, %c0_15] : memref<9x32x64xf32, #tpu.memory_space<vmem>>, vector<1x32x64xf32>
    %34 = vector.shape_cast %33 : vector<1x32x64xf32> to vector<32x64xf32>
    %cst_16 = arith.constant dense<0.000000e+00> : vector<200x64xf32>
    %35 = tpu.matmul %32, %34, %cst_16 {dimension_numbers = #tpu.dot_dimension_numbers<[1], [0], [0], [1], [0, 0, 1, 1], [], []>} : vector<200x32xf32>, vector<32x64xf32>, vector<200x64xf32> -> vector<200x64xf32>
    %36 = arith.addf %30, %35 : vector<200x64xf32>
    %37 = vector.extract_strided_slice %21 {offsets = [0, 2, 0, 0], sizes = [5, 5, 8, 32], strides = [1, 1, 1, 1]} : vector<7x7x8x32xf32> to vector<5x5x8x32xf32>
    %38 = vector.shape_cast %37 : vector<5x5x8x32xf32> to vector<200x32xf32>
    %c2 = arith.constant 2 : index
    %c0_17 = arith.constant 0 : index
    %c0_18 = arith.constant 0 : index
    %39 = vector.load %arg4[%c2, %c0_17, %c0_18] : memref<9x32x64xf32, #tpu.memory_space<vmem>>, vector<1x32x64xf32>
    %40 = vector.shape_cast %39 : vector<1x32x64xf32> to vector<32x64xf32>
    %cst_19 = arith.constant dense<0.000000e+00> : vector<200x64xf32>
    %41 = tpu.matmul %38, %40, %cst_19 {dimension_numbers = #tpu.dot_dimension_numbers<[1], [0], [0], [1], [0, 0, 1, 1], [], []>} : vector<200x32xf32>, vector<32x64xf32>, vector<200x64xf32> -> vector<200x64xf32>
    %42 = arith.addf %36, %41 : vector<200x64xf32>
    %43 = vector.extract_strided_slice %21 {offsets = [1, 0, 0, 0], sizes = [5, 5, 8, 32], strides = [1, 1, 1, 1]} : vector<7x7x8x32xf32> to vector<5x5x8x32xf32>
    %44 = vector.shape_cast %43 : vector<5x5x8x32xf32> to vector<200x32xf32>
    %c3 = arith.constant 3 : index
    %c0_20 = arith.constant 0 : index
    %c0_21 = arith.constant 0 : index
    %45 = vector.load %arg4[%c3, %c0_20, %c0_21] : memref<9x32x64xf32, #tpu.memory_space<vmem>>, vector<1x32x64xf32>
    %46 = vector.shape_cast %45 : vector<1x32x64xf32> to vector<32x64xf32>
    %cst_22 = arith.constant dense<0.000000e+00> : vector<200x64xf32>
    %47 = tpu.matmul %44, %46, %cst_22 {dimension_numbers = #tpu.dot_dimension_numbers<[1], [0], [0], [1], [0, 0, 1, 1], [], []>} : vector<200x32xf32>, vector<32x64xf32>, vector<200x64xf32> -> vector<200x64xf32>
    %48 = arith.addf %42, %47 : vector<200x64xf32>
    %49 = vector.extract_strided_slice %21 {offsets = [1, 1, 0, 0], sizes = [5, 5, 8, 32], strides = [1, 1, 1, 1]} : vector<7x7x8x32xf32> to vector<5x5x8x32xf32>
    %50 = vector.shape_cast %49 : vector<5x5x8x32xf32> to vector<200x32xf32>
    %c4 = arith.constant 4 : index
    %c0_23 = arith.constant 0 : index
    %c0_24 = arith.constant 0 : index
    %51 = vector.load %arg4[%c4, %c0_23, %c0_24] : memref<9x32x64xf32, #tpu.memory_space<vmem>>, vector<1x32x64xf32>
    %52 = vector.shape_cast %51 : vector<1x32x64xf32> to vector<32x64xf32>
    %cst_25 = arith.constant dense<0.000000e+00> : vector<200x64xf32>
    %53 = tpu.matmul %50, %52, %cst_25 {dimension_numbers = #tpu.dot_dimension_numbers<[1], [0], [0], [1], [0, 0, 1, 1], [], []>} : vector<200x32xf32>, vector<32x64xf32>, vector<200x64xf32> -> vector<200x64xf32>
    %54 = arith.addf %48, %53 : vector<200x64xf32>
    %55 = vector.extract_strided_slice %21 {offsets = [1, 2, 0, 0], sizes = [5, 5, 8, 32], strides = [1, 1, 1, 1]} : vector<7x7x8x32xf32> to vector<5x5x8x32xf32>
    %56 = vector.shape_cast %55 : vector<5x5x8x32xf32> to vector<200x32xf32>
    %c5 = arith.constant 5 : index
    %c0_26 = arith.constant 0 : index
    %c0_27 = arith.constant 0 : index
    %57 = vector.load %arg4[%c5, %c0_26, %c0_27] : memref<9x32x64xf32, #tpu.memory_space<vmem>>, vector<1x32x64xf32>
    %58 = vector.shape_cast %57 : vector<1x32x64xf32> to vector<32x64xf32>
    %cst_28 = arith.constant dense<0.000000e+00> : vector<200x64xf32>
    %59 = tpu.matmul %56, %58, %cst_28 {dimension_numbers = #tpu.dot_dimension_numbers<[1], [0], [0], [1], [0, 0, 1, 1], [], []>} : vector<200x32xf32>, vector<32x64xf32>, vector<200x64xf32> -> vector<200x64xf32>
    %60 = arith.addf %54, %59 : vector<200x64xf32>
    %61 = vector.extract_strided_slice %21 {offsets = [2, 0, 0, 0], sizes = [5, 5, 8, 32], strides = [1, 1, 1, 1]} : vector<7x7x8x32xf32> to vector<5x5x8x32xf32>
    %62 = vector.shape_cast %61 : vector<5x5x8x32xf32> to vector<200x32xf32>
    %c6 = arith.constant 6 : index
    %c0_29 = arith.constant 0 : index
    %c0_30 = arith.constant 0 : index
    %63 = vector.load %arg4[%c6, %c0_29, %c0_30] : memref<9x32x64xf32, #tpu.memory_space<vmem>>, vector<1x32x64xf32>
    %64 = vector.shape_cast %63 : vector<1x32x64xf32> to vector<32x64xf32>
    %cst_31 = arith.constant dense<0.000000e+00> : vector<200x64xf32>
    %65 = tpu.matmul %62, %64, %cst_31 {dimension_numbers = #tpu.dot_dimension_numbers<[1], [0], [0], [1], [0, 0, 1, 1], [], []>} : vector<200x32xf32>, vector<32x64xf32>, vector<200x64xf32> -> vector<200x64xf32>
    %66 = arith.addf %60, %65 : vector<200x64xf32>
    %67 = vector.extract_strided_slice %21 {offsets = [2, 1, 0, 0], sizes = [5, 5, 8, 32], strides = [1, 1, 1, 1]} : vector<7x7x8x32xf32> to vector<5x5x8x32xf32>
    %68 = vector.shape_cast %67 : vector<5x5x8x32xf32> to vector<200x32xf32>
    %c7 = arith.constant 7 : index
    %c0_32 = arith.constant 0 : index
    %c0_33 = arith.constant 0 : index
    %69 = vector.load %arg4[%c7, %c0_32, %c0_33] : memref<9x32x64xf32, #tpu.memory_space<vmem>>, vector<1x32x64xf32>
    %70 = vector.shape_cast %69 : vector<1x32x64xf32> to vector<32x64xf32>
    %cst_34 = arith.constant dense<0.000000e+00> : vector<200x64xf32>
    %71 = tpu.matmul %68, %70, %cst_34 {dimension_numbers = #tpu.dot_dimension_numbers<[1], [0], [0], [1], [0, 0, 1, 1], [], []>} : vector<200x32xf32>, vector<32x64xf32>, vector<200x64xf32> -> vector<200x64xf32>
    %72 = arith.addf %66, %71 : vector<200x64xf32>
    %73 = vector.extract_strided_slice %21 {offsets = [2, 2, 0, 0], sizes = [5, 5, 8, 32], strides = [1, 1, 1, 1]} : vector<7x7x8x32xf32> to vector<5x5x8x32xf32>
    %74 = vector.shape_cast %73 : vector<5x5x8x32xf32> to vector<200x32xf32>
    %c8 = arith.constant 8 : index
    %c0_35 = arith.constant 0 : index
    %c0_36 = arith.constant 0 : index
    %75 = vector.load %arg4[%c8, %c0_35, %c0_36] : memref<9x32x64xf32, #tpu.memory_space<vmem>>, vector<1x32x64xf32>
    %76 = vector.shape_cast %75 : vector<1x32x64xf32> to vector<32x64xf32>
    %cst_37 = arith.constant dense<0.000000e+00> : vector<200x64xf32>
    %77 = tpu.matmul %74, %76, %cst_37 {dimension_numbers = #tpu.dot_dimension_numbers<[1], [0], [0], [1], [0, 0, 1, 1], [], []>} : vector<200x32xf32>, vector<32x64xf32>, vector<200x64xf32> -> vector<200x64xf32>
    %78 = arith.addf %72, %77 : vector<200x64xf32>
    %cst_38 = arith.constant 0.000000e+00 : f32
    %79 = vector.broadcast %cst_38 : f32 to vector<200x64xf32>
    %80 = arith.maximumf %78, %79 : vector<200x64xf32>
    %81 = vector.shape_cast %80 : vector<200x64xf32> to vector<5x5x8x64xf32>
    %82 = vector.extract_strided_slice %81 {offsets = [0, 0, 0, 0], sizes = [4, 4, 8, 64], strides = [1, 1, 1, 1]} : vector<5x5x8x64xf32> to vector<4x4x8x64xf32>
    %83 = vector.shape_cast %82 : vector<4x4x8x64xf32> to vector<2x2x4x8x64xf32>
    %84 = vector.extract_strided_slice %83 {offsets = [0, 0, 0, 0, 0], sizes = [2, 1, 4, 8, 64], strides = [1, 1, 1, 1, 1]} : vector<2x2x4x8x64xf32> to vector<2x1x4x8x64xf32>
    %85 = vector.shape_cast %84 : vector<2x1x4x8x64xf32> to vector<2x4x8x64xf32>
    %86 = vector.extract_strided_slice %83 {offsets = [0, 1, 0, 0, 0], sizes = [2, 1, 4, 8, 64], strides = [1, 1, 1, 1, 1]} : vector<2x2x4x8x64xf32> to vector<2x1x4x8x64xf32>
    %87 = vector.shape_cast %86 : vector<2x1x4x8x64xf32> to vector<2x4x8x64xf32>
    %88 = arith.maximumf %85, %87 : vector<2x4x8x64xf32>
    %89 = vector.shape_cast %88 : vector<2x4x8x64xf32> to vector<2x2x2x8x64xf32>
    %90 = vector.extract_strided_slice %89 {offsets = [0, 0, 0, 0, 0], sizes = [2, 2, 1, 8, 64], strides = [1, 1, 1, 1, 1]} : vector<2x2x2x8x64xf32> to vector<2x2x1x8x64xf32>
    %91 = vector.shape_cast %90 : vector<2x2x1x8x64xf32> to vector<2x2x8x64xf32>
    %92 = vector.extract_strided_slice %89 {offsets = [0, 0, 1, 0, 0], sizes = [2, 2, 1, 8, 64], strides = [1, 1, 1, 1, 1]} : vector<2x2x2x8x64xf32> to vector<2x2x1x8x64xf32>
    %93 = vector.shape_cast %92 : vector<2x2x1x8x64xf32> to vector<2x2x8x64xf32>
    %94 = arith.maximumf %91, %93 : vector<2x2x8x64xf32>
    %95 = vector.shape_cast %94 : vector<2x2x8x64xf32> to vector<4x8x64xf32>
    %cst_39 = arith.constant dense<0.000000e+00> : vector<8x64xf32>
    %96 = vector.multi_reduction <add>, %95, %cst_39 [0] : vector<4x8x64xf32> to vector<8x64xf32>
    %cst_40 = arith.constant 2.500000e-01 : f32
    %97 = vector.broadcast %cst_40 : f32 to vector<8x64xf32>
    %98 = arith.mulf %96, %97 : vector<8x64xf32>
    %c0_41 = arith.constant 0 : index
    %c0_42 = arith.constant 0 : index
    %99 = vector.load %arg6[%c0_41, %c0_42] : memref<64x10xf32, #tpu.memory_space<vmem>>, vector<64x10xf32>
    %cst_43 = arith.constant dense<0.000000e+00> : vector<8x10xf32>
    %100 = tpu.matmul %98, %99, %cst_43 {dimension_numbers = #tpu.dot_dimension_numbers<[1], [0], [0], [1], [0, 0, 1, 1], [], []>} : vector<8x64xf32>, vector<64x10xf32>, vector<8x10xf32> -> vector<8x10xf32>
    %c0_44 = arith.constant 0 : index
    %c0_45 = arith.constant 0 : index
    %101 = vector.load %arg7[%c0_44, %c0_45] : memref<1x10xf32, #tpu.memory_space<vmem>>, vector<1x10xf32>
    %102 = vector.broadcast %101 : vector<1x10xf32> to vector<8x10xf32>
    %103 = arith.addf %100, %102 : vector<8x10xf32>
    %c0_46 = arith.constant 0 : index
    %c0_47 = arith.constant 0 : index
    %104 = vector.load %arg8[%c0_46, %c0_47] : memref<8x10xf32, #tpu.memory_space<vmem>>, vector<8x10xf32>
    tpu.vector_store %arg8[%c0_46, %c0_47], %103 {strides = array<i32>} : memref<8x10xf32, #tpu.memory_space<vmem>>, vector<8x10xf32>,
    return
  }
  func.func @transform_0(%arg0: i32) -> (i32, i32, i32, i32) {
    %c0_i32 = arith.constant 0 : i32
    %c0_i32_0 = arith.constant 0 : i32
    %c0_i32_1 = arith.constant 0 : i32
    %c0_i32_2 = arith.constant 0 : i32
    return %c0_i32, %c0_i32_0, %arg0, %c0_i32_1 : i32, i32, i32, i32
  }
  func.func @transform_1(%arg0: i32) -> (i32, i32) {
    %c0_i32 = arith.constant 0 : i32
    %c0_i32_0 = arith.constant 0 : i32
    %c0_i32_1 = arith.constant 0 : i32
    return %c0_i32, %c0_i32_0 : i32, i32
  }
  func.func @transform_2(%arg0: i32) -> (i32, i32) {
    %c0_i32 = arith.constant 0 : i32
    %c0_i32_0 = arith.constant 0 : i32
    %c0_i32_1 = arith.constant 0 : i32
    return %c0_i32, %c0_i32_0 : i32, i32
  }
  func.func @transform_3(%arg0: i32) -> (i32, i32, i32) {
    %c0_i32 = arith.constant 0 : i32
    %c0_i32_0 = arith.constant 0 : i32
    %c0_i32_1 = arith.constant 0 : i32
    %c0_i32_2 = arith.constant 0 : i32
    return %c0_i32, %c0_i32_0, %c0_i32_1 : i32, i32, i32
  }
  func.func @transform_4(%arg0: i32) -> (i32, i32) {
    %c0_i32 = arith.constant 0 : i32
    %c0_i32_0 = arith.constant 0 : i32
    %c0_i32_1 = arith.constant 0 : i32
    return %c0_i32, %c0_i32_0 : i32, i32
  }
  func.func @transform_5(%arg0: i32) -> (i32, i32) {
    %c0_i32 = arith.constant 0 : i32
    %c0_i32_0 = arith.constant 0 : i32
    %c0_i32_1 = arith.constant 0 : i32
    return %c0_i32, %c0_i32_0 : i32, i32
  }
  func.func @transform_6(%arg0: i32) -> (i32, i32) {
    %c0_i32 = arith.constant 0 : i32
    %c0_i32_0 = arith.constant 0 : i32
    %c0_i32_1 = arith.constant 0 : i32
    return %c0_i32, %c0_i32_0 : i32, i32
  }
  func.func @transform_7(%arg0: i32) -> (i32, i32) {
    %c0_i32 = arith.constant 0 : i32
    %c0_i32_0 = arith.constant 0 : i32
    return %arg0, %c0_i32 : i32, i32
  }
}

</mosaic_0001>

<llo_original>
// kernel: cnn_forward.1
$region0: #{cnn_forward.1}
  #allocation0 [shape = 'u32[]', space=smem, size = 0x4, offset = 0x4, fixed_abs, tag = 'smem constant byte address 0x4 - core index']
  #allocation1 [shape = 'u32[144,128]{1,0:T(1,128)}', space=vmem, size = 0x12000, scoped, tag = 'internal scratch']
  %s0 = inlined_call_operand.vmem [shape: f32[14,14,16,16], index: 0, kind: input, shape index: {}]
  %s1 = inlined_call_operand.vmem [shape: f32[16,32], index: 1, kind: input, shape index: {}]
  %s2 = inlined_call_operand.vmem [shape: f32[1,32], index: 2, kind: input, shape index: {}]
  %s3 = inlined_call_operand.vmem [shape: f32[9,32,64], index: 3, kind: input, shape index: {}]
  %s4 = inlined_call_operand.vmem [shape: f32[1,64], index: 4, kind: input, shape index: {}]
  %s5 = inlined_call_operand.vmem [shape: f32[64,10], index: 5, kind: input, shape index: {}]
  %s6 = inlined_call_operand.vmem [shape: f32[1,10], index: 6, kind: input, shape index: {}]
  %s7 = inlined_call_operand.hbm [shape: f32[16,10], index: 7, kind: output, shape index: {}]
  %s8 = sld [smem:[#allocation0]]
  $region99: #{cnn_forward.1} parent=0
    _
  %s10 = ssub.s32 1, %s8
  %s11 = scalar_select 0, %s10, %s8
  $region1: #{cnn_forward.1} parent=0
    #allocation2 [shape = 'u8[1605632]{0}', space=vmem, size = 0x188000, scoped, tag = 'input window, operand 0']
    #allocation3 [shape = 'u8[8192]{0}', space=vmem, size = 0x2000, scoped, tag = 'output window, operand 0']
    #allocation4 [shape = 's32[2]{0}', space=sflag, size = 0x8, scoped, tag = 'scoped memory for cnn_forward.1']
    %12 = vsyncpa [#allocation4], 0
    %s13 = scalar_lea.sflag [#allocation4], 1
    %14 = vsyncpa %s13, 0
    loop: start=0, step=1, limit=4
    $region2: #{cnn_forward.1} parent=1 // loop_pre_header
      _
    $region3: #{cnn_forward.1} parent=1 // loop_header
      %s16 = sphi 0, %s20
      %p17 = scmp.ge.s32.totalorder %s16, 4
      %s26 = sphi 0, %s28
      %s29 = sphi 0, %s26
      %s30 = sphi 0, %s29
      %s46 = sphi 0, %s30
      %s50 = sphi 0, %s50
      %s52 = sphi 0, %s50
      %s53 = sphi 0, %s52
      %s67 = sphi 0, %s53
      %s71 = sphi 0, %s71
      %s73 = sphi 0, %s71
      %s74 = sphi 0, %s73
      %s88 = sphi 0, %s74
      %s92 = sphi 0, %s92
      %s94 = sphi 0, %s92
      %s95 = sphi 0, %s94
      %s109 = sphi 0, %s95
      %s113 = sphi 0, %s113
      %s115 = sphi 0, %s113
      %s116 = sphi 0, %s115
      %s130 = sphi 0, %s116
      %s134 = sphi 0, %s134
      %s136 = sphi 0, %s134
      %s137 = sphi 0, %s136
      %s151 = sphi 0, %s137
      %s155 = sphi 0, %s155
      %s157 = sphi 0, %s155
      %s158 = sphi 0, %s157
      %s172 = sphi 0, %s158
      %s178 = sphi 0, %s180
      %s181 = sphi 0, %s178
      %s182 = sphi 0, %s181
      %s198 = sphi 0, %s182
    $region4: #{cnn_forward.1} parent=1 // loop_header_branch
      %19 = sbr.rel (%p17) target = $region8
    $region5: #{cnn_forward.1} parent=1 // loop_body
      %s21 = ssub.s32 %s16, 1
      %s22 = ssub.s32 %s16, 2
      %s23 = sadd.s32 %s16, 1
      %s24 = ssub.s32 %s16, %s23
      %p25 = scmp.eq.s32.totalorder %s24, 0
      %s27 = sadd.s32 %s26, 1
      %s28 = scalar_select %p25, %s26, %s27
      %p31 = pneg %p25
      %p32 = scmp.eq.s32.totalorder %s16, 1
      %p33 = por %p31, %p32
      %p34 = scmp.ne.s32.totalorder %s26, %s29
      %p35 = scmp.eq.s32.totalorder %s16, 0
      %p36 = por %p34, %p35
      %p37 = scmp.ne.s32.totalorder %s26, %s29
      %p38 = scmp.eq.s32.totalorder %s21, 1
      %p39 = por %p37, %p38
      %p40 = scmp.ne.s32.totalorder %s29, %s30
      %p41 = scmp.eq.s32.totalorder %s21, 0
      %p42 = por %p40, %p41
      %p43 = scmp.ne.s32.totalorder %s29, %s30
      %p44 = scmp.eq.s32.totalorder %s22, 1
      %p45 = por %p43, %p44
      %p47 = scmp.ne.s32.totalorder %s30, %s46
      %p48 = scmp.eq.s32.totalorder %s22, 0
      %p49 = por %p47, %p48
      %s51 = sadd.s32 %s50, 1
      %p54 = scmp.eq.s32.totalorder %s16, 1
      %p55 = scmp.ne.s32.totalorder %s50, %s52
      %p56 = scmp.eq.s32.totalorder %s16, 0
      %p57 = por %p55, %p56
      %p58 = scmp.ne.s32.totalorder %s50, %s52
      %p59 = scmp.eq.s32.totalorder %s21, 1
      %p60 = por %p58, %p59
      %p61 = scmp.ne.s32.totalorder %s52, %s53
      %p62 = scmp.eq.s32.totalorder %s21, 0
      %p63 = por %p61, %p62
      %p64 = scmp.ne.s32.totalorder %s52, %s53
      %p65 = scmp.eq.s32.totalorder %s22, 1
      %p66 = por %p64, %p65
      %p68 = scmp.ne.s32.totalorder %s53, %s67
      %p69 = scmp.eq.s32.totalorder %s22, 0
      %p70 = por %p68, %p69
      %s72 = sadd.s32 %s71, 1
      %p75 = scmp.eq.s32.totalorder %s16, 1
      %p76 = scmp.ne.s32.totalorder %s71, %s73
      %p77 = scmp.eq.s32.totalorder %s16, 0
      %p78 = por %p76, %p77
      %p79 = scmp.ne.s32.totalorder %s71, %s73
      %p80 = scmp.eq.s32.totalorder %s21, 1
      %p81 = por %p79, %p80
      %p82 = scmp.ne.s32.totalorder %s73, %s74
      %p83 = scmp.eq.s32.totalorder %s21, 0
      %p84 = por %p82, %p83
      %p85 = scmp.ne.s32.totalorder %s73, %s74
      %p86 = scmp.eq.s32.totalorder %s22, 1
      %p87 = por %p85, %p86
      %p89 = scmp.ne.s32.totalorder %s74, %s88
      %p90 = scmp.eq.s32.totalorder %s22, 0
      %p91 = por %p89, %p90
      %s93 = sadd.s32 %s92, 1
      %p96 = scmp.eq.s32.totalorder %s16, 1
      %p97 = scmp.ne.s32.totalorder %s92, %s94
      %p98 = scmp.eq.s32.totalorder %s16, 0
      %p99 = por %p97, %p98
      %p100 = scmp.ne.s32.totalorder %s92, %s94
      %p101 = scmp.eq.s32.totalorder %s21, 1
      %p102 = por %p100, %p101
      %p103 = scmp.ne.s32.totalorder %s94, %s95
      %p104 = scmp.eq.s32.totalorder %s21, 0
      %p105 = por %p103, %p104
      %p106 = scmp.ne.s32.totalorder %s94, %s95
      %p107 = scmp.eq.s32.totalorder %s22, 1
      %p108 = por %p106, %p107
      %p110 = scmp.ne.s32.totalorder %s95, %s109
      %p111 = scmp.eq.s32.totalorder %s22, 0
      %p112 = por %p110, %p111
      %s114 = sadd.s32 %s113, 1
      %p117 = scmp.eq.s32.totalorder %s16, 1
      %p118 = scmp.ne.s32.totalorder %s113, %s115
      %p119 = scmp.eq.s32.totalorder %s16, 0
      %p120 = por %p118, %p119
      %p121 = scmp.ne.s32.totalorder %s113, %s115
      %p122 = scmp.eq.s32.totalorder %s21, 1
      %p123 = por %p121, %p122
      %p124 = scmp.ne.s32.totalorder %s115, %s116
      %p125 = scmp.eq.s32.totalorder %s21, 0
      %p126 = por %p124, %p125
      %p127 = scmp.ne.s32.totalorder %s115, %s116
      %p128 = scmp.eq.s32.totalorder %s22, 1
      %p129 = por %p127, %p128
      %p131 = scmp.ne.s32.totalorder %s116, %s130
      %p132 = scmp.eq.s32.totalorder %s22, 0
      %p133 = por %p131, %p132
      %s135 = sadd.s32 %s134, 1
      %p138 = scmp.eq.s32.totalorder %s16, 1
      %p139 = scmp.ne.s32.totalorder %s134, %s136
      %p140 = scmp.eq.s32.totalorder %s16, 0
      %p141 = por %p139, %p140
      %p142 = scmp.ne.s32.totalorder %s134, %s136
      %p143 = scmp.eq.s32.totalorder %s21, 1
      %p144 = por %p142, %p143
      %p145 = scmp.ne.s32.totalorder %s136, %s137
      %p146 = scmp.eq.s32.totalorder %s21, 0
      %p147 = por %p145, %p146
      %p148 = scmp.ne.s32.totalorder %s136, %s137
      %p149 = scmp.eq.s32.totalorder %s22, 1
      %p150 = por %p148, %p149
      %p152 = scmp.ne.s32.totalorder %s137, %s151
      %p153 = scmp.eq.s32.totalorder %s22, 0
      %p154 = por %p152, %p153
      %s156 = sadd.s32 %s155, 1
      %p159 = scmp.eq.s32.totalorder %s16, 1
      %p160 = scmp.ne.s32.totalorder %s155, %s157
      %p161 = scmp.eq.s32.totalorder %s16, 0
      %p162 = por %p160, %p161
      %p163 = scmp.ne.s32.totalorder %s155, %s157
      %p164 = scmp.eq.s32.totalorder %s21, 1
      %p165 = por %p163, %p164
      %p166 = scmp.ne.s32.totalorder %s157, %s158
      %p167 = scmp.eq.s32.totalorder %s21, 0
      %p168 = por %p166, %p167
      %p169 = scmp.ne.s32.totalorder %s157, %s158
      %p170 = scmp.eq.s32.totalorder %s22, 1
      %p171 = por %p169, %p170
      %p173 = scmp.ne.s32.totalorder %s158, %s172
      %p174 = scmp.eq.s32.totalorder %s22, 0
      %p175 = por %p173, %p174
      %s176 = ssub.s32 %s16, %s23
      %p177 = scmp.eq.s32.totalorder %s176, 0
      %s179 = sadd.s32 %s178, 1
      %s180 = scalar_select %p177, %s178, %s179
      %p183 = pneg %p177
      %p184 = scmp.eq.s32.totalorder %s16, 1
      %p185 = por %p183, %p184
      %p186 = scmp.ne.s32.totalorder %s178, %s181
      %p187 = scmp.eq.s32.totalorder %s16, 0
      %p188 = por %p186, %p187
      %p189 = scmp.ne.s32.totalorder %s178, %s181
      %p190 = scmp.eq.s32.totalorder %s21, 1
      %p191 = por %p189, %p190
      %p192 = scmp.ne.s32.totalorder %s181, %s182
      %p193 = scmp.eq.s32.totalorder %s21, 0
      %p194 = por %p192, %p193
      %p195 = scmp.ne.s32.totalorder %s181, %s182
      %p196 = scmp.eq.s32.totalorder %s22, 1
      %p197 = por %p195, %p196
      %p199 = scmp.ne.s32.totalorder %s182, %s198
      %p200 = scmp.eq.s32.totalorder %s22, 0
      %p201 = por %p199, %p200
      %p202 = scmp.le.s32.totalorder 1, %s16
      %p203 = scmp.lt.s32.totalorder %s16, 3
      %p204 = pnand %p202, %p203
      %p205 = pneg %p204
      // Predicated region
      $region9: #{cnn_forward.1} parent=5 // pred_check
        _
      $region10: #{cnn_forward.1} parent=5 // pred_check_branch
        %207 = sbr.rel (%p204) target = $region12
      $region11: #{cnn_forward.1} parent=5 // pred_region
        %s208 = ssub.s32 %s16, 1
        // Predicated region
        $region13: #{cnn_forward.1} parent=11 // pred_check
          %p209 = pneg %p63
        $region14: #{cnn_forward.1} parent=11 // pred_check_branch
          %211 = sbr.rel (%p209) target = $region16
        $region15: #{cnn_forward.1} parent=11 // pred_region
          _
        $region16: #{cnn_forward.1} parent=11 // pred_fallthru
          _
        // Predicated region
        $region17: #{cnn_forward.1} parent=11 // pred_check
          %p212 = pneg %p84
        $region18: #{cnn_forward.1} parent=11 // pred_check_branch
          %214 = sbr.rel (%p212) target = $region20
        $region19: #{cnn_forward.1} parent=11 // pred_region
          _
        $region20: #{cnn_forward.1} parent=11 // pred_fallthru
          _
        // Predicated region
        $region21: #{cnn_forward.1} parent=11 // pred_check
          %p215 = pneg %p105
        $region22: #{cnn_forward.1} parent=11 // pred_check_branch
          %217 = sbr.rel (%p215) target = $region24
        $region23: #{cnn_forward.1} parent=11 // pred_region
          _
        $region24: #{cnn_forward.1} parent=11 // pred_fallthru
          _
        // Predicated region
        $region25: #{cnn_forward.1} parent=11 // pred_check
          %p218 = pneg %p126
        $region26: #{cnn_forward.1} parent=11 // pred_check_branch
          %220 = sbr.rel (%p218) target = $region28
        $region27: #{cnn_forward.1} parent=11 // pred_region
          _
        $region28: #{cnn_forward.1} parent=11 // pred_fallthru
          _
        // Predicated region
        $region29: #{cnn_forward.1} parent=11 // pred_check
          %p221 = pneg %p147
        $region30: #{cnn_forward.1} parent=11 // pred_check_branch
          %223 = sbr.rel (%p221) target = $region32
        $region31: #{cnn_forward.1} parent=11 // pred_region
          _
        $region32: #{cnn_forward.1} parent=11 // pred_fallthru
          _
        // Predicated region
        $region33: #{cnn_forward.1} parent=11 // pred_check
          %p224 = pneg %p168
        $region34: #{cnn_forward.1} parent=11 // pred_check_branch
          %226 = sbr.rel (%p224) target = $region36
        $region35: #{cnn_forward.1} parent=11 // pred_region
          _
        $region36: #{cnn_forward.1} parent=11 // pred_fallthru
          _
      $region12: #{cnn_forward.1} parent=5 // pred_fallthru
        _
      %p227 = scmp.lt.s32.totalorder %s16, 2
      // Predicated region
      $region37: #{cnn_forward.1} parent=5 // pred_check
        %p228 = pneg %p227
      $region38: #{cnn_forward.1} parent=5 // pred_check_branch
        %230 = sbr.rel (%p228) target = $region40
      $region39: #{cnn_forward.1} parent=5 // pred_region
        // Predicated region
        $region41: #{cnn_forward.1} parent=39 // pred_check
          %p231 = pneg %p36
        $region42: #{cnn_forward.1} parent=39 // pred_check_branch
          %233 = sbr.rel (%p231) target = $region44
        $region43: #{cnn_forward.1} parent=39 // pred_region
          %s234 = sand.u32 %s26, 1
          %s235 = sand.u32 %s26, 1
          %s236 = smul.addr %s235, 1568
          %s237 = scalar_lea.vmem [#allocation2], %s236
          %s238 = smul.addr %s16, 8
          %s239 = scalar_lea.vmem %s0, %s238
          // Predicated region
          $region45: #{cnn_forward.1} parent=43 // pred_check
            _
          $region46: #{cnn_forward.1} parent=43 // pred_check_branch
            %241 = sbr.rel (0) target = $region48
          $region47: #{cnn_forward.1} parent=43 // pred_region
            // Predicated region
            $region49: #{cnn_forward.1} parent=47 // pred_check
              _
            $region50: #{cnn_forward.1} parent=47 // pred_check_branch
              %243 = sbr.rel (0) target = $region52
            $region51: #{cnn_forward.1} parent=47 // pred_region
              // Predicated region
              $region64: #{cnn_forward.1} parent=51 // pred_check
                _
              $region65: #{cnn_forward.1} parent=51 // pred_check_branch
                %649 = sbr.rel (0) target = $region67
              $region66: #{cnn_forward.1} parent=51 // pred_region
                loop: start=0, step=1, limit=1
                $region68: #{cnn_forward.1} parent=66 // loop_pre_header
                  _
                $region69: #{cnn_forward.1} parent=66 // loop_header
                  %s651 = sphi 0, %s655
                  %p652 = scmp.ge.s32.totalorder %s651, 1
                  %s656 = sphi %s239, %s239
                  %s657 = sphi %s237, %s237
                $region70: #{cnn_forward.1} parent=66 // loop_header_branch
                  %654 = sbr.rel (%p652) target = $region74
                $region71: #{cnn_forward.1} parent=66 // loop_body
                  %v658 = vld [vmem:[%s656] sm:$0xff]
                  %659 = vst [vmem:[%s657] sm:$0xff] %v658
                  %v660 = vld [vmem:[%s656 + $0x10] sm:$0xff]
                  %661 = vst [vmem:[%s657 + $0x8] sm:$0xff] %v660
                  %v662 = vld [vmem:[%s656 + $0x20] sm:$0xff]
                  %663 = vst [vmem:[%s657 + $0x10] sm:$0xff] %v662
                  %v664 = vld [vmem:[%s656 + $0x30] sm:$0xff]
                  %665 = vst [vmem:[%s657 + $0x18] sm:$0xff] %v664
                  %v666 = vld [vmem:[%s656 + $0x40] sm:$0xff]
                  %667 = vst [vmem:[%s657 + $0x20] sm:$0xff] %v666
                  %v668 = vld [vmem:[%s656 + $0x50] sm:$0xff]
                  %669 = vst [vmem:[%s657 + $0x28] sm:$0xff] %v668
                  %v670 = vld [vmem:[%s656 + $0x60] sm:$0xff]
                  %671 = vst [vmem:[%s657 + $0x30] sm:$0xff] %v670
                  %v672 = vld [vmem:[%s656 + $0x70] sm:$0xff]
                  %673 = vst [vmem:[%s657 + $0x38] sm:$0xff] %v672
                  %v674 = vld [vmem:[%s656 + $0x80] sm:$0xff]
                  %675 = vst [vmem:[%s657 + $0x40] sm:$0xff] %v674
                  %v676 = vld [vmem:[%s656 + $0x90] sm:$0xff]
                  %677 = vst [vmem:[%s657 + $0x48] sm:$0xff] %v676
                  %v678 = vld [vmem:[%s656 + $0xa0] sm:$0xff]
                  %679 = vst [vmem:[%s657 + $0x50] sm:$0xff] %v678
                  %v680 = vld [vmem:[%s656 + $0xb0] sm:$0xff]
                  %681 = vst [vmem:[%s657 + $0x58] sm:$0xff] %v680
                  %v682 = vld [vmem:[%s656 + $0xc0] sm:$0xff]
                  %683 = vst [vmem:[%s657 + $0x60] sm:$0xff] %v682
                  %v684 = vld [vmem:[%s656 + $0xd0] sm:$0xff]
                  %685 = vst [vmem:[%s657 + $0x68] sm:$0xff] %v684
                  %v686 = vld [vmem:[%s656 + $0xe0] sm:$0xff]
                  %687 = vst [vmem:[%s657 + $0x70] sm:$0xff] %v686
                  %v688 = vld [vmem:[%s656 + $0xf0] sm:$0xff]
                  %689 = vst [vmem:[%s657 + $0x78] sm:$0xff] %v688
                  %v690 = vld [vmem:[%s656 + $0x100] sm:$0xff]
                  %691 = vst [vmem:[%s657 + $0x80] sm:$0xff] %v690
                  %v692 = vld [vmem:[%s656 + $0x110] sm:$0xff]
                  %693 = vst [vmem:[%s657 + $0x88] sm:$0xff] %v692
                  %v694 = vld [vmem:[%s656 + $0x120] sm:$0xff]
                  %695 = vst [vmem:[%s657 + $0x90] sm:$0xff] %v694
                  %v696 = vld [vmem:[%s656 + $0x130] sm:$0xff]
                  %697 = vst [vmem:[%s657 + $0x98] sm:$0xff] %v696
                  %v698 = vld [vmem:[%s656 + $0x140] sm:$0xff]
                  %699 = vst [vmem:[%s657 + $0xa0] sm:$0xff] %v698
                  %v700 = vld [vmem:[%s656 + $0x150] sm:$0xff]
                  %701 = vst [vmem:[%s657 + $0xa8] sm:$0xff] %v700
                  %v702 = vld [vmem:[%s656 + $0x160] sm:$0xff]
                  %703 = vst [vmem:[%s657 + $0xb0] sm:$0xff] %v702
                  %v704 = vld [vmem:[%s656 + $0x170] sm:$0xff]
                  %705 = vst [vmem:[%s657 + $0xb8] sm:$0xff] %v704
                  %v706 = vld [vmem:[%s656 + $0x180] sm:$0xff]
                  %707 = vst [vmem:[%s657 + $0xc0] sm:$0xff] %v706
                  %v708 = vld [vmem:[%s656 + $0x190] sm:$0xff]
                  %709 = vst [vmem:[%s657 + $0xc8] sm:$0xff] %v708
                  %v710 = vld [vmem:[%s656 + $0x1a0] sm:$0xff]
                  %711 = vst [vmem:[%s657 + $0xd0] sm:$0xff] %v710
                  %v712 = vld [vmem:[%s656 + $0x1b0] sm:$0xff]
                  %713 = vst [vmem:[%s657 + $0xd8] sm:$0xff] %v712
                  %v714 = vld [vmem:[%s656 + $0x1c0] sm:$0xff]
                  %715 = vst [vmem:[%s657 + $0xe0] sm:$0xff] %v714
                  %v716 = vld [vmem:[%s656 + $0x1d0] sm:$0xff]
                  %717 = vst [vmem:[%s657 + $0xe8] sm:$0xff] %v716
                  %v718 = vld [vmem:[%s656 + $0x1e0] sm:$0xff]
                  %719 = vst [vmem:[%s657 + $0xf0] sm:$0xff] %v718
                  %v720 = vld [vmem:[%s656 + $0x1f0] sm:$0xff]
                  %721 = vst [vmem:[%s657 + $0xf8] sm:$0xff] %v720
                  %v722 = vld [vmem:[%s656 + $0x200] sm:$0xff]
                  %723 = vst [vmem:[%s657 + $0x100] sm:$0xff] %v722
                  %v724 = vld [vmem:[%s656 + $0x210] sm:$0xff]
                  %725 = vst [vmem:[%s657 + $0x108] sm:$0xff] %v724
                  %v726 = vld [vmem:[%s656 + $0x220] sm:$0xff]
                  %727 = vst [vmem:[%s657 + $0x110] sm:$0xff] %v726
                  %v728 = vld [vmem:[%s656 + $0x230] sm:$0xff]
                  %729 = vst [vmem:[%s657 + $0x118] sm:$0xff] %v728
                  %v730 = vld [vmem:[%s656 + $0x240] sm:$0xff]
                  %731 = vst [vmem:[%s657 + $0x120] sm:$0xff] %v730
                  %v732 = vld [vmem:[%s656 + $0x250] sm:$0xff]
                  %733 = vst [vmem:[%s657 + $0x128] sm:$0xff] %v732
                  %v734 = vld [vmem:[%s656 + $0x260] sm:$0xff]
                  %735 = vst [vmem:[%s657 + $0x130] sm:$0xff] %v734
                  %v736 = vld [vmem:[%s656 + $0x270] sm:$0xff]
                  %737 = vst [vmem:[%s657 + $0x138] sm:$0xff] %v736
                  %v738 = vld [vmem:[%s656 + $0x280] sm:$0xff]
                  %739 = vst [vmem:[%s657 + $0x140] sm:$0xff] %v738
                  %v740 = vld [vmem:[%s656 + $0x290] sm:$0xff]
                  %741 = vst [vmem:[%s657 + $0x148] sm:$0xff] %v740
                  %v742 = vld [vmem:[%s656 + $0x2a0] sm:$0xff]
                  %743 = vst [vmem:[%s657 + $0x150] sm:$0xff] %v742
                  %v744 = vld [vmem:[%s656 + $0x2b0] sm:$0xff]
                  %745 = vst [vmem:[%s657 + $0x158] sm:$0xff] %v744
                  %v746 = vld [vmem:[%s656 + $0x2c0] sm:$0xff]
                  %747 = vst [vmem:[%s657 + $0x160] sm:$0xff] %v746
                  %v748 = vld [vmem:[%s656 + $0x2d0] sm:$0xff]
                  %749 = vst [vmem:[%s657 + $0x168] sm:$0xff] %v748
                  %v750 = vld [vmem:[%s656 + $0x2e0] sm:$0xff]
                  %751 = vst [vmem:[%s657 + $0x170] sm:$0xff] %v750
                  %v752 = vld [vmem:[%s656 + $0x2f0] sm:$0xff]
                  %753 = vst [vmem:[%s657 + $0x178] sm:$0xff] %v752
                  %v754 = vld [vmem:[%s656 + $0x300] sm:$0xff]
                  %755 = vst [vmem:[%s657 + $0x180] sm:$0xff] %v754
                  %v756 = vld [vmem:[%s656 + $0x310] sm:$0xff]
                  %757 = vst [vmem:[%s657 + $0x188] sm:$0xff] %v756
                  %v758 = vld [vmem:[%s656 + $0x320] sm:$0xff]
                  %759 = vst [vmem:[%s657 + $0x190] sm:$0xff] %v758
                  %v760 = vld [vmem:[%s656 + $0x330] sm:$0xff]
                  %761 = vst [vmem:[%s657 + $0x198] sm:$0xff] %v760
                  %v762 = vld [vmem:[%s656 + $0x340] sm:$0xff]
                  %763 = vst [vmem:[%s657 + $0x1a0] sm:$0xff] %v762
                  %v764 = vld [vmem:[%s656 + $0x350] sm:$0xff]
                  %765 = vst [vmem:[%s657 + $0x1a8] sm:$0xff] %v764
                  %v766 = vld [vmem:[%s656 + $0x360] sm:$0xff]
                  %767 = vst [vmem:[%s657 + $0x1b0] sm:$0xff] %v766
                  %v768 = vld [vmem:[%s656 + $0x370] sm:$0xff]
                  %769 = vst [vmem:[%s657 + $0x1b8] sm:$0xff] %v768
                  %v770 = vld [vmem:[%s656 + $0x380] sm:$0xff]
                  %771 = vst [vmem:[%s657 + $0x1c0] sm:$0xff] %v770
                  %v772 = vld [vmem:[%s656 + $0x390] sm:$0xff]
                  %773 = vst [vmem:[%s657 + $0x1c8] sm:$0xff] %v772
                  %v774 = vld [vmem:[%s656 + $0x3a0] sm:$0xff]
                  %775 = vst [vmem:[%s657 + $0x1d0] sm:$0xff] %v774
                  %v776 = vld [vmem:[%s656 + $0x3b0] sm:$0xff]
                  %777 = vst [vmem:[%s657 + $0x1d8] sm:$0xff] %v776
                  %v778 = vld [vmem:[%s656 + $0x3c0] sm:$0xff]
                  %779 = vst [vmem:[%s657 + $0x1e0] sm:$0xff] %v778
                  %v780 = vld [vmem:[%s656 + $0x3d0] sm:$0xff]
                  %781 = vst [vmem:[%s657 + $0x1e8] sm:$0xff] %v780
                  %v782 = vld [vmem:[%s656 + $0x3e0] sm:$0xff]
                  %783 = vst [vmem:[%s657 + $0x1f0] sm:$0xff] %v782
                  %v784 = vld [vmem:[%s656 + $0x3f0] sm:$0xff]
                  %785 = vst [vmem:[%s657 + $0x1f8] sm:$0xff] %v784
                  %v786 = vld [vmem:[%s656 + $0x400] sm:$0xff]
                  %787 = vst [vmem:[%s657 + $0x200] sm:$0xff] %v786
                  %v788 = vld [vmem:[%s656 + $0x410] sm:$0xff]
                  %789 = vst [vmem:[%s657 + $0x208] sm:$0xff] %v788
                  %v790 = vld [vmem:[%s656 + $0x420] sm:$0xff]
                  %791 = vst [vmem:[%s657 + $0x210] sm:$0xff] %v790
                  %v792 = vld [vmem:[%s656 + $0x430] sm:$0xff]
                  %793 = vst [vmem:[%s657 + $0x218] sm:$0xff] %v792
                  %v794 = vld [vmem:[%s656 + $0x440] sm:$0xff]
                  %795 = vst [vmem:[%s657 + $0x220] sm:$0xff] %v794
                  %v796 = vld [vmem:[%s656 + $0x450] sm:$0xff]
                  %797 = vst [vmem:[%s657 + $0x228] sm:$0xff] %v796
                  %v798 = vld [vmem:[%s656 + $0x460] sm:$0xff]
                  %799 = vst [vmem:[%s657 + $0x230] sm:$0xff] %v798
                  %v800 = vld [vmem:[%s656 + $0x470] sm:$0xff]
                  %801 = vst [vmem:[%s657 + $0x238] sm:$0xff] %v800
                  %v802 = vld [vmem:[%s656 + $0x480] sm:$0xff]
                  %803 = vst [vmem:[%s657 + $0x240] sm:$0xff] %v802
                  %v804 = vld [vmem:[%s656 + $0x490] sm:$0xff]
                  %805 = vst [vmem:[%s657 + $0x248] sm:$0xff] %v804
                  %v806 = vld [vmem:[%s656 + $0x4a0] sm:$0xff]
                  %807 = vst [vmem:[%s657 + $0x250] sm:$0xff] %v806
                  %v808 = vld [vmem:[%s656 + $0x4b0] sm:$0xff]
                  %809 = vst [vmem:[%s657 + $0x258] sm:$0xff] %v808
                  %v810 = vld [vmem:[%s656 + $0x4c0] sm:$0xff]
                  %811 = vst [vmem:[%s657 + $0x260] sm:$0xff] %v810
                  %v812 = vld [vmem:[%s656 + $0x4d0] sm:$0xff]
                  %813 = vst [vmem:[%s657 + $0x268] sm:$0xff] %v812
                  %v814 = vld [vmem:[%s656 + $0x4e0] sm:$0xff]
                  %815 = vst [vmem:[%s657 + $0x270] sm:$0xff] %v814
                  %v816 = vld [vmem:[%s656 + $0x4f0] sm:$0xff]
                  %817 = vst [vmem:[%s657 + $0x278] sm:$0xff] %v816
                  %v818 = vld [vmem:[%s656 + $0x500] sm:$0xff]
                  %819 = vst [vmem:[%s657 + $0x280] sm:$0xff] %v818
                  %v820 = vld [vmem:[%s656 + $0x510] sm:$0xff]
                  %821 = vst [vmem:[%s657 + $0x288] sm:$0xff] %v820
                  %v822 = vld [vmem:[%s656 + $0x520] sm:$0xff]
                  %823 = vst [vmem:[%s657 + $0x290] sm:$0xff] %v822
                  %v824 = vld [vmem:[%s656 + $0x530] sm:$0xff]
                  %825 = vst [vmem:[%s657 + $0x298] sm:$0xff] %v824
                  %v826 = vld [vmem:[%s656 + $0x540] sm:$0xff]
                  %827 = vst [vmem:[%s657 + $0x2a0] sm:$0xff] %v826
                  %v828 = vld [vmem:[%s656 + $0x550] sm:$0xff]
                  %829 = vst [vmem:[%s657 + $0x2a8] sm:$0xff] %v828
                  %v830 = vld [vmem:[%s656 + $0x560] sm:$0xff]
                  %831 = vst [vmem:[%s657 + $0x2b0] sm:$0xff] %v830
                  %v832 = vld [vmem:[%s656 + $0x570] sm:$0xff]
                  %833 = vst [vmem:[%s657 + $0x2b8] sm:$0xff] %v832
                  %v834 = vld [vmem:[%s656 + $0x580] sm:$0xff]
                  %835 = vst [vmem:[%s657 + $0x2c0] sm:$0xff] %v834
                  %v836 = vld [vmem:[%s656 + $0x590] sm:$0xff]
                  %837 = vst [vmem:[%s657 + $0x2c8] sm:$0xff] %v836
                  %v838 = vld [vmem:[%s656 + $0x5a0] sm:$0xff]
                  %839 = vst [vmem:[%s657 + $0x2d0] sm:$0xff] %v838
                  %v840 = vld [vmem:[%s656 + $0x5b0] sm:$0xff]
                  %841 = vst [vmem:[%s657 + $0x2d8] sm:$0xff] %v840
                  %v842 = vld [vmem:[%s656 + $0x5c0] sm:$0xff]
                  %843 = vst [vmem:[%s657 + $0x2e0] sm:$0xff] %v842
                  %v844 = vld [vmem:[%s656 + $0x5d0] sm:$0xff]
                  %845 = vst [vmem:[%s657 + $0x2e8] sm:$0xff] %v844
                  %v846 = vld [vmem:[%s656 + $0x5e0] sm:$0xff]
                  %847 = vst [vmem:[%s657 + $0x2f0] sm:$0xff] %v846
                  %v848 = vld [vmem:[%s656 + $0x5f0] sm:$0xff]
                  %849 = vst [vmem:[%s657 + $0x2f8] sm:$0xff] %v848
                  %v850 = vld [vmem:[%s656 + $0x600] sm:$0xff]
                  %851 = vst [vmem:[%s657 + $0x300] sm:$0xff] %v850
                  %v852 = vld [vmem:[%s656 + $0x610] sm:$0xff]
                  %853 = vst [vmem:[%s657 + $0x308] sm:$0xff] %v852
                  %v854 = vld [vmem:[%s656 + $0x620] sm:$0xff]
                  %855 = vst [vmem:[%s657 + $0x310] sm:$0xff] %v854
                  %v856 = vld [vmem:[%s656 + $0x630] sm:$0xff]
                  %857 = vst [vmem:[%s657 + $0x318] sm:$0xff] %v856
                  %v858 = vld [vmem:[%s656 + $0x640] sm:$0xff]
                  %859 = vst [vmem:[%s657 + $0x320] sm:$0xff] %v858
                  %v860 = vld [vmem:[%s656 + $0x650] sm:$0xff]
                  %861 = vst [vmem:[%s657 + $0x328] sm:$0xff] %v860
                  %v862 = vld [vmem:[%s656 + $0x660] sm:$0xff]
                  %863 = vst [vmem:[%s657 + $0x330] sm:$0xff] %v862
                  %v864 = vld [vmem:[%s656 + $0x670] sm:$0xff]
                  %865 = vst [vmem:[%s657 + $0x338] sm:$0xff] %v864
                  %v866 = vld [vmem:[%s656 + $0x680] sm:$0xff]
                  %867 = vst [vmem:[%s657 + $0x340] sm:$0xff] %v866
                  %v868 = vld [vmem:[%s656 + $0x690] sm:$0xff]
                  %869 = vst [vmem:[%s657 + $0x348] sm:$0xff] %v868
                  %v870 = vld [vmem:[%s656 + $0x6a0] sm:$0xff]
                  %871 = vst [vmem:[%s657 + $0x350] sm:$0xff] %v870
                  %v872 = vld [vmem:[%s656 + $0x6b0] sm:$0xff]
                  %873 = vst [vmem:[%s657 + $0x358] sm:$0xff] %v872
                  %v874 = vld [vmem:[%s656 + $0x6c0] sm:$0xff]
                  %875 = vst [vmem:[%s657 + $0x360] sm:$0xff] %v874
                  %v876 = vld [vmem:[%s656 + $0x6d0] sm:$0xff]
                  %877 = vst [vmem:[%s657 + $0x368] sm:$0xff] %v876
                  %v878 = vld [vmem:[%s656 + $0x6e0] sm:$0xff]
                  %879 = vst [vmem:[%s657 + $0x370] sm:$0xff] %v878
                  %v880 = vld [vmem:[%s656 + $0x6f0] sm:$0xff]
                  %881 = vst [vmem:[%s657 + $0x378] sm:$0xff] %v880
                  %v882 = vld [vmem:[%s656 + $0x700] sm:$0xff]
                  %883 = vst [vmem:[%s657 + $0x380] sm:$0xff] %v882
                  %v884 = vld [vmem:[%s656 + $0x710] sm:$0xff]
                  %885 = vst [vmem:[%s657 + $0x388] sm:$0xff] %v884
                  %v886 = vld [vmem:[%s656 + $0x720] sm:$0xff]
                  %887 = vst [vmem:[%s657 + $0x390] sm:$0xff] %v886
                  %v888 = vld [vmem:[%s656 + $0x730] sm:$0xff]
                  %889 = vst [vmem:[%s657 + $0x398] sm:$0xff] %v888
                  %v890 = vld [vmem:[%s656 + $0x740] sm:$0xff]
                  %891 = vst [vmem:[%s657 + $0x3a0] sm:$0xff] %v890
                  %v892 = vld [vmem:[%s656 + $0x750] sm:$0xff]
                  %893 = vst [vmem:[%s657 + $0x3a8] sm:$0xff] %v892
                  %v894 = vld [vmem:[%s656 + $0x760] sm:$0xff]
                  %895 = vst [vmem:[%s657 + $0x3b0] sm:$0xff] %v894
                  %v896 = vld [vmem:[%s656 + $0x770] sm:$0xff]
                  %897 = vst [vmem:[%s657 + $0x3b8] sm:$0xff] %v896
                  %v898 = vld [vmem:[%s656 + $0x780] sm:$0xff]
                  %899 = vst [vmem:[%s657 + $0x3c0] sm:$0xff] %v898
                  %v900 = vld [vmem:[%s656 + $0x790] sm:$0xff]
                  %901 = vst [vmem:[%s657 + $0x3c8] sm:$0xff] %v900
                  %v902 = vld [vmem:[%s656 + $0x7a0] sm:$0xff]
                  %903 = vst [vmem:[%s657 + $0x3d0] sm:$0xff] %v902
                  %v904 = vld [vmem:[%s656 + $0x7b0] sm:$0xff]
                  %905 = vst [vmem:[%s657 + $0x3d8] sm:$0xff] %v904
                  %v906 = vld [vmem:[%s656 + $0x7c0] sm:$0xff]
                  %907 = vst [vmem:[%s657 + $0x3e0] sm:$0xff] %v906
                  %v908 = vld [vmem:[%s656 + $0x7d0] sm:$0xff]
                  %909 = vst [vmem:[%s657 + $0x3e8] sm:$0xff] %v908
                  %v910 = vld [vmem:[%s656 + $0x7e0] sm:$0xff]
                  %911 = vst [vmem:[%s657 + $0x3f0] sm:$0xff] %v910
                  %v912 = vld [vmem:[%s656 + $0x7f0] sm:$0xff]
                  %913 = vst [vmem:[%s657 + $0x3f8] sm:$0xff] %v912
                  %v914 = vld [vmem:[%s656 + $0x800] sm:$0xff]
                  %915 = vst [vmem:[%s657 + $0x400] sm:$0xff] %v914
                  %v916 = vld [vmem:[%s656 + $0x810] sm:$0xff]
                  %917 = vst [vmem:[%s657 + $0x408] sm:$0xff] %v916
                  %v918 = vld [vmem:[%s656 + $0x820] sm:$0xff]
                  %919 = vst [vmem:[%s657 + $0x410] sm:$0xff] %v918
                  %v920 = vld [vmem:[%s656 + $0x830] sm:$0xff]
                  %921 = vst [vmem:[%s657 + $0x418] sm:$0xff] %v920
                  %v922 = vld [vmem:[%s656 + $0x840] sm:$0xff]
                  %923 = vst [vmem:[%s657 + $0x420] sm:$0xff] %v922
                  %v924 = vld [vmem:[%s656 + $0x850] sm:$0xff]
                  %925 = vst [vmem:[%s657 + $0x428] sm:$0xff] %v924
                  %v926 = vld [vmem:[%s656 + $0x860] sm:$0xff]
                  %927 = vst [vmem:[%s657 + $0x430] sm:$0xff] %v926
                  %v928 = vld [vmem:[%s656 + $0x870] sm:$0xff]
                  %929 = vst [vmem:[%s657 + $0x438] sm:$0xff] %v928
                  %v930 = vld [vmem:[%s656 + $0x880] sm:$0xff]
                  %931 = vst [vmem:[%s657 + $0x440] sm:$0xff] %v930
                  %v932 = vld [vmem:[%s656 + $0x890] sm:$0xff]
                  %933 = vst [vmem:[%s657 + $0x448] sm:$0xff] %v932
                  %v934 = vld [vmem:[%s656 + $0x8a0] sm:$0xff]
                  %935 = vst [vmem:[%s657 + $0x450] sm:$0xff] %v934
                  %v936 = vld [vmem:[%s656 + $0x8b0] sm:$0xff]
                  %937 = vst [vmem:[%s657 + $0x458] sm:$0xff] %v936
                  %v938 = vld [vmem:[%s656 + $0x8c0] sm:$0xff]
                  %939 = vst [vmem:[%s657 + $0x460] sm:$0xff] %v938
                  %v940 = vld [vmem:[%s656 + $0x8d0] sm:$0xff]
                  %941 = vst [vmem:[%s657 + $0x468] sm:$0xff] %v940
                  %v942 = vld [vmem:[%s656 + $0x8e0] sm:$0xff]
                  %943 = vst [vmem:[%s657 + $0x470] sm:$0xff] %v942
                  %v944 = vld [vmem:[%s656 + $0x8f0] sm:$0xff]
                  %945 = vst [vmem:[%s657 + $0x478] sm:$0xff] %v944
                  %v946 = vld [vmem:[%s656 + $0x900] sm:$0xff]
                  %947 = vst [vmem:[%s657 + $0x480] sm:$0xff] %v946
                  %v948 = vld [vmem:[%s656 + $0x910] sm:$0xff]
                  %949 = vst [vmem:[%s657 + $0x488] sm:$0xff] %v948
                  %v950 = vld [vmem:[%s656 + $0x920] sm:$0xff]
                  %951 = vst [vmem:[%s657 + $0x490] sm:$0xff] %v950
                  %v952 = vld [vmem:[%s656 + $0x930] sm:$0xff]
                  %953 = vst [vmem:[%s657 + $0x498] sm:$0xff] %v952
                  %v954 = vld [vmem:[%s656 + $0x940] sm:$0xff]
                  %955 = vst [vmem:[%s657 + $0x4a0] sm:$0xff] %v954
                  %v956 = vld [vmem:[%s656 + $0x950] sm:$0xff]
                  %957 = vst [vmem:[%s657 + $0x4a8] sm:$0xff] %v956
                  %v958 = vld [vmem:[%s656 + $0x960] sm:$0xff]
                  %959 = vst [vmem:[%s657 + $0x4b0] sm:$0xff] %v958
                  %v960 = vld [vmem:[%s656 + $0x970] sm:$0xff]
                  %961 = vst [vmem:[%s657 + $0x4b8] sm:$0xff] %v960
                  %v962 = vld [vmem:[%s656 + $0x980] sm:$0xff]
                  %963 = vst [vmem:[%s657 + $0x4c0] sm:$0xff] %v962
                  %v964 = vld [vmem:[%s656 + $0x990] sm:$0xff]
                  %965 = vst [vmem:[%s657 + $0x4c8] sm:$0xff] %v964
                  %v966 = vld [vmem:[%s656 + $0x9a0] sm:$0xff]
                  %967 = vst [vmem:[%s657 + $0x4d0] sm:$0xff] %v966
                  %v968 = vld [vmem:[%s656 + $0x9b0] sm:$0xff]
                  %969 = vst [vmem:[%s657 + $0x4d8] sm:$0xff] %v968
                  %v970 = vld [vmem:[%s656 + $0x9c0] sm:$0xff]
                  %971 = vst [vmem:[%s657 + $0x4e0] sm:$0xff] %v970
                  %v972 = vld [vmem:[%s656 + $0x9d0] sm:$0xff]
                  %973 = vst [vmem:[%s657 + $0x4e8] sm:$0xff] %v972
                  %v974 = vld [vmem:[%s656 + $0x9e0] sm:$0xff]
                  %975 = vst [vmem:[%s657 + $0x4f0] sm:$0xff] %v974
                  %v976 = vld [vmem:[%s656 + $0x9f0] sm:$0xff]
                  %977 = vst [vmem:[%s657 + $0x4f8] sm:$0xff] %v976
                  %v978 = vld [vmem:[%s656 + $0xa00] sm:$0xff]
                  %979 = vst [vmem:[%s657 + $0x500] sm:$0xff] %v978
                  %v980 = vld [vmem:[%s656 + $0xa10] sm:$0xff]
                  %981 = vst [vmem:[%s657 + $0x508] sm:$0xff] %v980
                  %v982 = vld [vmem:[%s656 + $0xa20] sm:$0xff]
                  %983 = vst [vmem:[%s657 + $0x510] sm:$0xff] %v982
                  %v984 = vld [vmem:[%s656 + $0xa30] sm:$0xff]
                  %985 = vst [vmem:[%s657 + $0x518] sm:$0xff] %v984
                  %v986 = vld [vmem:[%s656 + $0xa40] sm:$0xff]
                  %987 = vst [vmem:[%s657 + $0x520] sm:$0xff] %v986
                  %v988 = vld [vmem:[%s656 + $0xa50] sm:$0xff]
                  %989 = vst [vmem:[%s657 + $0x528] sm:$0xff] %v988
                  %v990 = vld [vmem:[%s656 + $0xa60] sm:$0xff]
                  %991 = vst [vmem:[%s657 + $0x530] sm:$0xff] %v990
                  %v992 = vld [vmem:[%s656 + $0xa70] sm:$0xff]
                  %993 = vst [vmem:[%s657 + $0x538] sm:$0xff] %v992
                  %v994 = vld [vmem:[%s656 + $0xa80] sm:$0xff]
                  %995 = vst [vmem:[%s657 + $0x540] sm:$0xff] %v994
                  %v996 = vld [vmem:[%s656 + $0xa90] sm:$0xff]
                  %997 = vst [vmem:[%s657 + $0x548] sm:$0xff] %v996
                  %v998 = vld [vmem:[%s656 + $0xaa0] sm:$0xff]
                  %999 = vst [vmem:[%s657 + $0x550] sm:$0xff] %v998
                  %v1000 = vld [vmem:[%s656 + $0xab0] sm:$0xff]
                  %1001 = vst [vmem:[%s657 + $0x558] sm:$0xff] %v1000
                  %v1002 = vld [vmem:[%s656 + $0xac0] sm:$0xff]
                  %1003 = vst [vmem:[%s657 + $0x560] sm:$0xff] %v1002
                  %v1004 = vld [vmem:[%s656 + $0xad0] sm:$0xff]
                  %1005 = vst [vmem:[%s657 + $0x568] sm:$0xff] %v1004
                  %v1006 = vld [vmem:[%s656 + $0xae0] sm:$0xff]
                  %1007 = vst [vmem:[%s657 + $0x570] sm:$0xff] %v1006
                  %v1008 = vld [vmem:[%s656 + $0xaf0] sm:$0xff]
                  %1009 = vst [vmem:[%s657 + $0x578] sm:$0xff] %v1008
                  %v1010 = vld [vmem:[%s656 + $0xb00] sm:$0xff]
                  %1011 = vst [vmem:[%s657 + $0x580] sm:$0xff] %v1010
                  %v1012 = vld [vmem:[%s656 + $0xb10] sm:$0xff]
                  %1013 = vst [vmem:[%s657 + $0x588] sm:$0xff] %v1012
                  %v1014 = vld [vmem:[%s656 + $0xb20] sm:$0xff]
                  %1015 = vst [vmem:[%s657 + $0x590] sm:$0xff] %v1014
                  %v1016 = vld [vmem:[%s656 + $0xb30] sm:$0xff]
                  %1017 = vst [vmem:[%s657 + $0x598] sm:$0xff] %v1016
                  %v1018 = vld [vmem:[%s656 + $0xb40] sm:$0xff]
                  %1019 = vst [vmem:[%s657 + $0x5a0] sm:$0xff] %v1018
                  %v1020 = vld [vmem:[%s656 + $0xb50] sm:$0xff]
                  %1021 = vst [vmem:[%s657 + $0x5a8] sm:$0xff] %v1020
                  %v1022 = vld [vmem:[%s656 + $0xb60] sm:$0xff]
                  %1023 = vst [vmem:[%s657 + $0x5b0] sm:$0xff] %v1022
                  %v1024 = vld [vmem:[%s656 + $0xb70] sm:$0xff]
                  %1025 = vst [vmem:[%s657 + $0x5b8] sm:$0xff] %v1024
                  %v1026 = vld [vmem:[%s656 + $0xb80] sm:$0xff]
                  %1027 = vst [vmem:[%s657 + $0x5c0] sm:$0xff] %v1026
                  %v1028 = vld [vmem:[%s656 + $0xb90] sm:$0xff]
                  %1029 = vst [vmem:[%s657 + $0x5c8] sm:$0xff] %v1028
                  %v1030 = vld [vmem:[%s656 + $0xba0] sm:$0xff]
                  %1031 = vst [vmem:[%s657 + $0x5d0] sm:$0xff] %v1030
                  %v1032 = vld [vmem:[%s656 + $0xbb0] sm:$0xff]
                  %1033 = vst [vmem:[%s657 + $0x5d8] sm:$0xff] %v1032
                  %v1034 = vld [vmem:[%s656 + $0xbc0] sm:$0xff]
                  %1035 = vst [vmem:[%s657 + $0x5e0] sm:$0xff] %v1034
                  %v1036 = vld [vmem:[%s656 + $0xbd0] sm:$0xff]
                  %1037 = vst [vmem:[%s657 + $0x5e8] sm:$0xff] %v1036
                  %v1038 = vld [vmem:[%s656 + $0xbe0] sm:$0xff]
                  %1039 = vst [vmem:[%s657 + $0x5f0] sm:$0xff] %v1038
                  %v1040 = vld [vmem:[%s656 + $0xbf0] sm:$0xff]
                  %1041 = vst [vmem:[%s657 + $0x5f8] sm:$0xff] %v1040
                  %v1042 = vld [vmem:[%s656 + $0xc00] sm:$0xff]
                  %1043 = vst [vmem:[%s657 + $0x600] sm:$0xff] %v1042
                  %v1044 = vld [vmem:[%s656 + $0xc10] sm:$0xff]
                  %1045 = vst [vmem:[%s657 + $0x608] sm:$0xff] %v1044
                  %v1046 = vld [vmem:[%s656 + $0xc20] sm:$0xff]
                  %1047 = vst [vmem:[%s657 + $0x610] sm:$0xff] %v1046
                  %v1048 = vld [vmem:[%s656 + $0xc30] sm:$0xff]
                  %1049 = vst [vmem:[%s657 + $0x618] sm:$0xff] %v1048
                $region72: #{cnn_forward.1} parent=66 // loop_footer
                  %s655 = sadd.s32 1, %s651
                $region73: #{cnn_forward.1} parent=66 // loop_footer_branch
                  %650 = sbr.rel target = $region69
                $region74: #{cnn_forward.1} parent=66 // loop_exit
                  _
              $region67: #{cnn_forward.1} parent=51 // pred_fallthru
                _
              // Predicated region
              $region75: #{cnn_forward.1} parent=51 // pred_check
                _
              $region76: #{cnn_forward.1} parent=51 // pred_check_branch
                %1051 = sbr.rel target = $region78
              $region77: #{cnn_forward.1} parent=51 // pred_region
                _
              $region78: #{cnn_forward.1} parent=51 // pred_fallthru
                _
            $region52: #{cnn_forward.1} parent=47 // pred_fallthru
              _
            // Predicated region
            $region53: #{cnn_forward.1} parent=47 // pred_check
              _
            $region54: #{cnn_forward.1} parent=47 // pred_check_branch
              %245 = sbr.rel target = $region56
            $region55: #{cnn_forward.1} parent=47 // pred_region
              %s247 = ssub.s32 256, 1
              loop: start=0, step=1, limit=1
              $region57: #{cnn_forward.1} parent=55 // loop_pre_header
                _
              $region58: #{cnn_forward.1} parent=55 // loop_header
                %s249 = sphi 0, %s253
                %p250 = scmp.ge.s32.totalorder %s249, 1
                %s254 = sphi %s239, %s239
                %s255 = sphi %s237, %s237
              $region59: #{cnn_forward.1} parent=55 // loop_header_branch
                %252 = sbr.rel (%p250) target = $region63
              $region60: #{cnn_forward.1} parent=55 // loop_body
                %v256 = vld [vmem:[%s254] sm:%s247]
                %257 = vst [vmem:[%s255] sm:%s247] %v256
                %v258 = vld [vmem:[%s254 + $0x10] sm:%s247]
                %259 = vst [vmem:[%s255 + $0x8] sm:%s247] %v258
                %v260 = vld [vmem:[%s254 + $0x20] sm:%s247]
                %261 = vst [vmem:[%s255 + $0x10] sm:%s247] %v260
                %v262 = vld [vmem:[%s254 + $0x30] sm:%s247]
                %263 = vst [vmem:[%s255 + $0x18] sm:%s247] %v262
                %v264 = vld [vmem:[%s254 + $0x40] sm:%s247]
                %265 = vst [vmem:[%s255 + $0x20] sm:%s247] %v264
                %v266 = vld [vmem:[%s254 + $0x50] sm:%s247]
                %267 = vst [vmem:[%s255 + $0x28] sm:%s247] %v266
                %v268 = vld [vmem:[%s254 + $0x60] sm:%s247]
                %269 = vst [vmem:[%s255 + $0x30] sm:%s247] %v268
                %v270 = vld [vmem:[%s254 + $0x70] sm:%s247]
                %271 = vst [vmem:[%s255 + $0x38] sm:%s247] %v270
                %v272 = vld [vmem:[%s254 + $0x80] sm:%s247]
                %273 = vst [vmem:[%s255 + $0x40] sm:%s247] %v272
                %v274 = vld [vmem:[%s254 + $0x90] sm:%s247]
                %275 = vst [vmem:[%s255 + $0x48] sm:%s247] %v274
                %v276 = vld [vmem:[%s254 + $0xa0] sm:%s247]
                %277 = vst [vmem:[%s255 + $0x50] sm:%s247] %v276
                %v278 = vld [vmem:[%s254 + $0xb0] sm:%s247]
                %279 = vst [vmem:[%s255 + $0x58] sm:%s247] %v278
                %v280 = vld [vmem:[%s254 + $0xc0] sm:%s247]
                %281 = vst [vmem:[%s255 + $0x60] sm:%s247] %v280
                %v282 = vld [vmem:[%s254 + $0xd0] sm:%s247]
                %283 = vst [vmem:[%s255 + $0x68] sm:%s247] %v282
                %v284 = vld [vmem:[%s254 + $0xe0] sm:%s247]
                %285 = vst [vmem:[%s255 + $0x70] sm:%s247] %v284
                %v286 = vld [vmem:[%s254 + $0xf0] sm:%s247]
                %287 = vst [vmem:[%s255 + $0x78] sm:%s247] %v286
                %v288 = vld [vmem:[%s254 + $0x100] sm:%s247]
                %289 = vst [vmem:[%s255 + $0x80] sm:%s247] %v288
                %v290 = vld [vmem:[%s254 + $0x110] sm:%s247]
                %291 = vst [vmem:[%s255 + $0x88] sm:%s247] %v290
                %v292 = vld [vmem:[%s254 + $0x120] sm:%s247]
                %293 = vst [vmem:[%s255 + $0x90] sm:%s247] %v292
                %v294 = vld [vmem:[%s254 + $0x130] sm:%s247]
                %295 = vst [vmem:[%s255 + $0x98] sm:%s247] %v294
                %v296 = vld [vmem:[%s254 + $0x140] sm:%s247]
                %297 = vst [vmem:[%s255 + $0xa0] sm:%s247] %v296
                %v298 = vld [vmem:[%s254 + $0x150] sm:%s247]
                %299 = vst [vmem:[%s255 + $0xa8] sm:%s247] %v298
                %v300 = vld [vmem:[%s254 + $0x160] sm:%s247]
                %301 = vst [vmem:[%s255 + $0xb0] sm:%s247] %v300
                %v302 = vld [vmem:[%s254 + $0x170] sm:%s247]
                %303 = vst [vmem:[%s255 + $0xb8] sm:%s247] %v302
                %v304 = vld [vmem:[%s254 + $0x180] sm:%s247]
                %305 = vst [vmem:[%s255 + $0xc0] sm:%s247] %v304
                %v306 = vld [vmem:[%s254 + $0x190] sm:%s247]
                %307 = vst [vmem:[%s255 + $0xc8] sm:%s247] %v306
                %v308 = vld [vmem:[%s254 + $0x1a0] sm:%s247]
                %309 = vst [vmem:[%s255 + $0xd0] sm:%s247] %v308
                %v310 = vld [vmem:[%s254 + $0x1b0] sm:%s247]
                %311 = vst [vmem:[%s255 + $0xd8] sm:%s247] %v310
                %v312 = vld [vmem:[%s254 + $0x1c0] sm:%s247]
                %313 = vst [vmem:[%s255 + $0xe0] sm:%s247] %v312
                %v314 = vld [vmem:[%s254 + $0x1d0] sm:%s247]
                %315 = vst [vmem:[%s255 + $0xe8] sm:%s247] %v314
                %v316 = vld [vmem:[%s254 + $0x1e0] sm:%s247]
                %317 = vst [vmem:[%s255 + $0xf0] sm:%s247] %v316
                %v318 = vld [vmem:[%s254 + $0x1f0] sm:%s247]
                %319 = vst [vmem:[%s255 + $0xf8] sm:%s247] %v318
                %v320 = vld [vmem:[%s254 + $0x200] sm:%s247]
                %321 = vst [vmem:[%s255 + $0x100] sm:%s247] %v320
                %v322 = vld [vmem:[%s254 + $0x210] sm:%s247]
                %323 = vst [vmem:[%s255 + $0x108] sm:%s247] %v322
                %v324 = vld [vmem:[%s254 + $0x220] sm:%s247]
                %325 = vst [vmem:[%s255 + $0x110] sm:%s247] %v324
                %v326 = vld [vmem:[%s254 + $0x230] sm:%s247]
                %327 = vst [vmem:[%s255 + $0x118] sm:%s247] %v326
                %v328 = vld [vmem:[%s254 + $0x240] sm:%s247]
                %329 = vst [vmem:[%s255 + $0x120] sm:%s247] %v328
                %v330 = vld [vmem:[%s254 + $0x250] sm:%s247]
                %331 = vst [vmem:[%s255 + $0x128] sm:%s247] %v330
                %v332 = vld [vmem:[%s254 + $0x260] sm:%s247]
                %333 = vst [vmem:[%s255 + $0x130] sm:%s247] %v332
                %v334 = vld [vmem:[%s254 + $0x270] sm:%s247]
                %335 = vst [vmem:[%s255 + $0x138] sm:%s247] %v334
                %v336 = vld [vmem:[%s254 + $0x280] sm:%s247]
                %337 = vst [vmem:[%s255 + $0x140] sm:%s247] %v336
                %v338 = vld [vmem:[%s254 + $0x290] sm:%s247]
                %339 = vst [vmem:[%s255 + $0x148] sm:%s247] %v338
                %v340 = vld [vmem:[%s254 + $0x2a0] sm:%s247]
                %341 = vst [vmem:[%s255 + $0x150] sm:%s247] %v340
                %v342 = vld [vmem:[%s254 + $0x2b0] sm:%s247]
                %343 = vst [vmem:[%s255 + $0x158] sm:%s247] %v342
                %v344 = vld [vmem:[%s254 + $0x2c0] sm:%s247]
                %345 = vst [vmem:[%s255 + $0x160] sm:%s247] %v344
                %v346 = vld [vmem:[%s254 + $0x2d0] sm:%s247]
                %347 = vst [vmem:[%s255 + $0x168] sm:%s247] %v346
                %v348 = vld [vmem:[%s254 + $0x2e0] sm:%s247]
                %349 = vst [vmem:[%s255 + $0x170] sm:%s247] %v348
                %v350 = vld [vmem:[%s254 + $0x2f0] sm:%s247]
                %351 = vst [vmem:[%s255 + $0x178] sm:%s247] %v350
                %v352 = vld [vmem:[%s254 + $0x300] sm:%s247]
                %353 = vst [vmem:[%s255 + $0x180] sm:%s247] %v352
                %v354 = vld [vmem:[%s254 + $0x310] sm:%s247]
                %355 = vst [vmem:[%s255 + $0x188] sm:%s247] %v354
                %v356 = vld [vmem:[%s254 + $0x320] sm:%s247]
                %357 = vst [vmem:[%s255 + $0x190] sm:%s247] %v356
                %v358 = vld [vmem:[%s254 + $0x330] sm:%s247]
                %359 = vst [vmem:[%s255 + $0x198] sm:%s247] %v358
                %v360 = vld [vmem:[%s254 + $0x340] sm:%s247]
                %361 = vst [vmem:[%s255 + $0x1a0] sm:%s247] %v360
                %v362 = vld [vmem:[%s254 + $0x350] sm:%s247]
                %363 = vst [vmem:[%s255 + $0x1a8] sm:%s247] %v362
                %v364 = vld [vmem:[%s254 + $0x360] sm:%s247]
                %365 = vst [vmem:[%s255 + $0x1b0] sm:%s247] %v364
                %v366 = vld [vmem:[%s254 + $0x370] sm:%s247]
                %367 = vst [vmem:[%s255 + $0x1b8] sm:%s247] %v366
                %v368 = vld [vmem:[%s254 + $0x380] sm:%s247]
                %369 = vst [vmem:[%s255 + $0x1c0] sm:%s247] %v368
                %v370 = vld [vmem:[%s254 + $0x390] sm:%s247]
                %371 = vst [vmem:[%s255 + $0x1c8] sm:%s247] %v370
                %v372 = vld [vmem:[%s254 + $0x3a0] sm:%s247]
                %373 = vst [vmem:[%s255 + $0x1d0] sm:%s247] %v372
                %v374 = vld [vmem:[%s254 + $0x3b0] sm:%s247]
                %375 = vst [vmem:[%s255 + $0x1d8] sm:%s247] %v374
                %v376 = vld [vmem:[%s254 + $0x3c0] sm:%s247]
                %377 = vst [vmem:[%s255 + $0x1e0] sm:%s247] %v376
                %v378 = vld [vmem:[%s254 + $0x3d0] sm:%s247]
                %379 = vst [vmem:[%s255 + $0x1e8] sm:%s247] %v378
                %v380 = vld [vmem:[%s254 + $0x3e0] sm:%s247]
                %381 = vst [vmem:[%s255 + $0x1f0] sm:%s247] %v380
                %v382 = vld [vmem:[%s254 + $0x3f0] sm:%s247]
                %383 = vst [vmem:[%s255 + $0x1f8] sm:%s247] %v382
                %v384 = vld [vmem:[%s254 + $0x400] sm:%s247]
                %385 = vst [vmem:[%s255 + $0x200] sm:%s247] %v384
                %v386 = vld [vmem:[%s254 + $0x410] sm:%s247]
                %387 = vst [vmem:[%s255 + $0x208] sm:%s247] %v386
                %v388 = vld [vmem:[%s254 + $0x420] sm:%s247]
                %389 = vst [vmem:[%s255 + $0x210] sm:%s247] %v388
                %v390 = vld [vmem:[%s254 + $0x430] sm:%s247]
                %391 = vst [vmem:[%s255 + $0x218] sm:%s247] %v390
                %v392 = vld [vmem:[%s254 + $0x440] sm:%s247]
                %393 = vst [vmem:[%s255 + $0x220] sm:%s247] %v392
                %v394 = vld [vmem:[%s254 + $0x450] sm:%s247]
                %395 = vst [vmem:[%s255 + $0x228] sm:%s247] %v394
                %v396 = vld [vmem:[%s254 + $0x460] sm:%s247]
                %397 = vst [vmem:[%s255 + $0x230] sm:%s247] %v396
                %v398 = vld [vmem:[%s254 + $0x470] sm:%s247]
                %399 = vst [vmem:[%s255 + $0x238] sm:%s247] %v398
                %v400 = vld [vmem:[%s254 + $0x480] sm:%s247]
                %401 = vst [vmem:[%s255 + $0x240] sm:%s247] %v400
                %v402 = vld [vmem:[%s254 + $0x490] sm:%s247]
                %403 = vst [vmem:[%s255 + $0x248] sm:%s247] %v402
                %v404 = vld [vmem:[%s254 + $0x4a0] sm:%s247]
                %405 = vst [vmem:[%s255 + $0x250] sm:%s247] %v404
                %v406 = vld [vmem:[%s254 + $0x4b0] sm:%s247]
                %407 = vst [vmem:[%s255 + $0x258] sm:%s247] %v406
                %v408 = vld [vmem:[%s254 + $0x4c0] sm:%s247]
                %409 = vst [vmem:[%s255 + $0x260] sm:%s247] %v408
                %v410 = vld [vmem:[%s254 + $0x4d0] sm:%s247]
                %411 = vst [vmem:[%s255 + $0x268] sm:%s247] %v410
                %v412 = vld [vmem:[%s254 + $0x4e0] sm:%s247]
                %413 = vst [vmem:[%s255 + $0x270] sm:%s247] %v412
                %v414 = vld [vmem:[%s254 + $0x4f0] sm:%s247]
                %415 = vst [vmem:[%s255 + $0x278] sm:%s247] %v414
                %v416 = vld [vmem:[%s254 + $0x500] sm:%s247]
                %417 = vst [vmem:[%s255 + $0x280] sm:%s247] %v416
                %v418 = vld [vmem:[%s254 + $0x510] sm:%s247]
                %419 = vst [vmem:[%s255 + $0x288] sm:%s247] %v418
                %v420 = vld [vmem:[%s254 + $0x520] sm:%s247]
                %421 = vst [vmem:[%s255 + $0x290] sm:%s247] %v420
                %v422 = vld [vmem:[%s254 + $0x530] sm:%s247]
                %423 = vst [vmem:[%s255 + $0x298] sm:%s247] %v422
                %v424 = vld [vmem:[%s254 + $0x540] sm:%s247]
                %425 = vst [vmem:[%s255 + $0x2a0] sm:%s247] %v424
                %v426 = vld [vmem:[%s254 + $0x550] sm:%s247]
                %427 = vst [vmem:[%s255 + $0x2a8] sm:%s247] %v426
                %v428 = vld [vmem:[%s254 + $0x560] sm:%s247]
                %429 = vst [vmem:[%s255 + $0x2b0] sm:%s247] %v428
                %v430 = vld [vmem:[%s254 + $0x570] sm:%s247]
                %431 = vst [vmem:[%s255 + $0x2b8] sm:%s247] %v430
                %v432 = vld [vmem:[%s254 + $0x580] sm:%s247]
                %433 = vst [vmem:[%s255 + $0x2c0] sm:%s247] %v432
                %v434 = vld [vmem:[%s254 + $0x590] sm:%s247]
                %435 = vst [vmem:[%s255 + $0x2c8] sm:%s247] %v434
                %v436 = vld [vmem:[%s254 + $0x5a0] sm:%s247]
                %437 = vst [vmem:[%s255 + $0x2d0] sm:%s247] %v436
                %v438 = vld [vmem:[%s254 + $0x5b0] sm:%s247]
                %439 = vst [vmem:[%s255 + $0x2d8] sm:%s247] %v438
                %v440 = vld [vmem:[%s254 + $0x5c0] sm:%s247]
                %441 = vst [vmem:[%s255 + $0x2e0] sm:%s247] %v440
                %v442 = vld [vmem:[%s254 + $0x5d0] sm:%s247]
                %443 = vst [vmem:[%s255 + $0x2e8] sm:%s247] %v442
                %v444 = vld [vmem:[%s254 + $0x5e0] sm:%s247]
                %445 = vst [vmem:[%s255 + $0x2f0] sm:%s247] %v444
                %v446 = vld [vmem:[%s254 + $0x5f0] sm:%s247]
                %447 = vst [vmem:[%s255 + $0x2f8] sm:%s247] %v446
                %v448 = vld [vmem:[%s254 + $0x600] sm:%s247]
                %449 = vst [vmem:[%s255 + $0x300] sm:%s247] %v448
                %v450 = vld [vmem:[%s254 + $0x610] sm:%s247]
                %451 = vst [vmem:[%s255 + $0x308] sm:%s247] %v450
                %v452 = vld [vmem:[%s254 + $0x620] sm:%s247]
                %453 = vst [vmem:[%s255 + $0x310] sm:%s247] %v452
                %v454 = vld [vmem:[%s254 + $0x630] sm:%s247]
                %455 = vst [vmem:[%s255 + $0x318] sm:%s247] %v454
                %v456 = vld [vmem:[%s254 + $0x640] sm:%s247]
                %457 = vst [vmem:[%s255 + $0x320] sm:%s247] %v456
                %v458 = vld [vmem:[%s254 + $0x650] sm:%s247]
                %459 = vst [vmem:[%s255 + $0x328] sm:%s247] %v458
                %v460 = vld [vmem:[%s254 + $0x660] sm:%s247]
                %461 = vst [vmem:[%s255 + $0x330] sm:%s247] %v460
                %v462 = vld [vmem:[%s254 + $0x670] sm:%s247]
                %463 = vst [vmem:[%s255 + $0x338] sm:%s247] %v462
                %v464 = vld [vmem:[%s254 + $0x680] sm:%s247]
                %465 = vst [vmem:[%s255 + $0x340] sm:%s247] %v464
                %v466 = vld [vmem:[%s254 + $0x690] sm:%s247]
                %467 = vst [vmem:[%s255 + $0x348] sm:%s247] %v466
                %v468 = vld [vmem:[%s254 + $0x6a0] sm:%s247]
                %469 = vst [vmem:[%s255 + $0x350] sm:%s247] %v468
                %v470 = vld [vmem:[%s254 + $0x6b0] sm:%s247]
                %471 = vst [vmem:[%s255 + $0x358] sm:%s247] %v470
                %v472 = vld [vmem:[%s254 + $0x6c0] sm:%s247]
                %473 = vst [vmem:[%s255 + $0x360] sm:%s247] %v472
                %v474 = vld [vmem:[%s254 + $0x6d0] sm:%s247]
                %475 = vst [vmem:[%s255 + $0x368] sm:%s247] %v474
                %v476 = vld [vmem:[%s254 + $0x6e0] sm:%s247]
                %477 = vst [vmem:[%s255 + $0x370] sm:%s247] %v476
                %v478 = vld [vmem:[%s254 + $0x6f0] sm:%s247]
                %479 = vst [vmem:[%s255 + $0x378] sm:%s247] %v478
                %v480 = vld [vmem:[%s254 + $0x700] sm:%s247]
                %481 = vst [vmem:[%s255 + $0x380] sm:%s247] %v480
                %v482 = vld [vmem:[%s254 + $0x710] sm:%s247]
                %483 = vst [vmem:[%s255 + $0x388] sm:%s247] %v482
                %v484 = vld [vmem:[%s254 + $0x720] sm:%s247]
                %485 = vst [vmem:[%s255 + $0x390] sm:%s247] %v484
                %v486 = vld [vmem:[%s254 + $0x730] sm:%s247]
                %487 = vst [vmem:[%s255 + $0x398] sm:%s247] %v486
                %v488 = vld [vmem:[%s254 + $0x740] sm:%s247]
                %489 = vst [vmem:[%s255 + $0x3a0] sm:%s247] %v488
                %v490 = vld [vmem:[%s254 + $0x750] sm:%s247]
                %491 = vst [vmem:[%s255 + $0x3a8] sm:%s247] %v490
                %v492 = vld [vmem:[%s254 + $0x760] sm:%s247]
                %493 = vst [vmem:[%s255 + $0x3b0] sm:%s247] %v492
                %v494 = vld [vmem:[%s254 + $0x770] sm:%s247]
                %495 = vst [vmem:[%s255 + $0x3b8] sm:%s247] %v494
                %v496 = vld [vmem:[%s254 + $0x780] sm:%s247]
                %497 = vst [vmem:[%s255 + $0x3c0] sm:%s247] %v496
                %v498 = vld [vmem:[%s254 + $0x790] sm:%s247]
                %499 = vst [vmem:[%s255 + $0x3c8] sm:%s247] %v498
                %v500 = vld [vmem:[%s254 + $0x7a0] sm:%s247]
                %501 = vst [vmem:[%s255 + $0x3d0] sm:%s247] %v500
                %v502 = vld [vmem:[%s254 + $0x7b0] sm:%s247]
                %503 = vst [vmem:[%s255 + $0x3d8] sm:%s247] %v502
                %v504 = vld [vmem:[%s254 + $0x7c0] sm:%s247]
                %505 = vst [vmem:[%s255 + $0x3e0] sm:%s247] %v504
                %v506 = vld [vmem:[%s254 + $0x7d0] sm:%s247]
                %507 = vst [vmem:[%s255 + $0x3e8] sm:%s247] %v506
                %v508 = vld [vmem:[%s254 + $0x7e0] sm:%s247]
                %509 = vst [vmem:[%s255 + $0x3f0] sm:%s247] %v508
                %v510 = vld [vmem:[%s254 + $0x7f0] sm:%s247]
                %511 = vst [vmem:[%s255 + $0x3f8] sm:%s247] %v510
                %v512 = vld [vmem:[%s254 + $0x800] sm:%s247]
                %513 = vst [vmem:[%s255 + $0x400] sm:%s247] %v512
                %v514 = vld [vmem:[%s254 + $0x810] sm:%s247]
                %515 = vst [vmem:[%s255 + $0x408] sm:%s247] %v514
                %v516 = vld [vmem:[%s254 + $0x820] sm:%s247]
                %517 = vst [vmem:[%s255 + $0x410] sm:%s247] %v516
                %v518 = vld [vmem:[%s254 + $0x830] sm:%s247]
                %519 = vst [vmem:[%s255 + $0x418] sm:%s247] %v518
                %v520 = vld [vmem:[%s254 + $0x840] sm:%s247]
                %521 = vst [vmem:[%s255 + $0x420] sm:%s247] %v520
                %v522 = vld [vmem:[%s254 + $0x850] sm:%s247]
                %523 = vst [vmem:[%s255 + $0x428] sm:%s247] %v522
                %v524 = vld [vmem:[%s254 + $0x860] sm:%s247]
                %525 = vst [vmem:[%s255 + $0x430] sm:%s247] %v524
                %v526 = vld [vmem:[%s254 + $0x870] sm:%s247]
                %527 = vst [vmem:[%s255 + $0x438] sm:%s247] %v526
                %v528 = vld [vmem:[%s254 + $0x880] sm:%s247]
                %529 = vst [vmem:[%s255 + $0x440] sm:%s247] %v528
                %v530 = vld [vmem:[%s254 + $0x890] sm:%s247]
                %531 = vst [vmem:[%s255 + $0x448] sm:%s247] %v530
                %v532 = vld [vmem:[%s254 + $0x8a0] sm:%s247]
                %533 = vst [vmem:[%s255 + $0x450] sm:%s247] %v532
                %v534 = vld [vmem:[%s254 + $0x8b0] sm:%s247]
                %535 = vst [vmem:[%s255 + $0x458] sm:%s247] %v534
                %v536 = vld [vmem:[%s254 + $0x8c0] sm:%s247]
                %537 = vst [vmem:[%s255 + $0x460] sm:%s247] %v536
                %v538 = vld [vmem:[%s254 + $0x8d0] sm:%s247]
                %539 = vst [vmem:[%s255 + $0x468] sm:%s247] %v538
                %v540 = vld [vmem:[%s254 + $0x8e0] sm:%s247]
                %541 = vst [vmem:[%s255 + $0x470] sm:%s247] %v540
                %v542 = vld [vmem:[%s254 + $0x8f0] sm:%s247]
                %543 = vst [vmem:[%s255 + $0x478] sm:%s247] %v542
                %v544 = vld [vmem:[%s254 + $0x900] sm:%s247]
                %545 = vst [vmem:[%s255 + $0x480] sm:%s247] %v544
                %v546 = vld [vmem:[%s254 + $0x910] sm:%s247]
                %547 = vst [vmem:[%s255 + $0x488] sm:%s247] %v546
                %v548 = vld [vmem:[%s254 + $0x920] sm:%s247]
                %549 = vst [vmem:[%s255 + $0x490] sm:%s247] %v548
                %v550 = vld [vmem:[%s254 + $0x930] sm:%s247]
                %551 = vst [vmem:[%s255 + $0x498] sm:%s247] %v550
                %v552 = vld [vmem:[%s254 + $0x940] sm:%s247]
                %553 = vst [vmem:[%s255 + $0x4a0] sm:%s247] %v552
                %v554 = vld [vmem:[%s254 + $0x950] sm:%s247]
                %555 = vst [vmem:[%s255 + $0x4a8] sm:%s247] %v554
                %v556 = vld [vmem:[%s254 + $0x960] sm:%s247]
                %557 = vst [vmem:[%s255 + $0x4b0] sm:%s247] %v556
                %v558 = vld [vmem:[%s254 + $0x970] sm:%s247]
                %559 = vst [vmem:[%s255 + $0x4b8] sm:%s247] %v558
                %v560 = vld [vmem:[%s254 + $0x980] sm:%s247]
                %561 = vst [vmem:[%s255 + $0x4c0] sm:%s247] %v560
                %v562 = vld [vmem:[%s254 + $0x990] sm:%s247]
                %563 = vst [vmem:[%s255 + $0x4c8] sm:%s247] %v562
                %v564 = vld [vmem:[%s254 + $0x9a0] sm:%s247]
                %565 = vst [vmem:[%s255 + $0x4d0] sm:%s247] %v564
                %v566 = vld [vmem:[%s254 + $0x9b0] sm:%s247]
                %567 = vst [vmem:[%s255 + $0x4d8] sm:%s247] %v566
                %v568 = vld [vmem:[%s254 + $0x9c0] sm:%s247]
                %569 = vst [vmem:[%s255 + $0x4e0] sm:%s247] %v568
                %v570 = vld [vmem:[%s254 + $0x9d0] sm:%s247]
                %571 = vst [vmem:[%s255 + $0x4e8] sm:%s247] %v570
                %v572 = vld [vmem:[%s254 + $0x9e0] sm:%s247]
                %573 = vst [vmem:[%s255 + $0x4f0] sm:%s247] %v572
                %v574 = vld [vmem:[%s254 + $0x9f0] sm:%s247]
                %575 = vst [vmem:[%s255 + $0x4f8] sm:%s247] %v574
                %v576 = vld [vmem:[%s254 + $0xa00] sm:%s247]
                %577 = vst [vmem:[%s255 + $0x500] sm:%s247] %v576
                %v578 = vld [vmem:[%s254 + $0xa10] sm:%s247]
                %579 = vst [vmem:[%s255 + $0x508] sm:%s247] %v578
                %v580 = vld [vmem:[%s254 + $0xa20] sm:%s247]
                %581 = vst [vmem:[%s255 + $0x510] sm:%s247] %v580
                %v582 = vld [vmem:[%s254 + $0xa30] sm:%s247]
                %583 = vst [vmem:[%s255 + $0x518] sm:%s247] %v582
                %v584 = vld [vmem:[%s254 + $0xa40] sm:%s247]
                %585 = vst [vmem:[%s255 + $0x520] sm:%s247] %v584
                %v586 = vld [vmem:[%s254 + $0xa50] sm:%s247]
                %587 = vst [vmem:[%s255 + $0x528] sm:%s247] %v586
                %v588 = vld [vmem:[%s254 + $0xa60] sm:%s247]
                %589 = vst [vmem:[%s255 + $0x530] sm:%s247] %v588
                %v590 = vld [vmem:[%s254 + $0xa70] sm:%s247]
                %591 = vst [vmem:[%s255 + $0x538] sm:%s247] %v590
                %v592 = vld [vmem:[%s254 + $0xa80] sm:%s247]
                %593 = vst [vmem:[%s255 + $0x540] sm:%s247] %v592
                %v594 = vld [vmem:[%s254 + $0xa90] sm:%s247]
                %595 = vst [vmem:[%s255 + $0x548] sm:%s247] %v594
                %v596 = vld [vmem:[%s254 + $0xaa0] sm:%s247]
                %597 = vst [vmem:[%s255 + $0x550] sm:%s247] %v596
                %v598 = vld [vmem:[%s254 + $0xab0] sm:%s247]
                %599 = vst [vmem:[%s255 + $0x558] sm:%s247] %v598
                %v600 = vld [vmem:[%s254 + $0xac0] sm:%s247]
                %601 = vst [vmem:[%s255 + $0x560] sm:%s247] %v600
                %v602 = vld [vmem:[%s254 + $0xad0] sm:%s247]
                %603 = vst [vmem:[%s255 + $0x568] sm:%s247] %v602
                %v604 = vld [vmem:[%s254 + $0xae0] sm:%s247]
                %605 = vst [vmem:[%s255 + $0x570] sm:%s247] %v604
                %v606 = vld [vmem:[%s254 + $0xaf0] sm:%s247]
                %607 = vst [vmem:[%s255 + $0x578] sm:%s247] %v606
                %v608 = vld [vmem:[%s254 + $0xb00] sm:%s247]
                %609 = vst [vmem:[%s255 + $0x580] sm:%s247] %v608
                %v610 = vld [vmem:[%s254 + $0xb10] sm:%s247]
                %611 = vst [vmem:[%s255 + $0x588] sm:%s247] %v610
                %v612 = vld [vmem:[%s254 + $0xb20] sm:%s247]
                %613 = vst [vmem:[%s255 + $0x590] sm:%s247] %v612
                %v614 = vld [vmem:[%s254 + $0xb30] sm:%s247]
                %615 = vst [vmem:[%s255 + $0x598] sm:%s247] %v614
                %v616 = vld [vmem:[%s254 + $0xb40] sm:%s247]
                %617 = vst [vmem:[%s255 + $0x5a0] sm:%s247] %v616
                %v618 = vld [vmem:[%s254 + $0xb50] sm:%s247]
                %619 = vst [vmem:[%s255 + $0x5a8] sm:%s247] %v618
                %v620 = vld [vmem:[%s254 + $0xb60] sm:%s247]
                %621 = vst [vmem:[%s255 + $0x5b0] sm:%s247] %v620
                %v622 = vld [vmem:[%s254 + $0xb70] sm:%s247]
                %623 = vst [vmem:[%s255 + $0x5b8] sm:%s247] %v622
                %v624 = vld [vmem:[%s254 + $0xb80] sm:%s247]
                %625 = vst [vmem:[%s255 + $0x5c0] sm:%s247] %v624
                %v626 = vld [vmem:[%s254 + $0xb90] sm:%s247]
                %627 = vst [vmem:[%s255 + $0x5c8] sm:%s247] %v626
                %v628 = vld [vmem:[%s254 + $0xba0] sm:%s247]
                %629 = vst [vmem:[%s255 + $0x5d0] sm:%s247] %v628
                %v630 = vld [vmem:[%s254 + $0xbb0] sm:%s247]
                %631 = vst [vmem:[%s255 + $0x5d8] sm:%s247] %v630
                %v632 = vld [vmem:[%s254 + $0xbc0] sm:%s247]
                %633 = vst [vmem:[%s255 + $0x5e0] sm:%s247] %v632
                %v634 = vld [vmem:[%s254 + $0xbd0] sm:%s247]
                %635 = vst [vmem:[%s255 + $0x5e8] sm:%s247] %v634
                %v636 = vld [vmem:[%s254 + $0xbe0] sm:%s247]
                %637 = vst [vmem:[%s255 + $0x5f0] sm:%s247] %v636
                %v638 = vld [vmem:[%s254 + $0xbf0] sm:%s247]
                %639 = vst [vmem:[%s255 + $0x5f8] sm:%s247] %v638
                %v640 = vld [vmem:[%s254 + $0xc00] sm:%s247]
                %641 = vst [vmem:[%s255 + $0x600] sm:%s247] %v640
                %v642 = vld [vmem:[%s254 + $0xc10] sm:%s247]
                %643 = vst [vmem:[%s255 + $0x608] sm:%s247] %v642
                %v644 = vld [vmem:[%s254 + $0xc20] sm:%s247]
                %645 = vst [vmem:[%s255 + $0x610] sm:%s247] %v644
                %v646 = vld [vmem:[%s254 + $0xc30] sm:%s247]
                %647 = vst [vmem:[%s255 + $0x618] sm:%s247] %v646
              $region61: #{cnn_forward.1} parent=55 // loop_footer
                %s253 = sadd.s32 1, %s249
              $region62: #{cnn_forward.1} parent=55 // loop_footer_branch
                %248 = sbr.rel target = $region58
              $region63: #{cnn_forward.1} parent=55 // loop_exit
                _
            $region56: #{cnn_forward.1} parent=47 // pred_fallthru
              _
          $region48: #{cnn_forward.1} parent=43 // pred_fallthru
            _
          %1052 = vnop
        $region44: #{cnn_forward.1} parent=39 // pred_fallthru
          _
      $region40: #{cnn_forward.1} parent=5 // pred_fallthru
        _
      %p1053 = scmp.le.s32.totalorder 1, %s16
      %p1054 = scmp.lt.s32.totalorder %s16, 3
      %p1055 = pnand %p1053, %p1054
      %p1056 = pneg %p1055
      // Predicated region
      $region79: #{cnn_forward.1} parent=5 // pred_check
        _
      $region80: #{cnn_forward.1} parent=5 // pred_check_branch
        %1058 = sbr.rel (%p1055) target = $region82
      $region81: #{cnn_forward.1} parent=5 // pred_region
        %s1059 = ssub.s32 %s16, 1
        %s1060 = sand.u32 %s29, 1
        %s1061 = sand.u32 %s29, 1
        %s1062 = smul.addr %s1061, 1568
        %s1063 = scalar_lea.vmem [#allocation2], %s1062
        // Predicated region
        $region83: #{cnn_forward.1} parent=81 // pred_check
          %p1064 = pneg %p42
        $region84: #{cnn_forward.1} parent=81 // pred_check_branch
          %1066 = sbr.rel (%p1064) target = $region86
        $region85: #{cnn_forward.1} parent=81 // pred_region
          _
        $region86: #{cnn_forward.1} parent=81 // pred_fallthru
          _
        %s1067 = sand.u32 %s29, 1
        %s1068 = sand.u32 %s29, 1
        %s1069 = smul.addr %s1068, 1568
        %s1070 = scalar_lea.vmem [#allocation2], %s1069
        %p1071 = pneg %p42
        %p1072 = pneg %p39
        %p1073 = pneg %p63
        %p1074 = pneg %p60
        %p1075 = pneg %p84
        %p1076 = pneg %p81
        %p1077 = pneg %p105
        %p1078 = pneg %p102
        %p1079 = pneg %p126
        %p1080 = pneg %p123
        %p1081 = pneg %p147
        %p1082 = pneg %p144
        %p1083 = pneg %p168
        %p1084 = pneg %p165
        %p1085 = pneg %p194
        %p1086 = pneg %p191
        %s1087 = sand.u32 %s181, 1
        %s1088 = scalar_lea.sflag [#allocation4], %s1087
        %s1089 = sand.u32 %s181, 1
        %s1090 = smul.addr %s1089, 8
        %s1091 = scalar_lea.vmem [#allocation3], %s1090
        %v1092 = vld [vmem:[%s1063] sm:$0xff]
        %v1093 = vld [vmem:[%s1063 + $0x8] sm:$0xff]
        %v1094 = vld [vmem:[%s1063 + $0x10] sm:$0xff]
        %v1095 = vld [vmem:[%s1063 + $0x18] sm:$0xff]
        %v1096 = vld [vmem:[%s1063 + $0x20] sm:$0xff]
        %v1097 = vld [vmem:[%s1063 + $0x28] sm:$0xff]
        %v1098 = vld [vmem:[%s1063 + $0x30] sm:$0xff]
        %v1099 = vld [vmem:[%s1063 + $0x38] sm:$0xff]
        %v1100 = vld [vmem:[%s1063 + $0x40] sm:$0xff]
        %v1101 = vld [vmem:[%s1063 + $0x48] sm:$0xff]
        %v1102 = vld [vmem:[%s1063 + $0x50] sm:$0xff]
        %v1103 = vld [vmem:[%s1063 + $0x58] sm:$0xff]
        %v1104 = vld [vmem:[%s1063 + $0x60] sm:$0xff]
        %v1105 = vld [vmem:[%s1063 + $0x68] sm:$0xff]
        %v1106 = vld [vmem:[%s1063 + $0x70] sm:$0xff]
        %v1107 = vld [vmem:[%s1063 + $0x78] sm:$0xff]
        %v1108 = vld [vmem:[%s1063 + $0x80] sm:$0xff]
        %v1109 = vld [vmem:[%s1063 + $0x88] sm:$0xff]
        %v1110 = vld [vmem:[%s1063 + $0x90] sm:$0xff]
        %v1111 = vld [vmem:[%s1063 + $0x98] sm:$0xff]
        %v1112 = vld [vmem:[%s1063 + $0xa0] sm:$0xff]
        %v1113 = vld [vmem:[%s1063 + $0xa8] sm:$0xff]
        %v1114 = vld [vmem:[%s1063 + $0xb0] sm:$0xff]
        %v1115 = vld [vmem:[%s1063 + $0xb8] sm:$0xff]
        %v1116 = vld [vmem:[%s1063 + $0xc0] sm:$0xff]
        %v1117 = vld [vmem:[%s1063 + $0xc8] sm:$0xff]
        %v1118 = vld [vmem:[%s1063 + $0xd0] sm:$0xff]
        %v1119 = vld [vmem:[%s1063 + $0xd8] sm:$0xff]
        %v1120 = vld [vmem:[%s1063 + $0xe0] sm:$0xff]
        %v1121 = vld [vmem:[%s1063 + $0xe8] sm:$0xff]
        %v1122 = vld [vmem:[%s1063 + $0xf0] sm:$0xff]
        %v1123 = vld [vmem:[%s1063 + $0xf8] sm:$0xff]
        %v1124 = vld [vmem:[%s1063 + $0x100] sm:$0xff]
        %v1125 = vld [vmem:[%s1063 + $0x108] sm:$0xff]
        %v1126 = vld [vmem:[%s1063 + $0x110] sm:$0xff]
        %v1127 = vld [vmem:[%s1063 + $0x118] sm:$0xff]
        %v1128 = vld [vmem:[%s1063 + $0x120] sm:$0xff]
        %v1129 = vld [vmem:[%s1063 + $0x128] sm:$0xff]
        %v1130 = vld [vmem:[%s1063 + $0x130] sm:$0xff]
        %v1131 = vld [vmem:[%s1063 + $0x138] sm:$0xff]
        %v1132 = vld [vmem:[%s1063 + $0x140] sm:$0xff]
        %v1133 = vld [vmem:[%s1063 + $0x148] sm:$0xff]
        %v1134 = vld [vmem:[%s1063 + $0x150] sm:$0xff]
        %v1135 = vld [vmem:[%s1063 + $0x158] sm:$0xff]
        %v1136 = vld [vmem:[%s1063 + $0x160] sm:$0xff]
        %v1137 = vld [vmem:[%s1063 + $0x168] sm:$0xff]
        %v1138 = vld [vmem:[%s1063 + $0x170] sm:$0xff]
        %v1139 = vld [vmem:[%s1063 + $0x178] sm:$0xff]
        %v1140 = vld [vmem:[%s1063 + $0x180] sm:$0xff]
        %v1141 = vld [vmem:[%s1063 + $0x188] sm:$0xff]
        %v1142 = vld [vmem:[%s1063 + $0x190] sm:$0xff]
        %v1143 = vld [vmem:[%s1063 + $0x198] sm:$0xff]
        %v1144 = vld [vmem:[%s1063 + $0x1a0] sm:$0xff]
        %v1145 = vld [vmem:[%s1063 + $0x1a8] sm:$0xff]
        %v1146 = vld [vmem:[%s1063 + $0x1b0] sm:$0xff]
        %v1147 = vld [vmem:[%s1063 + $0x1b8] sm:$0xff]
        %v1148 = vld [vmem:[%s1063 + $0x1c0] sm:$0xff]
        %v1149 = vld [vmem:[%s1063 + $0x1c8] sm:$0xff]
        %v1150 = vld [vmem:[%s1063 + $0x1d0] sm:$0xff]
        %v1151 = vld [vmem:[%s1063 + $0x1d8] sm:$0xff]
        %v1152 = vld [vmem:[%s1063 + $0x1e0] sm:$0xff]
        %v1153 = vld [vmem:[%s1063 + $0x1e8] sm:$0xff]
        %v1154 = vld [vmem:[%s1063 + $0x1f0] sm:$0xff]
        %v1155 = vld [vmem:[%s1063 + $0x1f8] sm:$0xff]
        %v1156 = vld [vmem:[%s1063 + $0x200] sm:$0xff]
        %v1157 = vld [vmem:[%s1063 + $0x208] sm:$0xff]
        %v1158 = vld [vmem:[%s1063 + $0x210] sm:$0xff]
        %v1159 = vld [vmem:[%s1063 + $0x218] sm:$0xff]
        %v1160 = vld [vmem:[%s1063 + $0x220] sm:$0xff]
        %v1161 = vld [vmem:[%s1063 + $0x228] sm:$0xff]
        %v1162 = vld [vmem:[%s1063 + $0x230] sm:$0xff]
        %v1163 = vld [vmem:[%s1063 + $0x238] sm:$0xff]
        %v1164 = vld [vmem:[%s1063 + $0x240] sm:$0xff]
        %v1165 = vld [vmem:[%s1063 + $0x248] sm:$0xff]
        %v1166 = vld [vmem:[%s1063 + $0x250] sm:$0xff]
        %v1167 = vld [vmem:[%s1063 + $0x258] sm:$0xff]
        %v1168 = vld [vmem:[%s1063 + $0x260] sm:$0xff]
        %v1169 = vld [vmem:[%s1063 + $0x268] sm:$0xff]
        %v1170 = vld [vmem:[%s1063 + $0x270] sm:$0xff]
        %v1171 = vld [vmem:[%s1063 + $0x278] sm:$0xff]
        %v1172 = vld [vmem:[%s1063 + $0x280] sm:$0xff]
        %v1173 = vld [vmem:[%s1063 + $0x288] sm:$0xff]
        %v1174 = vld [vmem:[%s1063 + $0x290] sm:$0xff]
        %v1175 = vld [vmem:[%s1063 + $0x298] sm:$0xff]
        %v1176 = vld [vmem:[%s1063 + $0x2a0] sm:$0xff]
        %v1177 = vld [vmem:[%s1063 + $0x2a8] sm:$0xff]
        %v1178 = vld [vmem:[%s1063 + $0x2b0] sm:$0xff]
        %v1179 = vld [vmem:[%s1063 + $0x2b8] sm:$0xff]
        %v1180 = vld [vmem:[%s1063 + $0x2c0] sm:$0xff]
        %v1181 = vld [vmem:[%s1063 + $0x2c8] sm:$0xff]
        %v1182 = vld [vmem:[%s1063 + $0x2d0] sm:$0xff]
        %v1183 = vld [vmem:[%s1063 + $0x2d8] sm:$0xff]
        %v1184 = vld [vmem:[%s1063 + $0x2e0] sm:$0xff]
        %v1185 = vld [vmem:[%s1063 + $0x2e8] sm:$0xff]
        %v1186 = vld [vmem:[%s1063 + $0x2f0] sm:$0xff]
        %v1187 = vld [vmem:[%s1063 + $0x2f8] sm:$0xff]
        %v1188 = vld [vmem:[%s1063 + $0x300] sm:$0xff]
        %v1189 = vld [vmem:[%s1063 + $0x308] sm:$0xff]
        %v1190 = vld [vmem:[%s1063 + $0x310] sm:$0xff]
        %v1191 = vld [vmem:[%s1063 + $0x318] sm:$0xff]
        %v1192 = vld [vmem:[%s1063 + $0x320] sm:$0xff]
        %v1193 = vld [vmem:[%s1063 + $0x328] sm:$0xff]
        %v1194 = vld [vmem:[%s1063 + $0x330] sm:$0xff]
        %v1195 = vld [vmem:[%s1063 + $0x338] sm:$0xff]
        %v1196 = vld [vmem:[%s1063 + $0x340] sm:$0xff]
        %v1197 = vld [vmem:[%s1063 + $0x348] sm:$0xff]
        %v1198 = vld [vmem:[%s1063 + $0x350] sm:$0xff]
        %v1199 = vld [vmem:[%s1063 + $0x358] sm:$0xff]
        %v1200 = vld [vmem:[%s1063 + $0x360] sm:$0xff]
        %v1201 = vld [vmem:[%s1063 + $0x368] sm:$0xff]
        %v1202 = vld [vmem:[%s1063 + $0x370] sm:$0xff]
        %v1203 = vld [vmem:[%s1063 + $0x378] sm:$0xff]
        %v1204 = vld [vmem:[%s1063 + $0x380] sm:$0xff]
        %v1205 = vld [vmem:[%s1063 + $0x388] sm:$0xff]
        %v1206 = vld [vmem:[%s1063 + $0x390] sm:$0xff]
        %v1207 = vld [vmem:[%s1063 + $0x398] sm:$0xff]
        %v1208 = vld [vmem:[%s1063 + $0x3a0] sm:$0xff]
        %v1209 = vld [vmem:[%s1063 + $0x3a8] sm:$0xff]
        %v1210 = vld [vmem:[%s1063 + $0x3b0] sm:$0xff]
        %v1211 = vld [vmem:[%s1063 + $0x3b8] sm:$0xff]
        %v1212 = vld [vmem:[%s1063 + $0x3c0] sm:$0xff]
        %v1213 = vld [vmem:[%s1063 + $0x3c8] sm:$0xff]
        %v1214 = vld [vmem:[%s1063 + $0x3d0] sm:$0xff]
        %v1215 = vld [vmem:[%s1063 + $0x3d8] sm:$0xff]
        %v1216 = vld [vmem:[%s1063 + $0x3e0] sm:$0xff]
        %v1217 = vld [vmem:[%s1063 + $0x3e8] sm:$0xff]
        %v1218 = vld [vmem:[%s1063 + $0x3f0] sm:$0xff]
        %v1219 = vld [vmem:[%s1063 + $0x3f8] sm:$0xff]
        %v1220 = vld [vmem:[%s1063 + $0x400] sm:$0xff]
        %v1221 = vld [vmem:[%s1063 + $0x408] sm:$0xff]
        %v1222 = vld [vmem:[%s1063 + $0x410] sm:$0xff]
        %v1223 = vld [vmem:[%s1063 + $0x418] sm:$0xff]
        %v1224 = vld [vmem:[%s1063 + $0x420] sm:$0xff]
        %v1225 = vld [vmem:[%s1063 + $0x428] sm:$0xff]
        %v1226 = vld [vmem:[%s1063 + $0x430] sm:$0xff]
        %v1227 = vld [vmem:[%s1063 + $0x438] sm:$0xff]
        %v1228 = vld [vmem:[%s1063 + $0x440] sm:$0xff]
        %v1229 = vld [vmem:[%s1063 + $0x448] sm:$0xff]
        %v1230 = vld [vmem:[%s1063 + $0x450] sm:$0xff]
        %v1231 = vld [vmem:[%s1063 + $0x458] sm:$0xff]
        %v1232 = vld [vmem:[%s1063 + $0x460] sm:$0xff]
        %v1233 = vld [vmem:[%s1063 + $0x468] sm:$0xff]
        %v1234 = vld [vmem:[%s1063 + $0x470] sm:$0xff]
        %v1235 = vld [vmem:[%s1063 + $0x478] sm:$0xff]
        %v1236 = vld [vmem:[%s1063 + $0x480] sm:$0xff]
        %v1237 = vld [vmem:[%s1063 + $0x488] sm:$0xff]
        %v1238 = vld [vmem:[%s1063 + $0x490] sm:$0xff]
        %v1239 = vld [vmem:[%s1063 + $0x498] sm:$0xff]
        %v1240 = vld [vmem:[%s1063 + $0x4a0] sm:$0xff]
        %v1241 = vld [vmem:[%s1063 + $0x4a8] sm:$0xff]
        %v1242 = vld [vmem:[%s1063 + $0x4b0] sm:$0xff]
        %v1243 = vld [vmem:[%s1063 + $0x4b8] sm:$0xff]
        %v1244 = vld [vmem:[%s1063 + $0x4c0] sm:$0xff]
        %v1245 = vld [vmem:[%s1063 + $0x4c8] sm:$0xff]
        %v1246 = vld [vmem:[%s1063 + $0x4d0] sm:$0xff]
        %v1247 = vld [vmem:[%s1063 + $0x4d8] sm:$0xff]
        %v1248 = vld [vmem:[%s1063 + $0x4e0] sm:$0xff]
        %v1249 = vld [vmem:[%s1063 + $0x4e8] sm:$0xff]
        %v1250 = vld [vmem:[%s1063 + $0x4f0] sm:$0xff]
        %v1251 = vld [vmem:[%s1063 + $0x4f8] sm:$0xff]
        %v1252 = vld [vmem:[%s1063 + $0x500] sm:$0xff]
        %v1253 = vld [vmem:[%s1063 + $0x508] sm:$0xff]
        %v1254 = vld [vmem:[%s1063 + $0x510] sm:$0xff]
        %v1255 = vld [vmem:[%s1063 + $0x518] sm:$0xff]
        %v1256 = vld [vmem:[%s1063 + $0x520] sm:$0xff]
        %v1257 = vld [vmem:[%s1063 + $0x528] sm:$0xff]
        %v1258 = vld [vmem:[%s1063 + $0x530] sm:$0xff]
        %v1259 = vld [vmem:[%s1063 + $0x538] sm:$0xff]
        %v1260 = vld [vmem:[%s1063 + $0x540] sm:$0xff]
        %v1261 = vld [vmem:[%s1063 + $0x548] sm:$0xff]
        %v1262 = vld [vmem:[%s1063 + $0x550] sm:$0xff]
        %v1263 = vld [vmem:[%s1063 + $0x558] sm:$0xff]
        %v1264 = vld [vmem:[%s1063 + $0x560] sm:$0xff]
        %v1265 = vld [vmem:[%s1063 + $0x568] sm:$0xff]
        %v1266 = vld [vmem:[%s1063 + $0x570] sm:$0xff]
        %v1267 = vld [vmem:[%s1063 + $0x578] sm:$0xff]
        %v1268 = vld [vmem:[%s1063 + $0x580] sm:$0xff]
        %v1269 = vld [vmem:[%s1063 + $0x588] sm:$0xff]
        %v1270 = vld [vmem:[%s1063 + $0x590] sm:$0xff]
        %v1271 = vld [vmem:[%s1063 + $0x598] sm:$0xff]
        %v1272 = vld [vmem:[%s1063 + $0x5a0] sm:$0xff]
        %v1273 = vld [vmem:[%s1063 + $0x5a8] sm:$0xff]
        %v1274 = vld [vmem:[%s1063 + $0x5b0] sm:$0xff]
        %v1275 = vld [vmem:[%s1063 + $0x5b8] sm:$0xff]
        %v1276 = vld [vmem:[%s1063 + $0x5c0] sm:$0xff]
        %v1277 = vld [vmem:[%s1063 + $0x5c8] sm:$0xff]
        %v1278 = vld [vmem:[%s1063 + $0x5d0] sm:$0xff]
        %v1279 = vld [vmem:[%s1063 + $0x5d8] sm:$0xff]
        %v1280 = vld [vmem:[%s1063 + $0x5e0] sm:$0xff]
        %v1281 = vld [vmem:[%s1063 + $0x5e8] sm:$0xff]
        %v1282 = vld [vmem:[%s1063 + $0x5f0] sm:$0xff]
        %v1283 = vld [vmem:[%s1063 + $0x5f8] sm:$0xff]
        %v1284 = vld [vmem:[%s1063 + $0x600] sm:$0xff]
        %v1285 = vld [vmem:[%s1063 + $0x608] sm:$0xff]
        %v1286 = vld [vmem:[%s1063 + $0x610] sm:$0xff]
        %v1287 = vld [vmem:[%s1063 + $0x618] sm:$0xff]
        %v1288 = vld [vmem:[%s1] sm:$0xff]
        %v1289 = vld [vmem:[%s1 + $0x8] sm:$0xff]
        %v1290 = vld [vmem:[%s2] sm:$0x1]
        %v1292 = vlaneseq
        %v1293 = vshrl.u32 %v1292, 7
        %v1294 = vsub.s32 0, %v1293
        %v1295 = vrot.slane %v1290, %v1294
        %vm1297 = vcmask 130048
        %v1299 = vsel %vm1297, %v1092, 0
        %v1302 = vsel %vm1297, %v1093, 0
        %v1305 = vsel %vm1297, %v1094, 0
        %v1308 = vsel %vm1297, %v1095, 0
        %v1311 = vsel %vm1297, %v1096, 0
        %v1314 = vsel %vm1297, %v1097, 0
        %v1317 = vsel %vm1297, %v1098, 0
        %v1320 = vsel %vm1297, %v1099, 0
        %v1323 = vsel %vm1297, %v1100, 0
        %v1326 = vsel %vm1297, %v1101, 0
        %v1329 = vsel %vm1297, %v1102, 0
        %v1332 = vsel %vm1297, %v1103, 0
        %v1335 = vsel %vm1297, %v1104, 0
        %v1338 = vsel %vm1297, %v1105, 0
        %v1341 = vsel %vm1297, %v1106, 0
        %v1344 = vsel %vm1297, %v1107, 0
        %v1347 = vsel %vm1297, %v1108, 0
        %v1350 = vsel %vm1297, %v1109, 0
        %v1353 = vsel %vm1297, %v1110, 0
        %v1356 = vsel %vm1297, %v1111, 0
        %v1359 = vsel %vm1297, %v1112, 0
        %v1362 = vsel %vm1297, %v1113, 0
        %v1365 = vsel %vm1297, %v1114, 0
        %v1368 = vsel %vm1297, %v1115, 0
        %v1371 = vsel %vm1297, %v1116, 0
        %v1374 = vsel %vm1297, %v1117, 0
        %v1377 = vsel %vm1297, %v1118, 0
        %v1380 = vsel %vm1297, %v1119, 0
        %v1383 = vsel %vm1297, %v1120, 0
        %v1386 = vsel %vm1297, %v1121, 0
        %v1389 = vsel %vm1297, %v1122, 0
        %v1392 = vsel %vm1297, %v1123, 0
        %v1395 = vsel %vm1297, %v1124, 0
        %v1398 = vsel %vm1297, %v1125, 0
        %v1401 = vsel %vm1297, %v1126, 0
        %v1404 = vsel %vm1297, %v1127, 0
        %v1407 = vsel %vm1297, %v1128, 0
        %v1410 = vsel %vm1297, %v1129, 0
        %v1413 = vsel %vm1297, %v1130, 0
        %v1416 = vsel %vm1297, %v1131, 0
        %v1419 = vsel %vm1297, %v1132, 0
        %v1422 = vsel %vm1297, %v1133, 0
        %v1425 = vsel %vm1297, %v1134, 0
        %v1428 = vsel %vm1297, %v1135, 0
        %v1431 = vsel %vm1297, %v1136, 0
        %v1434 = vsel %vm1297, %v1137, 0
        %v1437 = vsel %vm1297, %v1138, 0
        %v1440 = vsel %vm1297, %v1139, 0
        %v1443 = vsel %vm1297, %v1140, 0
        %v1446 = vsel %vm1297, %v1141, 0
        %v1449 = vsel %vm1297, %v1142, 0
        %v1452 = vsel %vm1297, %v1143, 0
        %v1455 = vsel %vm1297, %v1144, 0
        %v1458 = vsel %vm1297, %v1145, 0
        %v1461 = vsel %vm1297, %v1146, 0
        %v1464 = vsel %vm1297, %v1147, 0
        %v1467 = vsel %vm1297, %v1148, 0
        %v1470 = vsel %vm1297, %v1149, 0
        %v1473 = vsel %vm1297, %v1150, 0
        %v1476 = vsel %vm1297, %v1151, 0
        %v1479 = vsel %vm1297, %v1152, 0
        %v1482 = vsel %vm1297, %v1153, 0
        %v1485 = vsel %vm1297, %v1154, 0
        %v1488 = vsel %vm1297, %v1155, 0
        %v1491 = vsel %vm1297, %v1156, 0
        %v1494 = vsel %vm1297, %v1157, 0
        %v1497 = vsel %vm1297, %v1158, 0
        %v1500 = vsel %vm1297, %v1159, 0
        %v1503 = vsel %vm1297, %v1160, 0
        %v1506 = vsel %vm1297, %v1161, 0
        %v1509 = vsel %vm1297, %v1162, 0
        %v1512 = vsel %vm1297, %v1163, 0
        %v1515 = vsel %vm1297, %v1164, 0
        %v1518 = vsel %vm1297, %v1165, 0
        %v1521 = vsel %vm1297, %v1166, 0
        %v1524 = vsel %vm1297, %v1167, 0
        %v1527 = vsel %vm1297, %v1168, 0
        %v1530 = vsel %vm1297, %v1169, 0
        %v1533 = vsel %vm1297, %v1170, 0
        %v1536 = vsel %vm1297, %v1171, 0
        %v1539 = vsel %vm1297, %v1172, 0
        %v1542 = vsel %vm1297, %v1173, 0
        %v1545 = vsel %vm1297, %v1174, 0
        %v1548 = vsel %vm1297, %v1175, 0
        %v1551 = vsel %vm1297, %v1176, 0
        %v1554 = vsel %vm1297, %v1177, 0
        %v1557 = vsel %vm1297, %v1178, 0
        %v1560 = vsel %vm1297, %v1179, 0
        %v1563 = vsel %vm1297, %v1180, 0
        %v1566 = vsel %vm1297, %v1181, 0
        %v1569 = vsel %vm1297, %v1182, 0
        %v1572 = vsel %vm1297, %v1183, 0
        %v1575 = vsel %vm1297, %v1184, 0
        %v1578 = vsel %vm1297, %v1185, 0
        %v1581 = vsel %vm1297, %v1186, 0
        %v1584 = vsel %vm1297, %v1187, 0
        %v1587 = vsel %vm1297, %v1188, 0
        %v1590 = vsel %vm1297, %v1189, 0
        %v1593 = vsel %vm1297, %v1190, 0
        %v1596 = vsel %vm1297, %v1191, 0
        %v1599 = vsel %vm1297, %v1192, 0
        %v1602 = vsel %vm1297, %v1193, 0
        %v1605 = vsel %vm1297, %v1194, 0
        %v1608 = vsel %vm1297, %v1195, 0
        %v1611 = vsel %vm1297, %v1196, 0
        %v1614 = vsel %vm1297, %v1197, 0
        %v1617 = vsel %vm1297, %v1198, 0
        %v1620 = vsel %vm1297, %v1199, 0
        %v1623 = vsel %vm1297, %v1200, 0
        %v1626 = vsel %vm1297, %v1201, 0
        %v1629 = vsel %vm1297, %v1202, 0
        %v1632 = vsel %vm1297, %v1203, 0
        %v1635 = vsel %vm1297, %v1204, 0
        %v1638 = vsel %vm1297, %v1205, 0
        %v1641 = vsel %vm1297, %v1206, 0
        %v1644 = vsel %vm1297, %v1207, 0
        %v1647 = vsel %vm1297, %v1208, 0
        %v1650 = vsel %vm1297, %v1209, 0
        %v1653 = vsel %vm1297, %v1210, 0
        %v1656 = vsel %vm1297, %v1211, 0
        %v1659 = vsel %vm1297, %v1212, 0
        %v1662 = vsel %vm1297, %v1213, 0
        %v1665 = vsel %vm1297, %v1214, 0
        %v1668 = vsel %vm1297, %v1215, 0
        %v1671 = vsel %vm1297, %v1216, 0
        %v1674 = vsel %vm1297, %v1217, 0
        %v1677 = vsel %vm1297, %v1218, 0
        %v1680 = vsel %vm1297, %v1219, 0
        %v1683 = vsel %vm1297, %v1220, 0
        %v1686 = vsel %vm1297, %v1221, 0
        %v1689 = vsel %vm1297, %v1222, 0
        %v1692 = vsel %vm1297, %v1223, 0
        %v1695 = vsel %vm1297, %v1224, 0
        %v1698 = vsel %vm1297, %v1225, 0
        %v1701 = vsel %vm1297, %v1226, 0
        %v1704 = vsel %vm1297, %v1227, 0
        %v1707 = vsel %vm1297, %v1228, 0
        %v1710 = vsel %vm1297, %v1229, 0
        %v1713 = vsel %vm1297, %v1230, 0
        %v1716 = vsel %vm1297, %v1231, 0
        %v1719 = vsel %vm1297, %v1232, 0
        %v1722 = vsel %vm1297, %v1233, 0
        %v1725 = vsel %vm1297, %v1234, 0
        %v1728 = vsel %vm1297, %v1235, 0
        %v1731 = vsel %vm1297, %v1236, 0
        %v1734 = vsel %vm1297, %v1237, 0
        %v1737 = vsel %vm1297, %v1238, 0
        %v1740 = vsel %vm1297, %v1239, 0
        %v1743 = vsel %vm1297, %v1240, 0
        %v1746 = vsel %vm1297, %v1241, 0
        %v1749 = vsel %vm1297, %v1242, 0
        %v1752 = vsel %vm1297, %v1243, 0
        %v1755 = vsel %vm1297, %v1244, 0
        %v1758 = vsel %vm1297, %v1245, 0
        %v1761 = vsel %vm1297, %v1246, 0
        %v1764 = vsel %vm1297, %v1247, 0
        %v1767 = vsel %vm1297, %v1248, 0
        %v1770 = vsel %vm1297, %v1249, 0
        %v1773 = vsel %vm1297, %v1250, 0
        %v1776 = vsel %vm1297, %v1251, 0
        %v1779 = vsel %vm1297, %v1252, 0
        %v1782 = vsel %vm1297, %v1253, 0
        %v1785 = vsel %vm1297, %v1254, 0
        %v1788 = vsel %vm1297, %v1255, 0
        %v1791 = vsel %vm1297, %v1256, 0
        %v1794 = vsel %vm1297, %v1257, 0
        %v1797 = vsel %vm1297, %v1258, 0
        %v1800 = vsel %vm1297, %v1259, 0
        %v1803 = vsel %vm1297, %v1260, 0
        %v1806 = vsel %vm1297, %v1261, 0
        %v1809 = vsel %vm1297, %v1262, 0
        %v1812 = vsel %vm1297, %v1263, 0
        %v1815 = vsel %vm1297, %v1264, 0
        %v1818 = vsel %vm1297, %v1265, 0
        %v1821 = vsel %vm1297, %v1266, 0
        %v1824 = vsel %vm1297, %v1267, 0
        %v1827 = vsel %vm1297, %v1268, 0
        %v1830 = vsel %vm1297, %v1269, 0
        %v1833 = vsel %vm1297, %v1270, 0
        %v1836 = vsel %vm1297, %v1271, 0
        %v1839 = vsel %vm1297, %v1272, 0
        %v1842 = vsel %vm1297, %v1273, 0
        %v1845 = vsel %vm1297, %v1274, 0
        %v1848 = vsel %vm1297, %v1275, 0
        %v1851 = vsel %vm1297, %v1276, 0
        %v1854 = vsel %vm1297, %v1277, 0
        %v1857 = vsel %vm1297, %v1278, 0
        %v1860 = vsel %vm1297, %v1279, 0
        %v1863 = vsel %vm1297, %v1280, 0
        %v1866 = vsel %vm1297, %v1281, 0
        %v1869 = vsel %vm1297, %v1282, 0
        %v1872 = vsel %vm1297, %v1283, 0
        %v1875 = vsel %vm1297, %v1284, 0
        %v1878 = vsel %vm1297, %v1285, 0
        %v1881 = vsel %vm1297, %v1286, 0
        %v1884 = vsel %vm1297, %v1287, 0
        %1886 = vmatprep.subr.mxu0 0.0
        %1887 = vmatpush1.msra.mxu0 0.0
        %1888 = vmatprep.subr.mxu0 0.0
        %1889 = vmatpush1.msra.mxu0 0.0
        %1890 = vmatprep.subr.mxu0 0.0
        %1891 = vmatpush1.msra.mxu0 0.0
        %1892 = vmatprep.subr.mxu0 0.0
        %1893 = vmatpush1.msra.mxu0 0.0
        %1894 = vmatprep.subr.mxu0 0.0
        %1895 = vmatpush1.msra.mxu0 0.0
        %1896 = vmatprep.subr.mxu0 0.0
        %1897 = vmatpush1.msra.mxu0 0.0
        %1898 = vmatprep.subr.mxu0 0.0
        %1899 = vmatpush1.msra.mxu0 0.0
        %1900 = vmatprep.subr.mxu0 0.0
        %1901 = vmatpush1.msra.mxu0 0.0
        %1902 = vmatprep.subr.mxu0 0.0
        %1903 = vmatpush1.msra.mxu0 0.0
        %1904 = vmatprep.subr.mxu0 0.0
        %1905 = vmatpush1.msra.mxu0 0.0
        %1906 = vmatprep.subr.mxu0 0.0
        %1907 = vmatpush1.msra.mxu0 0.0
        %1908 = vmatprep.subr.mxu0 0.0
        %1909 = vmatpush1.msra.mxu0 0.0
        %1910 = vmatprep.subr.mxu0 0.0
        %1911 = vmatpush1.msra.mxu0 0.0
        %1912 = vmatprep.subr.mxu0 0.0
        %1913 = vmatpush1.msra.mxu0 0.0
        %1914 = vmatprep.subr.mxu0 0.0
        %1915 = vmatpush1.msra.mxu0 %v1289
        %1916 = vmatprep.subr.mxu0 0.0
        %1917 = vmatpush1.msra.mxu0 %v1288
        %1918 = vmatprep.subr.mxu0 0.0
        %1919 = vmatpush2.msra.mxu0 0.0
        %1920 = vmatprep.subr.mxu0 0.0
        %1921 = vmatpush2.msra.mxu0 0.0
        %1922 = vmatprep.subr.mxu0 0.0
        %1923 = vmatpush2.msra.mxu0 0.0
        %1924 = vmatprep.subr.mxu0 0.0
        %1925 = vmatpush2.msra.mxu0 0.0
        %1926 = vmatprep.subr.mxu0 0.0
        %1927 = vmatpush2.msra.mxu0 0.0
        %1928 = vmatprep.subr.mxu0 0.0
        %1929 = vmatpush2.msra.mxu0 0.0
        %1930 = vmatprep.subr.mxu0 0.0
        %1931 = vmatpush2.msra.mxu0 0.0
        %1932 = vmatprep.subr.mxu0 0.0
        %1933 = vmatpush2.msra.mxu0 0.0
        %1934 = vmatprep.subr.mxu0 0.0
        %1935 = vmatpush2.msra.mxu0 0.0
        %1936 = vmatprep.subr.mxu0 0.0
        %1937 = vmatpush2.msra.mxu0 0.0
        %1938 = vmatprep.subr.mxu0 0.0
        %1939 = vmatpush2.msra.mxu0 0.0
        %1940 = vmatprep.subr.mxu0 0.0
        %1941 = vmatpush2.msra.mxu0 0.0
        %1942 = vmatprep.subr.mxu0 0.0
        %1943 = vmatpush2.msra.mxu0 0.0
        %1944 = vmatprep.subr.mxu0 0.0
        %1945 = vmatpush2.msra.mxu0 0.0
        %1946 = vmatprep.subr.mxu0 0.0
        %1947 = vmatpush2.msra.mxu0 0.0
        %1948 = vmatprep.subr.mxu0 0.0
        %1949 = vmatpush2.msra.mxu0 0.0
        %1950 = vmatprep.mubr.f32.mxu0 0.0
        %1951 = vmatmul.mubr.f32.gmra.mxu0 %v1299
        %v1952 = vpop.f32.mrf.mxu0
        %v1953 = vadd.f32 %v1295, %v1952
        %v1954 = vpop.f32.mrf.mxu0
        %1955 = vmatprep.mubr.f32.mxu0 0.0
        %1956 = vmatmul.mubr.f32.gmra.mxu0 %v1302
        %v1957 = vpop.f32.mrf.mxu0
        %v1958 = vadd.f32 %v1295, %v1957
        %v1959 = vpop.f32.mrf.mxu0
        %1960 = vmatprep.mubr.f32.mxu0 0.0
        %1961 = vmatmul.mubr.f32.gmra.mxu0 %v1305
        %v1962 = vpop.f32.mrf.mxu0
        %v1963 = vadd.f32 %v1295, %v1962
        %v1964 = vpop.f32.mrf.mxu0
        %1965 = vmatprep.mubr.f32.mxu0 0.0
        %1966 = vmatmul.mubr.f32.gmra.mxu0 %v1308
        %v1967 = vpop.f32.mrf.mxu0
        %v1968 = vadd.f32 %v1295, %v1967
        %v1969 = vpop.f32.mrf.mxu0
        %1970 = vmatprep.mubr.f32.mxu0 0.0
        %1971 = vmatmul.mubr.f32.gmra.mxu0 %v1311
        %v1972 = vpop.f32.mrf.mxu0
        %v1973 = vadd.f32 %v1295, %v1972
        %v1974 = vpop.f32.mrf.mxu0
        %1975 = vmatprep.mubr.f32.mxu0 0.0
        %1976 = vmatmul.mubr.f32.gmra.mxu0 %v1314
        %v1977 = vpop.f32.mrf.mxu0
        %v1978 = vadd.f32 %v1295, %v1977
        %v1979 = vpop.f32.mrf.mxu0
        %1980 = vmatprep.mubr.f32.mxu0 0.0
        %1981 = vmatmul.mubr.f32.gmra.mxu0 %v1317
        %v1982 = vpop.f32.mrf.mxu0
        %v1983 = vadd.f32 %v1295, %v1982
        %v1984 = vpop.f32.mrf.mxu0
        %1985 = vmatprep.mubr.f32.mxu0 0.0
        %1986 = vmatmul.mubr.f32.gmra.mxu0 %v1320
        %v1987 = vpop.f32.mrf.mxu0
        %v1988 = vadd.f32 %v1295, %v1987
        %v1989 = vpop.f32.mrf.mxu0
        %1990 = vmatprep.mubr.f32.mxu0 0.0
        %1991 = vmatmul.mubr.f32.gmra.mxu0 %v1323
        %v1992 = vpop.f32.mrf.mxu0
        %v1993 = vadd.f32 %v1295, %v1992
        %v1994 = vpop.f32.mrf.mxu0
        %1995 = vmatprep.mubr.f32.mxu0 0.0
        %1996 = vmatmul.mubr.f32.gmra.mxu0 %v1326
        %v1997 = vpop.f32.mrf.mxu0
        %v1998 = vadd.f32 %v1295, %v1997
        %v1999 = vpop.f32.mrf.mxu0
        %2000 = vmatprep.mubr.f32.mxu0 0.0
        %2001 = vmatmul.mubr.f32.gmra.mxu0 %v1329
        %v2002 = vpop.f32.mrf.mxu0
        %v2003 = vadd.f32 %v1295, %v2002
        %v2004 = vpop.f32.mrf.mxu0
        %2005 = vmatprep.mubr.f32.mxu0 0.0
        %2006 = vmatmul.mubr.f32.gmra.mxu0 %v1332
        %v2007 = vpop.f32.mrf.mxu0
        %v2008 = vadd.f32 %v1295, %v2007
        %v2009 = vpop.f32.mrf.mxu0
        %2010 = vmatprep.mubr.f32.mxu0 0.0
        %2011 = vmatmul.mubr.f32.gmra.mxu0 %v1335
        %v2012 = vpop.f32.mrf.mxu0
        %v2013 = vadd.f32 %v1295, %v2012
        %v2014 = vpop.f32.mrf.mxu0
        %2015 = vmatprep.mubr.f32.mxu0 0.0
        %2016 = vmatmul.mubr.f32.gmra.mxu0 %v1338
        %v2017 = vpop.f32.mrf.mxu0
        %v2018 = vadd.f32 %v1295, %v2017
        %v2019 = vpop.f32.mrf.mxu0
        %2020 = vmatprep.mubr.f32.mxu0 0.0
        %2021 = vmatmul.mubr.f32.gmra.mxu0 %v1341
        %v2022 = vpop.f32.mrf.mxu0
        %v2023 = vadd.f32 %v1295, %v2022
        %v2024 = vpop.f32.mrf.mxu0
        %2025 = vmatprep.mubr.f32.mxu0 0.0
        %2026 = vmatmul.mubr.f32.gmra.mxu0 %v1344
        %v2027 = vpop.f32.mrf.mxu0
        %v2028 = vadd.f32 %v1295, %v2027
        %v2029 = vpop.f32.mrf.mxu0
        %2030 = vmatprep.mubr.f32.mxu0 0.0
        %2031 = vmatmul.mubr.f32.gmra.mxu0 %v1347
        %v2032 = vpop.f32.mrf.mxu0
        %v2033 = vadd.f32 %v1295, %v2032
        %v2034 = vpop.f32.mrf.mxu0
        %2035 = vmatprep.mubr.f32.mxu0 0.0
        %2036 = vmatmul.mubr.f32.gmra.mxu0 %v1350
        %v2037 = vpop.f32.mrf.mxu0
        %v2038 = vadd.f32 %v1295, %v2037
        %v2039 = vpop.f32.mrf.mxu0
        %2040 = vmatprep.mubr.f32.mxu0 0.0
        %2041 = vmatmul.mubr.f32.gmra.mxu0 %v1353
        %v2042 = vpop.f32.mrf.mxu0
        %v2043 = vadd.f32 %v1295, %v2042
        %v2044 = vpop.f32.mrf.mxu0
        %2045 = vmatprep.mubr.f32.mxu0 0.0
        %2046 = vmatmul.mubr.f32.gmra.mxu0 %v1356
        %v2047 = vpop.f32.mrf.mxu0
        %v2048 = vadd.f32 %v1295, %v2047
        %v2049 = vpop.f32.mrf.mxu0
        %2050 = vmatprep.mubr.f32.mxu0 0.0
        %2051 = vmatmul.mubr.f32.gmra.mxu0 %v1359
        %v2052 = vpop.f32.mrf.mxu0
        %v2053 = vadd.f32 %v1295, %v2052
        %v2054 = vpop.f32.mrf.mxu0
        %2055 = vmatprep.mubr.f32.mxu0 0.0
        %2056 = vmatmul.mubr.f32.gmra.mxu0 %v1362
        %v2057 = vpop.f32.mrf.mxu0
        %v2058 = vadd.f32 %v1295, %v2057
        %v2059 = vpop.f32.mrf.mxu0
        %2060 = vmatprep.mubr.f32.mxu0 0.0
        %2061 = vmatmul.mubr.f32.gmra.mxu0 %v1365
        %v2062 = vpop.f32.mrf.mxu0
        %v2063 = vadd.f32 %v1295, %v2062
        %v2064 = vpop.f32.mrf.mxu0
        %2065 = vmatprep.mubr.f32.mxu0 0.0
        %2066 = vmatmul.mubr.f32.gmra.mxu0 %v1368
        %v2067 = vpop.f32.mrf.mxu0
        %v2068 = vadd.f32 %v1295, %v2067
        %v2069 = vpop.f32.mrf.mxu0
        %2070 = vmatprep.mubr.f32.mxu0 0.0
        %2071 = vmatmul.mubr.f32.gmra.mxu0 %v1371
        %v2072 = vpop.f32.mrf.mxu0
        %v2073 = vadd.f32 %v1295, %v2072
        %v2074 = vpop.f32.mrf.mxu0
        %2075 = vmatprep.mubr.f32.mxu0 0.0
        %2076 = vmatmul.mubr.f32.gmra.mxu0 %v1374
        %v2077 = vpop.f32.mrf.mxu0
        %v2078 = vadd.f32 %v1295, %v2077
        %v2079 = vpop.f32.mrf.mxu0
        %2080 = vmatprep.mubr.f32.mxu0 0.0
        %2081 = vmatmul.mubr.f32.gmra.mxu0 %v1377
        %v2082 = vpop.f32.mrf.mxu0
        %v2083 = vadd.f32 %v1295, %v2082
        %v2084 = vpop.f32.mrf.mxu0
        %2085 = vmatprep.mubr.f32.mxu0 0.0
        %2086 = vmatmul.mubr.f32.gmra.mxu0 %v1380
        %v2087 = vpop.f32.mrf.mxu0
        %v2088 = vadd.f32 %v1295, %v2087
        %v2089 = vpop.f32.mrf.mxu0
        %2090 = vmatprep.mubr.f32.mxu0 0.0
        %2091 = vmatmul.mubr.f32.gmra.mxu0 %v1383
        %v2092 = vpop.f32.mrf.mxu0
        %v2093 = vadd.f32 %v1295, %v2092
        %v2094 = vpop.f32.mrf.mxu0
        %2095 = vmatprep.mubr.f32.mxu0 0.0
        %2096 = vmatmul.mubr.f32.gmra.mxu0 %v1386
        %v2097 = vpop.f32.mrf.mxu0
        %v2098 = vadd.f32 %v1295, %v2097
        %v2099 = vpop.f32.mrf.mxu0
        %2100 = vmatprep.mubr.f32.mxu0 0.0
        %2101 = vmatmul.mubr.f32.gmra.mxu0 %v1389
        %v2102 = vpop.f32.mrf.mxu0
        %v2103 = vadd.f32 %v1295, %v2102
        %v2104 = vpop.f32.mrf.mxu0
        %2105 = vmatprep.mubr.f32.mxu0 0.0
        %2106 = vmatmul.mubr.f32.gmra.mxu0 %v1392
        %v2107 = vpop.f32.mrf.mxu0
        %v2108 = vadd.f32 %v1295, %v2107
        %v2109 = vpop.f32.mrf.mxu0
        %2110 = vmatprep.mubr.f32.mxu0 0.0
        %2111 = vmatmul.mubr.f32.gmra.mxu0 %v1395
        %v2112 = vpop.f32.mrf.mxu0
        %v2113 = vadd.f32 %v1295, %v2112
        %v2114 = vpop.f32.mrf.mxu0
        %2115 = vmatprep.mubr.f32.mxu0 0.0
        %2116 = vmatmul.mubr.f32.gmra.mxu0 %v1398
        %v2117 = vpop.f32.mrf.mxu0
        %v2118 = vadd.f32 %v1295, %v2117
        %v2119 = vpop.f32.mrf.mxu0
        %2120 = vmatprep.mubr.f32.mxu0 0.0
        %2121 = vmatmul.mubr.f32.gmra.mxu0 %v1401
        %v2122 = vpop.f32.mrf.mxu0
        %v2123 = vadd.f32 %v1295, %v2122
        %v2124 = vpop.f32.mrf.mxu0
        %2125 = vmatprep.mubr.f32.mxu0 0.0
        %2126 = vmatmul.mubr.f32.gmra.mxu0 %v1404
        %v2127 = vpop.f32.mrf.mxu0
        %v2128 = vadd.f32 %v1295, %v2127
        %v2129 = vpop.f32.mrf.mxu0
        %2130 = vmatprep.mubr.f32.mxu0 0.0
        %2131 = vmatmul.mubr.f32.gmra.mxu0 %v1407
        %v2132 = vpop.f32.mrf.mxu0
        %v2133 = vadd.f32 %v1295, %v2132
        %v2134 = vpop.f32.mrf.mxu0
        %2135 = vmatprep.mubr.f32.mxu0 0.0
        %2136 = vmatmul.mubr.f32.gmra.mxu0 %v1410
        %v2137 = vpop.f32.mrf.mxu0
        %v2138 = vadd.f32 %v1295, %v2137
        %v2139 = vpop.f32.mrf.mxu0
        %2140 = vmatprep.mubr.f32.mxu0 0.0
        %2141 = vmatmul.mubr.f32.gmra.mxu0 %v1413
        %v2142 = vpop.f32.mrf.mxu0
        %v2143 = vadd.f32 %v1295, %v2142
        %v2144 = vpop.f32.mrf.mxu0
        %2145 = vmatprep.mubr.f32.mxu0 0.0
        %2146 = vmatmul.mubr.f32.gmra.mxu0 %v1416
        %v2147 = vpop.f32.mrf.mxu0
        %v2148 = vadd.f32 %v1295, %v2147
        %v2149 = vpop.f32.mrf.mxu0
        %2150 = vmatprep.mubr.f32.mxu0 0.0
        %2151 = vmatmul.mubr.f32.gmra.mxu0 %v1419
        %v2152 = vpop.f32.mrf.mxu0
        %v2153 = vadd.f32 %v1295, %v2152
        %v2154 = vpop.f32.mrf.mxu0
        %2155 = vmatprep.mubr.f32.mxu0 0.0
        %2156 = vmatmul.mubr.f32.gmra.mxu0 %v1422
        %v2157 = vpop.f32.mrf.mxu0
        %v2158 = vadd.f32 %v1295, %v2157
        %v2159 = vpop.f32.mrf.mxu0
        %2160 = vmatprep.mubr.f32.mxu0 0.0
        %2161 = vmatmul.mubr.f32.gmra.mxu0 %v1425
        %v2162 = vpop.f32.mrf.mxu0
        %v2163 = vadd.f32 %v1295, %v2162
        %v2164 = vpop.f32.mrf.mxu0
        %2165 = vmatprep.mubr.f32.mxu0 0.0
        %2166 = vmatmul.mubr.f32.gmra.mxu0 %v1428
        %v2167 = vpop.f32.mrf.mxu0
        %v2168 = vadd.f32 %v1295, %v2167
        %v2169 = vpop.f32.mrf.mxu0
        %2170 = vmatprep.mubr.f32.mxu0 0.0
        %2171 = vmatmul.mubr.f32.gmra.mxu0 %v1431
        %v2172 = vpop.f32.mrf.mxu0
        %v2173 = vadd.f32 %v1295, %v2172
        %v2174 = vpop.f32.mrf.mxu0
        %2175 = vmatprep.mubr.f32.mxu0 0.0
        %2176 = vmatmul.mubr.f32.gmra.mxu0 %v1434
        %v2177 = vpop.f32.mrf.mxu0
        %v2178 = vadd.f32 %v1295, %v2177
        %v2179 = vpop.f32.mrf.mxu0
        %2180 = vmatprep.mubr.f32.mxu0 0.0
        %2181 = vmatmul.mubr.f32.gmra.mxu0 %v1437
        %v2182 = vpop.f32.mrf.mxu0
        %v2183 = vadd.f32 %v1295, %v2182
        %v2184 = vpop.f32.mrf.mxu0
        %2185 = vmatprep.mubr.f32.mxu0 0.0
        %2186 = vmatmul.mubr.f32.gmra.mxu0 %v1440
        %v2187 = vpop.f32.mrf.mxu0
        %v2188 = vadd.f32 %v1295, %v2187
        %v2189 = vpop.f32.mrf.mxu0
        %2190 = vmatprep.mubr.f32.mxu0 0.0
        %2191 = vmatmul.mubr.f32.gmra.mxu0 %v1443
        %v2192 = vpop.f32.mrf.mxu0
        %v2193 = vadd.f32 %v1295, %v2192
        %v2194 = vpop.f32.mrf.mxu0
        %2195 = vmatprep.mubr.f32.mxu0 0.0
        %2196 = vmatmul.mubr.f32.gmra.mxu0 %v1446
        %v2197 = vpop.f32.mrf.mxu0
        %v2198 = vadd.f32 %v1295, %v2197
        %v2199 = vpop.f32.mrf.mxu0
        %2200 = vmatprep.mubr.f32.mxu0 0.0
        %2201 = vmatmul.mubr.f32.gmra.mxu0 %v1449
        %v2202 = vpop.f32.mrf.mxu0
        %v2203 = vadd.f32 %v1295, %v2202
        %v2204 = vpop.f32.mrf.mxu0
        %2205 = vmatprep.mubr.f32.mxu0 0.0
        %2206 = vmatmul.mubr.f32.gmra.mxu0 %v1452
        %v2207 = vpop.f32.mrf.mxu0
        %v2208 = vadd.f32 %v1295, %v2207
        %v2209 = vpop.f32.mrf.mxu0
        %2210 = vmatprep.mubr.f32.mxu0 0.0
        %2211 = vmatmul.mubr.f32.gmra.mxu0 %v1455
        %v2212 = vpop.f32.mrf.mxu0
        %v2213 = vadd.f32 %v1295, %v2212
        %v2214 = vpop.f32.mrf.mxu0
        %2215 = vmatprep.mubr.f32.mxu0 0.0
        %2216 = vmatmul.mubr.f32.gmra.mxu0 %v1458
        %v2217 = vpop.f32.mrf.mxu0
        %v2218 = vadd.f32 %v1295, %v2217
        %v2219 = vpop.f32.mrf.mxu0
        %2220 = vmatprep.mubr.f32.mxu0 0.0
        %2221 = vmatmul.mubr.f32.gmra.mxu0 %v1461
        %v2222 = vpop.f32.mrf.mxu0
        %v2223 = vadd.f32 %v1295, %v2222
        %v2224 = vpop.f32.mrf.mxu0
        %2225 = vmatprep.mubr.f32.mxu0 0.0
        %2226 = vmatmul.mubr.f32.gmra.mxu0 %v1464
        %v2227 = vpop.f32.mrf.mxu0
        %v2228 = vadd.f32 %v1295, %v2227
        %v2229 = vpop.f32.mrf.mxu0
        %2230 = vmatprep.mubr.f32.mxu0 0.0
        %2231 = vmatmul.mubr.f32.gmra.mxu0 %v1467
        %v2232 = vpop.f32.mrf.mxu0
        %v2233 = vadd.f32 %v1295, %v2232
        %v2234 = vpop.f32.mrf.mxu0
        %2235 = vmatprep.mubr.f32.mxu0 0.0
        %2236 = vmatmul.mubr.f32.gmra.mxu0 %v1470
        %v2237 = vpop.f32.mrf.mxu0
        %v2238 = vadd.f32 %v1295, %v2237
        %v2239 = vpop.f32.mrf.mxu0
        %2240 = vmatprep.mubr.f32.mxu0 0.0
        %2241 = vmatmul.mubr.f32.gmra.mxu0 %v1473
        %v2242 = vpop.f32.mrf.mxu0
        %v2243 = vadd.f32 %v1295, %v2242
        %v2244 = vpop.f32.mrf.mxu0
        %2245 = vmatprep.mubr.f32.mxu0 0.0
        %2246 = vmatmul.mubr.f32.gmra.mxu0 %v1476
        %v2247 = vpop.f32.mrf.mxu0
        %v2248 = vadd.f32 %v1295, %v2247
        %v2249 = vpop.f32.mrf.mxu0
        %2250 = vmatprep.mubr.f32.mxu0 0.0
        %2251 = vmatmul.mubr.f32.gmra.mxu0 %v1479
        %v2252 = vpop.f32.mrf.mxu0
        %v2253 = vadd.f32 %v1295, %v2252
        %v2254 = vpop.f32.mrf.mxu0
        %2255 = vmatprep.mubr.f32.mxu0 0.0
        %2256 = vmatmul.mubr.f32.gmra.mxu0 %v1482
        %v2257 = vpop.f32.mrf.mxu0
        %v2258 = vadd.f32 %v1295, %v2257
        %v2259 = vpop.f32.mrf.mxu0
        %2260 = vmatprep.mubr.f32.mxu0 0.0
        %2261 = vmatmul.mubr.f32.gmra.mxu0 %v1485
        %v2262 = vpop.f32.mrf.mxu0
        %v2263 = vadd.f32 %v1295, %v2262
        %v2264 = vpop.f32.mrf.mxu0
        %2265 = vmatprep.mubr.f32.mxu0 0.0
        %2266 = vmatmul.mubr.f32.gmra.mxu0 %v1488
        %v2267 = vpop.f32.mrf.mxu0
        %v2268 = vadd.f32 %v1295, %v2267
        %v2269 = vpop.f32.mrf.mxu0
        %2270 = vmatprep.mubr.f32.mxu0 0.0
        %2271 = vmatmul.mubr.f32.gmra.mxu0 %v1491
        %v2272 = vpop.f32.mrf.mxu0
        %v2273 = vadd.f32 %v1295, %v2272
        %v2274 = vpop.f32.mrf.mxu0
        %2275 = vmatprep.mubr.f32.mxu0 0.0
        %2276 = vmatmul.mubr.f32.gmra.mxu0 %v1494
        %v2277 = vpop.f32.mrf.mxu0
        %v2278 = vadd.f32 %v1295, %v2277
        %v2279 = vpop.f32.mrf.mxu0
        %2280 = vmatprep.mubr.f32.mxu0 0.0
        %2281 = vmatmul.mubr.f32.gmra.mxu0 %v1497
        %v2282 = vpop.f32.mrf.mxu0
        %v2283 = vadd.f32 %v1295, %v2282
        %v2284 = vpop.f32.mrf.mxu0
        %2285 = vmatprep.mubr.f32.mxu0 0.0
        %2286 = vmatmul.mubr.f32.gmra.mxu0 %v1500
        %v2287 = vpop.f32.mrf.mxu0
        %v2288 = vadd.f32 %v1295, %v2287
        %v2289 = vpop.f32.mrf.mxu0
        %2290 = vmatprep.mubr.f32.mxu0 0.0
        %2291 = vmatmul.mubr.f32.gmra.mxu0 %v1503
        %v2292 = vpop.f32.mrf.mxu0
        %v2293 = vadd.f32 %v1295, %v2292
        %v2294 = vpop.f32.mrf.mxu0
        %2295 = vmatprep.mubr.f32.mxu0 0.0
        %2296 = vmatmul.mubr.f32.gmra.mxu0 %v1506
        %v2297 = vpop.f32.mrf.mxu0
        %v2298 = vadd.f32 %v1295, %v2297
        %v2299 = vpop.f32.mrf.mxu0
        %2300 = vmatprep.mubr.f32.mxu0 0.0
        %2301 = vmatmul.mubr.f32.gmra.mxu0 %v1509
        %v2302 = vpop.f32.mrf.mxu0
        %v2303 = vadd.f32 %v1295, %v2302
        %v2304 = vpop.f32.mrf.mxu0
        %2305 = vmatprep.mubr.f32.mxu0 0.0
        %2306 = vmatmul.mubr.f32.gmra.mxu0 %v1512
        %v2307 = vpop.f32.mrf.mxu0
        %v2308 = vadd.f32 %v1295, %v2307
        %v2309 = vpop.f32.mrf.mxu0
        %2310 = vmatprep.mubr.f32.mxu0 0.0
        %2311 = vmatmul.mubr.f32.gmra.mxu0 %v1515
        %v2312 = vpop.f32.mrf.mxu0
        %v2313 = vadd.f32 %v1295, %v2312
        %v2314 = vpop.f32.mrf.mxu0
        %2315 = vmatprep.mubr.f32.mxu0 0.0
        %2316 = vmatmul.mubr.f32.gmra.mxu0 %v1518
        %v2317 = vpop.f32.mrf.mxu0
        %v2318 = vadd.f32 %v1295, %v2317
        %v2319 = vpop.f32.mrf.mxu0
        %2320 = vmatprep.mubr.f32.mxu0 0.0
        %2321 = vmatmul.mubr.f32.gmra.mxu0 %v1521
        %v2322 = vpop.f32.mrf.mxu0
        %v2323 = vadd.f32 %v1295, %v2322
        %v2324 = vpop.f32.mrf.mxu0
        %2325 = vmatprep.mubr.f32.mxu0 0.0
        %2326 = vmatmul.mubr.f32.gmra.mxu0 %v1524
        %v2327 = vpop.f32.mrf.mxu0
        %v2328 = vadd.f32 %v1295, %v2327
        %v2329 = vpop.f32.mrf.mxu0
        %2330 = vmatprep.mubr.f32.mxu0 0.0
        %2331 = vmatmul.mubr.f32.gmra.mxu0 %v1527
        %v2332 = vpop.f32.mrf.mxu0
        %v2333 = vadd.f32 %v1295, %v2332
        %v2334 = vpop.f32.mrf.mxu0
        %2335 = vmatprep.mubr.f32.mxu0 0.0
        %2336 = vmatmul.mubr.f32.gmra.mxu0 %v1530
        %v2337 = vpop.f32.mrf.mxu0
        %v2338 = vadd.f32 %v1295, %v2337
        %v2339 = vpop.f32.mrf.mxu0
        %2340 = vmatprep.mubr.f32.mxu0 0.0
        %2341 = vmatmul.mubr.f32.gmra.mxu0 %v1533
        %v2342 = vpop.f32.mrf.mxu0
        %v2343 = vadd.f32 %v1295, %v2342
        %v2344 = vpop.f32.mrf.mxu0
        %2345 = vmatprep.mubr.f32.mxu0 0.0
        %2346 = vmatmul.mubr.f32.gmra.mxu0 %v1536
        %v2347 = vpop.f32.mrf.mxu0
        %v2348 = vadd.f32 %v1295, %v2347
        %v2349 = vpop.f32.mrf.mxu0
        %2350 = vmatprep.mubr.f32.mxu0 0.0
        %2351 = vmatmul.mubr.f32.gmra.mxu0 %v1539
        %v2352 = vpop.f32.mrf.mxu0
        %v2353 = vadd.f32 %v1295, %v2352
        %v2354 = vpop.f32.mrf.mxu0
        %2355 = vmatprep.mubr.f32.mxu0 0.0
        %2356 = vmatmul.mubr.f32.gmra.mxu0 %v1542
        %v2357 = vpop.f32.mrf.mxu0
        %v2358 = vadd.f32 %v1295, %v2357
        %v2359 = vpop.f32.mrf.mxu0
        %2360 = vmatprep.mubr.f32.mxu0 0.0
        %2361 = vmatmul.mubr.f32.gmra.mxu0 %v1545
        %v2362 = vpop.f32.mrf.mxu0
        %v2363 = vadd.f32 %v1295, %v2362
        %v2364 = vpop.f32.mrf.mxu0
        %2365 = vmatprep.mubr.f32.mxu0 0.0
        %2366 = vmatmul.mubr.f32.gmra.mxu0 %v1548
        %v2367 = vpop.f32.mrf.mxu0
        %v2368 = vadd.f32 %v1295, %v2367
        %v2369 = vpop.f32.mrf.mxu0
        %2370 = vmatprep.mubr.f32.mxu0 0.0
        %2371 = vmatmul.mubr.f32.gmra.mxu0 %v1551
        %v2372 = vpop.f32.mrf.mxu0
        %v2373 = vadd.f32 %v1295, %v2372
        %v2374 = vpop.f32.mrf.mxu0
        %2375 = vmatprep.mubr.f32.mxu0 0.0
        %2376 = vmatmul.mubr.f32.gmra.mxu0 %v1554
        %v2377 = vpop.f32.mrf.mxu0
        %v2378 = vadd.f32 %v1295, %v2377
        %v2379 = vpop.f32.mrf.mxu0
        %2380 = vmatprep.mubr.f32.mxu0 0.0
        %2381 = vmatmul.mubr.f32.gmra.mxu0 %v1557
        %v2382 = vpop.f32.mrf.mxu0
        %v2383 = vadd.f32 %v1295, %v2382
        %v2384 = vpop.f32.mrf.mxu0
        %2385 = vmatprep.mubr.f32.mxu0 0.0
        %2386 = vmatmul.mubr.f32.gmra.mxu0 %v1560
        %v2387 = vpop.f32.mrf.mxu0
        %v2388 = vadd.f32 %v1295, %v2387
        %v2389 = vpop.f32.mrf.mxu0
        %2390 = vmatprep.mubr.f32.mxu0 0.0
        %2391 = vmatmul.mubr.f32.gmra.mxu0 %v1563
        %v2392 = vpop.f32.mrf.mxu0
        %v2393 = vadd.f32 %v1295, %v2392
        %v2394 = vpop.f32.mrf.mxu0
        %2395 = vmatprep.mubr.f32.mxu0 0.0
        %2396 = vmatmul.mubr.f32.gmra.mxu0 %v1566
        %v2397 = vpop.f32.mrf.mxu0
        %v2398 = vadd.f32 %v1295, %v2397
        %v2399 = vpop.f32.mrf.mxu0
        %2400 = vmatprep.mubr.f32.mxu0 0.0
        %2401 = vmatmul.mubr.f32.gmra.mxu0 %v1569
        %v2402 = vpop.f32.mrf.mxu0
        %v2403 = vadd.f32 %v1295, %v2402
        %v2404 = vpop.f32.mrf.mxu0
        %2405 = vmatprep.mubr.f32.mxu0 0.0
        %2406 = vmatmul.mubr.f32.gmra.mxu0 %v1572
        %v2407 = vpop.f32.mrf.mxu0
        %v2408 = vadd.f32 %v1295, %v2407
        %v2409 = vpop.f32.mrf.mxu0
        %2410 = vmatprep.mubr.f32.mxu0 0.0
        %2411 = vmatmul.mubr.f32.gmra.mxu0 %v1575
        %v2412 = vpop.f32.mrf.mxu0
        %v2413 = vadd.f32 %v1295, %v2412
        %v2414 = vpop.f32.mrf.mxu0
        %2415 = vmatprep.mubr.f32.mxu0 0.0
        %2416 = vmatmul.mubr.f32.gmra.mxu0 %v1578
        %v2417 = vpop.f32.mrf.mxu0
        %v2418 = vadd.f32 %v1295, %v2417
        %v2419 = vpop.f32.mrf.mxu0
        %2420 = vmatprep.mubr.f32.mxu0 0.0
        %2421 = vmatmul.mubr.f32.gmra.mxu0 %v1581
        %v2422 = vpop.f32.mrf.mxu0
        %v2423 = vadd.f32 %v1295, %v2422
        %v2424 = vpop.f32.mrf.mxu0
        %2425 = vmatprep.mubr.f32.mxu0 0.0
        %2426 = vmatmul.mubr.f32.gmra.mxu0 %v1584
        %v2427 = vpop.f32.mrf.mxu0
        %v2428 = vadd.f32 %v1295, %v2427
        %v2429 = vpop.f32.mrf.mxu0
        %2430 = vmatprep.mubr.f32.mxu0 0.0
        %2431 = vmatmul.mubr.f32.gmra.mxu0 %v1587
        %v2432 = vpop.f32.mrf.mxu0
        %v2433 = vadd.f32 %v1295, %v2432
        %v2434 = vpop.f32.mrf.mxu0
        %2435 = vmatprep.mubr.f32.mxu0 0.0
        %2436 = vmatmul.mubr.f32.gmra.mxu0 %v1590
        %v2437 = vpop.f32.mrf.mxu0
        %v2438 = vadd.f32 %v1295, %v2437
        %v2439 = vpop.f32.mrf.mxu0
        %2440 = vmatprep.mubr.f32.mxu0 0.0
        %2441 = vmatmul.mubr.f32.gmra.mxu0 %v1593
        %v2442 = vpop.f32.mrf.mxu0
        %v2443 = vadd.f32 %v1295, %v2442
        %v2444 = vpop.f32.mrf.mxu0
        %2445 = vmatprep.mubr.f32.mxu0 0.0
        %2446 = vmatmul.mubr.f32.gmra.mxu0 %v1596
        %v2447 = vpop.f32.mrf.mxu0
        %v2448 = vadd.f32 %v1295, %v2447
        %v2449 = vpop.f32.mrf.mxu0
        %2450 = vmatprep.mubr.f32.mxu0 0.0
        %2451 = vmatmul.mubr.f32.gmra.mxu0 %v1599
        %v2452 = vpop.f32.mrf.mxu0
        %v2453 = vadd.f32 %v1295, %v2452
        %v2454 = vpop.f32.mrf.mxu0
        %2455 = vmatprep.mubr.f32.mxu0 0.0
        %2456 = vmatmul.mubr.f32.gmra.mxu0 %v1602
        %v2457 = vpop.f32.mrf.mxu0
        %v2458 = vadd.f32 %v1295, %v2457
        %v2459 = vpop.f32.mrf.mxu0
        %2460 = vmatprep.mubr.f32.mxu0 0.0
        %2461 = vmatmul.mubr.f32.gmra.mxu0 %v1605
        %v2462 = vpop.f32.mrf.mxu0
        %v2463 = vadd.f32 %v1295, %v2462
        %v2464 = vpop.f32.mrf.mxu0
        %2465 = vmatprep.mubr.f32.mxu0 0.0
        %2466 = vmatmul.mubr.f32.gmra.mxu0 %v1608
        %v2467 = vpop.f32.mrf.mxu0
        %v2468 = vadd.f32 %v1295, %v2467
        %v2469 = vpop.f32.mrf.mxu0
        %2470 = vmatprep.mubr.f32.mxu0 0.0
        %2471 = vmatmul.mubr.f32.gmra.mxu0 %v1611
        %v2472 = vpop.f32.mrf.mxu0
        %v2473 = vadd.f32 %v1295, %v2472
        %v2474 = vpop.f32.mrf.mxu0
        %2475 = vmatprep.mubr.f32.mxu0 0.0
        %2476 = vmatmul.mubr.f32.gmra.mxu0 %v1614
        %v2477 = vpop.f32.mrf.mxu0
        %v2478 = vadd.f32 %v1295, %v2477
        %v2479 = vpop.f32.mrf.mxu0
        %2480 = vmatprep.mubr.f32.mxu0 0.0
        %2481 = vmatmul.mubr.f32.gmra.mxu0 %v1617
        %v2482 = vpop.f32.mrf.mxu0
        %v2483 = vadd.f32 %v1295, %v2482
        %v2484 = vpop.f32.mrf.mxu0
        %2485 = vmatprep.mubr.f32.mxu0 0.0
        %2486 = vmatmul.mubr.f32.gmra.mxu0 %v1620
        %v2487 = vpop.f32.mrf.mxu0
        %v2488 = vadd.f32 %v1295, %v2487
        %v2489 = vpop.f32.mrf.mxu0
        %2490 = vmatprep.mubr.f32.mxu0 0.0
        %2491 = vmatmul.mubr.f32.gmra.mxu0 %v1623
        %v2492 = vpop.f32.mrf.mxu0
        %v2493 = vadd.f32 %v1295, %v2492
        %v2494 = vpop.f32.mrf.mxu0
        %2495 = vmatprep.mubr.f32.mxu0 0.0
        %2496 = vmatmul.mubr.f32.gmra.mxu0 %v1626
        %v2497 = vpop.f32.mrf.mxu0
        %v2498 = vadd.f32 %v1295, %v2497
        %v2499 = vpop.f32.mrf.mxu0
        %2500 = vmatprep.mubr.f32.mxu0 0.0
        %2501 = vmatmul.mubr.f32.gmra.mxu0 %v1629
        %v2502 = vpop.f32.mrf.mxu0
        %v2503 = vadd.f32 %v1295, %v2502
        %v2504 = vpop.f32.mrf.mxu0
        %2505 = vmatprep.mubr.f32.mxu0 0.0
        %2506 = vmatmul.mubr.f32.gmra.mxu0 %v1632
        %v2507 = vpop.f32.mrf.mxu0
        %v2508 = vadd.f32 %v1295, %v2507
        %v2509 = vpop.f32.mrf.mxu0
        %2510 = vmatprep.mubr.f32.mxu0 0.0
        %2511 = vmatmul.mubr.f32.gmra.mxu0 %v1635
        %v2512 = vpop.f32.mrf.mxu0
        %v2513 = vadd.f32 %v1295, %v2512
        %v2514 = vpop.f32.mrf.mxu0
        %2515 = vmatprep.mubr.f32.mxu0 0.0
        %2516 = vmatmul.mubr.f32.gmra.mxu0 %v1638
        %v2517 = vpop.f32.mrf.mxu0
        %v2518 = vadd.f32 %v1295, %v2517
        %v2519 = vpop.f32.mrf.mxu0
        %2520 = vmatprep.mubr.f32.mxu0 0.0
        %2521 = vmatmul.mubr.f32.gmra.mxu0 %v1641
        %v2522 = vpop.f32.mrf.mxu0
        %v2523 = vadd.f32 %v1295, %v2522
        %v2524 = vpop.f32.mrf.mxu0
        %2525 = vmatprep.mubr.f32.mxu0 0.0
        %2526 = vmatmul.mubr.f32.gmra.mxu0 %v1644
        %v2527 = vpop.f32.mrf.mxu0
        %v2528 = vadd.f32 %v1295, %v2527
        %v2529 = vpop.f32.mrf.mxu0
        %2530 = vmatprep.mubr.f32.mxu0 0.0
        %2531 = vmatmul.mubr.f32.gmra.mxu0 %v1647
        %v2532 = vpop.f32.mrf.mxu0
        %v2533 = vadd.f32 %v1295, %v2532
        %v2534 = vpop.f32.mrf.mxu0
        %2535 = vmatprep.mubr.f32.mxu0 0.0
        %2536 = vmatmul.mubr.f32.gmra.mxu0 %v1650
        %v2537 = vpop.f32.mrf.mxu0
        %v2538 = vadd.f32 %v1295, %v2537
        %v2539 = vpop.f32.mrf.mxu0
        %2540 = vmatprep.mubr.f32.mxu0 0.0
        %2541 = vmatmul.mubr.f32.gmra.mxu0 %v1653
        %v2542 = vpop.f32.mrf.mxu0
        %v2543 = vadd.f32 %v1295, %v2542
        %v2544 = vpop.f32.mrf.mxu0
        %2545 = vmatprep.mubr.f32.mxu0 0.0
        %2546 = vmatmul.mubr.f32.gmra.mxu0 %v1656
        %v2547 = vpop.f32.mrf.mxu0
        %v2548 = vadd.f32 %v1295, %v2547
        %v2549 = vpop.f32.mrf.mxu0
        %2550 = vmatprep.mubr.f32.mxu0 0.0
        %2551 = vmatmul.mubr.f32.gmra.mxu0 %v1659
        %v2552 = vpop.f32.mrf.mxu0
        %v2553 = vadd.f32 %v1295, %v2552
        %v2554 = vpop.f32.mrf.mxu0
        %2555 = vmatprep.mubr.f32.mxu0 0.0
        %2556 = vmatmul.mubr.f32.gmra.mxu0 %v1662
        %v2557 = vpop.f32.mrf.mxu0
        %v2558 = vadd.f32 %v1295, %v2557
        %v2559 = vpop.f32.mrf.mxu0
        %2560 = vmatprep.mubr.f32.mxu0 0.0
        %2561 = vmatmul.mubr.f32.gmra.mxu0 %v1665
        %v2562 = vpop.f32.mrf.mxu0
        %v2563 = vadd.f32 %v1295, %v2562
        %v2564 = vpop.f32.mrf.mxu0
        %2565 = vmatprep.mubr.f32.mxu0 0.0
        %2566 = vmatmul.mubr.f32.gmra.mxu0 %v1668
        %v2567 = vpop.f32.mrf.mxu0
        %v2568 = vadd.f32 %v1295, %v2567
        %v2569 = vpop.f32.mrf.mxu0
        %2570 = vmatprep.mubr.f32.mxu0 0.0
        %2571 = vmatmul.mubr.f32.gmra.mxu0 %v1671
        %v2572 = vpop.f32.mrf.mxu0
        %v2573 = vadd.f32 %v1295, %v2572
        %v2574 = vpop.f32.mrf.mxu0
        %2575 = vmatprep.mubr.f32.mxu0 0.0
        %2576 = vmatmul.mubr.f32.gmra.mxu0 %v1674
        %v2577 = vpop.f32.mrf.mxu0
        %v2578 = vadd.f32 %v1295, %v2577
        %v2579 = vpop.f32.mrf.mxu0
        %2580 = vmatprep.mubr.f32.mxu0 0.0
        %2581 = vmatmul.mubr.f32.gmra.mxu0 %v1677
        %v2582 = vpop.f32.mrf.mxu0
        %v2583 = vadd.f32 %v1295, %v2582
        %v2584 = vpop.f32.mrf.mxu0
        %2585 = vmatprep.mubr.f32.mxu0 0.0
        %2586 = vmatmul.mubr.f32.gmra.mxu0 %v1680
        %v2587 = vpop.f32.mrf.mxu0
        %v2588 = vadd.f32 %v1295, %v2587
        %v2589 = vpop.f32.mrf.mxu0
        %2590 = vmatprep.mubr.f32.mxu0 0.0
        %2591 = vmatmul.mubr.f32.gmra.mxu0 %v1683
        %v2592 = vpop.f32.mrf.mxu0
        %v2593 = vadd.f32 %v1295, %v2592
        %v2594 = vpop.f32.mrf.mxu0
        %2595 = vmatprep.mubr.f32.mxu0 0.0
        %2596 = vmatmul.mubr.f32.gmra.mxu0 %v1686
        %v2597 = vpop.f32.mrf.mxu0
        %v2598 = vadd.f32 %v1295, %v2597
        %v2599 = vpop.f32.mrf.mxu0
        %2600 = vmatprep.mubr.f32.mxu0 0.0
        %2601 = vmatmul.mubr.f32.gmra.mxu0 %v1689
        %v2602 = vpop.f32.mrf.mxu0
        %v2603 = vadd.f32 %v1295, %v2602
        %v2604 = vpop.f32.mrf.mxu0
        %2605 = vmatprep.mubr.f32.mxu0 0.0
        %2606 = vmatmul.mubr.f32.gmra.mxu0 %v1692
        %v2607 = vpop.f32.mrf.mxu0
        %v2608 = vadd.f32 %v1295, %v2607
        %v2609 = vpop.f32.mrf.mxu0
        %2610 = vmatprep.mubr.f32.mxu0 0.0
        %2611 = vmatmul.mubr.f32.gmra.mxu0 %v1695
        %v2612 = vpop.f32.mrf.mxu0
        %v2613 = vadd.f32 %v1295, %v2612
        %v2614 = vpop.f32.mrf.mxu0
        %2615 = vmatprep.mubr.f32.mxu0 0.0
        %2616 = vmatmul.mubr.f32.gmra.mxu0 %v1698
        %v2617 = vpop.f32.mrf.mxu0
        %v2618 = vadd.f32 %v1295, %v2617
        %v2619 = vpop.f32.mrf.mxu0
        %2620 = vmatprep.mubr.f32.mxu0 0.0
        %2621 = vmatmul.mubr.f32.gmra.mxu0 %v1701
        %v2622 = vpop.f32.mrf.mxu0
        %v2623 = vadd.f32 %v1295, %v2622
        %v2624 = vpop.f32.mrf.mxu0
        %2625 = vmatprep.mubr.f32.mxu0 0.0
        %2626 = vmatmul.mubr.f32.gmra.mxu0 %v1704
        %v2627 = vpop.f32.mrf.mxu0
        %v2628 = vadd.f32 %v1295, %v2627
        %v2629 = vpop.f32.mrf.mxu0
        %2630 = vmatprep.mubr.f32.mxu0 0.0
        %2631 = vmatmul.mubr.f32.gmra.mxu0 %v1707
        %v2632 = vpop.f32.mrf.mxu0
        %v2633 = vadd.f32 %v1295, %v2632
        %v2634 = vpop.f32.mrf.mxu0
        %2635 = vmatprep.mubr.f32.mxu0 0.0
        %2636 = vmatmul.mubr.f32.gmra.mxu0 %v1710
        %v2637 = vpop.f32.mrf.mxu0
        %v2638 = vadd.f32 %v1295, %v2637
        %v2639 = vpop.f32.mrf.mxu0
        %2640 = vmatprep.mubr.f32.mxu0 0.0
        %2641 = vmatmul.mubr.f32.gmra.mxu0 %v1713
        %v2642 = vpop.f32.mrf.mxu0
        %v2643 = vadd.f32 %v1295, %v2642
        %v2644 = vpop.f32.mrf.mxu0
        %2645 = vmatprep.mubr.f32.mxu0 0.0
        %2646 = vmatmul.mubr.f32.gmra.mxu0 %v1716
        %v2647 = vpop.f32.mrf.mxu0
        %v2648 = vadd.f32 %v1295, %v2647
        %v2649 = vpop.f32.mrf.mxu0
        %2650 = vmatprep.mubr.f32.mxu0 0.0
        %2651 = vmatmul.mubr.f32.gmra.mxu0 %v1719
        %v2652 = vpop.f32.mrf.mxu0
        %v2653 = vadd.f32 %v1295, %v2652
        %v2654 = vpop.f32.mrf.mxu0
        %2655 = vmatprep.mubr.f32.mxu0 0.0
        %2656 = vmatmul.mubr.f32.gmra.mxu0 %v1722
        %v2657 = vpop.f32.mrf.mxu0
        %v2658 = vadd.f32 %v1295, %v2657
        %v2659 = vpop.f32.mrf.mxu0
        %2660 = vmatprep.mubr.f32.mxu0 0.0
        %2661 = vmatmul.mubr.f32.gmra.mxu0 %v1725
        %v2662 = vpop.f32.mrf.mxu0
        %v2663 = vadd.f32 %v1295, %v2662
        %v2664 = vpop.f32.mrf.mxu0
        %2665 = vmatprep.mubr.f32.mxu0 0.0
        %2666 = vmatmul.mubr.f32.gmra.mxu0 %v1728
        %v2667 = vpop.f32.mrf.mxu0
        %v2668 = vadd.f32 %v1295, %v2667
        %v2669 = vpop.f32.mrf.mxu0
        %2670 = vmatprep.mubr.f32.mxu0 0.0
        %2671 = vmatmul.mubr.f32.gmra.mxu0 %v1731
        %v2672 = vpop.f32.mrf.mxu0
        %v2673 = vadd.f32 %v1295, %v2672
        %v2674 = vpop.f32.mrf.mxu0
        %2675 = vmatprep.mubr.f32.mxu0 0.0
        %2676 = vmatmul.mubr.f32.gmra.mxu0 %v1734
        %v2677 = vpop.f32.mrf.mxu0
        %v2678 = vadd.f32 %v1295, %v2677
        %v2679 = vpop.f32.mrf.mxu0
        %2680 = vmatprep.mubr.f32.mxu0 0.0
        %2681 = vmatmul.mubr.f32.gmra.mxu0 %v1737
        %v2682 = vpop.f32.mrf.mxu0
        %v2683 = vadd.f32 %v1295, %v2682
        %v2684 = vpop.f32.mrf.mxu0
        %2685 = vmatprep.mubr.f32.mxu0 0.0
        %2686 = vmatmul.mubr.f32.gmra.mxu0 %v1740
        %v2687 = vpop.f32.mrf.mxu0
        %v2688 = vadd.f32 %v1295, %v2687
        %v2689 = vpop.f32.mrf.mxu0
        %2690 = vmatprep.mubr.f32.mxu0 0.0
        %2691 = vmatmul.mubr.f32.gmra.mxu0 %v1743
        %v2692 = vpop.f32.mrf.mxu0
        %v2693 = vadd.f32 %v1295, %v2692
        %v2694 = vpop.f32.mrf.mxu0
        %2695 = vmatprep.mubr.f32.mxu0 0.0
        %2696 = vmatmul.mubr.f32.gmra.mxu0 %v1746
        %v2697 = vpop.f32.mrf.mxu0
        %v2698 = vadd.f32 %v1295, %v2697
        %v2699 = vpop.f32.mrf.mxu0
        %2700 = vmatprep.mubr.f32.mxu0 0.0
        %2701 = vmatmul.mubr.f32.gmra.mxu0 %v1749
        %v2702 = vpop.f32.mrf.mxu0
        %v2703 = vadd.f32 %v1295, %v2702
        %v2704 = vpop.f32.mrf.mxu0
        %2705 = vmatprep.mubr.f32.mxu0 0.0
        %2706 = vmatmul.mubr.f32.gmra.mxu0 %v1752
        %v2707 = vpop.f32.mrf.mxu0
        %v2708 = vadd.f32 %v1295, %v2707
        %v2709 = vpop.f32.mrf.mxu0
        %2710 = vmatprep.mubr.f32.mxu0 0.0
        %2711 = vmatmul.mubr.f32.gmra.mxu0 %v1755
        %v2712 = vpop.f32.mrf.mxu0
        %v2713 = vadd.f32 %v1295, %v2712
        %v2714 = vpop.f32.mrf.mxu0
        %2715 = vmatprep.mubr.f32.mxu0 0.0
        %2716 = vmatmul.mubr.f32.gmra.mxu0 %v1758
        %v2717 = vpop.f32.mrf.mxu0
        %v2718 = vadd.f32 %v1295, %v2717
        %v2719 = vpop.f32.mrf.mxu0
        %2720 = vmatprep.mubr.f32.mxu0 0.0
        %2721 = vmatmul.mubr.f32.gmra.mxu0 %v1761
        %v2722 = vpop.f32.mrf.mxu0
        %v2723 = vadd.f32 %v1295, %v2722
        %v2724 = vpop.f32.mrf.mxu0
        %2725 = vmatprep.mubr.f32.mxu0 0.0
        %2726 = vmatmul.mubr.f32.gmra.mxu0 %v1764
        %v2727 = vpop.f32.mrf.mxu0
        %v2728 = vadd.f32 %v1295, %v2727
        %v2729 = vpop.f32.mrf.mxu0
        %2730 = vmatprep.mubr.f32.mxu0 0.0
        %2731 = vmatmul.mubr.f32.gmra.mxu0 %v1767
        %v2732 = vpop.f32.mrf.mxu0
        %v2733 = vadd.f32 %v1295, %v2732
        %v2734 = vpop.f32.mrf.mxu0
        %2735 = vmatprep.mubr.f32.mxu0 0.0
        %2736 = vmatmul.mubr.f32.gmra.mxu0 %v1770
        %v2737 = vpop.f32.mrf.mxu0
        %v2738 = vadd.f32 %v1295, %v2737
        %v2739 = vpop.f32.mrf.mxu0
        %2740 = vmatprep.mubr.f32.mxu0 0.0
        %2741 = vmatmul.mubr.f32.gmra.mxu0 %v1773
        %v2742 = vpop.f32.mrf.mxu0
        %v2743 = vadd.f32 %v1295, %v2742
        %v2744 = vpop.f32.mrf.mxu0
        %2745 = vmatprep.mubr.f32.mxu0 0.0
        %2746 = vmatmul.mubr.f32.gmra.mxu0 %v1776
        %v2747 = vpop.f32.mrf.mxu0
        %v2748 = vadd.f32 %v1295, %v2747
        %v2749 = vpop.f32.mrf.mxu0
        %2750 = vmatprep.mubr.f32.mxu0 0.0
        %2751 = vmatmul.mubr.f32.gmra.mxu0 %v1779
        %v2752 = vpop.f32.mrf.mxu0
        %v2753 = vadd.f32 %v1295, %v2752
        %v2754 = vpop.f32.mrf.mxu0
        %2755 = vmatprep.mubr.f32.mxu0 0.0
        %2756 = vmatmul.mubr.f32.gmra.mxu0 %v1782
        %v2757 = vpop.f32.mrf.mxu0
        %v2758 = vadd.f32 %v1295, %v2757
        %v2759 = vpop.f32.mrf.mxu0
        %2760 = vmatprep.mubr.f32.mxu0 0.0
        %2761 = vmatmul.mubr.f32.gmra.mxu0 %v1785
        %v2762 = vpop.f32.mrf.mxu0
        %v2763 = vadd.f32 %v1295, %v2762
        %v2764 = vpop.f32.mrf.mxu0
        %2765 = vmatprep.mubr.f32.mxu0 0.0
        %2766 = vmatmul.mubr.f32.gmra.mxu0 %v1788
        %v2767 = vpop.f32.mrf.mxu0
        %v2768 = vadd.f32 %v1295, %v2767
        %v2769 = vpop.f32.mrf.mxu0
        %2770 = vmatprep.mubr.f32.mxu0 0.0
        %2771 = vmatmul.mubr.f32.gmra.mxu0 %v1791
        %v2772 = vpop.f32.mrf.mxu0
        %v2773 = vadd.f32 %v1295, %v2772
        %v2774 = vpop.f32.mrf.mxu0
        %2775 = vmatprep.mubr.f32.mxu0 0.0
        %2776 = vmatmul.mubr.f32.gmra.mxu0 %v1794
        %v2777 = vpop.f32.mrf.mxu0
        %v2778 = vadd.f32 %v1295, %v2777
        %v2779 = vpop.f32.mrf.mxu0
        %2780 = vmatprep.mubr.f32.mxu0 0.0
        %2781 = vmatmul.mubr.f32.gmra.mxu0 %v1797
        %v2782 = vpop.f32.mrf.mxu0
        %v2783 = vadd.f32 %v1295, %v2782
        %v2784 = vpop.f32.mrf.mxu0
        %2785 = vmatprep.mubr.f32.mxu0 0.0
        %2786 = vmatmul.mubr.f32.gmra.mxu0 %v1800
        %v2787 = vpop.f32.mrf.mxu0
        %v2788 = vadd.f32 %v1295, %v2787
        %v2789 = vpop.f32.mrf.mxu0
        %2790 = vmatprep.mubr.f32.mxu0 0.0
        %2791 = vmatmul.mubr.f32.gmra.mxu0 %v1803
        %v2792 = vpop.f32.mrf.mxu0
        %v2793 = vadd.f32 %v1295, %v2792
        %v2794 = vpop.f32.mrf.mxu0
        %2795 = vmatprep.mubr.f32.mxu0 0.0
        %2796 = vmatmul.mubr.f32.gmra.mxu0 %v1806
        %v2797 = vpop.f32.mrf.mxu0
        %v2798 = vadd.f32 %v1295, %v2797
        %v2799 = vpop.f32.mrf.mxu0
        %2800 = vmatprep.mubr.f32.mxu0 0.0
        %2801 = vmatmul.mubr.f32.gmra.mxu0 %v1809
        %v2802 = vpop.f32.mrf.mxu0
        %v2803 = vadd.f32 %v1295, %v2802
        %v2804 = vpop.f32.mrf.mxu0
        %2805 = vmatprep.mubr.f32.mxu0 0.0
        %2806 = vmatmul.mubr.f32.gmra.mxu0 %v1812
        %v2807 = vpop.f32.mrf.mxu0
        %v2808 = vadd.f32 %v1295, %v2807
        %v2809 = vpop.f32.mrf.mxu0
        %2810 = vmatprep.mubr.f32.mxu0 0.0
        %2811 = vmatmul.mubr.f32.gmra.mxu0 %v1815
        %v2812 = vpop.f32.mrf.mxu0
        %v2813 = vadd.f32 %v1295, %v2812
        %v2814 = vpop.f32.mrf.mxu0
        %2815 = vmatprep.mubr.f32.mxu0 0.0
        %2816 = vmatmul.mubr.f32.gmra.mxu0 %v1818
        %v2817 = vpop.f32.mrf.mxu0
        %v2818 = vadd.f32 %v1295, %v2817
        %v2819 = vpop.f32.mrf.mxu0
        %2820 = vmatprep.mubr.f32.mxu0 0.0
        %2821 = vmatmul.mubr.f32.gmra.mxu0 %v1821
        %v2822 = vpop.f32.mrf.mxu0
        %v2823 = vadd.f32 %v1295, %v2822
        %v2824 = vpop.f32.mrf.mxu0
        %2825 = vmatprep.mubr.f32.mxu0 0.0
        %2826 = vmatmul.mubr.f32.gmra.mxu0 %v1824
        %v2827 = vpop.f32.mrf.mxu0
        %v2828 = vadd.f32 %v1295, %v2827
        %v2829 = vpop.f32.mrf.mxu0
        %2830 = vmatprep.mubr.f32.mxu0 0.0
        %2831 = vmatmul.mubr.f32.gmra.mxu0 %v1827
        %v2832 = vpop.f32.mrf.mxu0
        %v2833 = vadd.f32 %v1295, %v2832
        %v2834 = vpop.f32.mrf.mxu0
        %2835 = vmatprep.mubr.f32.mxu0 0.0
        %2836 = vmatmul.mubr.f32.gmra.mxu0 %v1830
        %v2837 = vpop.f32.mrf.mxu0
        %v2838 = vadd.f32 %v1295, %v2837
        %v2839 = vpop.f32.mrf.mxu0
        %2840 = vmatprep.mubr.f32.mxu0 0.0
        %2841 = vmatmul.mubr.f32.gmra.mxu0 %v1833
        %v2842 = vpop.f32.mrf.mxu0
        %v2843 = vadd.f32 %v1295, %v2842
        %v2844 = vpop.f32.mrf.mxu0
        %2845 = vmatprep.mubr.f32.mxu0 0.0
        %2846 = vmatmul.mubr.f32.gmra.mxu0 %v1836
        %v2847 = vpop.f32.mrf.mxu0
        %v2848 = vadd.f32 %v1295, %v2847
        %v2849 = vpop.f32.mrf.mxu0
        %2850 = vmatprep.mubr.f32.mxu0 0.0
        %2851 = vmatmul.mubr.f32.gmra.mxu0 %v1839
        %v2852 = vpop.f32.mrf.mxu0
        %v2853 = vadd.f32 %v1295, %v2852
        %v2854 = vpop.f32.mrf.mxu0
        %2855 = vmatprep.mubr.f32.mxu0 0.0
        %2856 = vmatmul.mubr.f32.gmra.mxu0 %v1842
        %v2857 = vpop.f32.mrf.mxu0
        %v2858 = vadd.f32 %v1295, %v2857
        %v2859 = vpop.f32.mrf.mxu0
        %2860 = vmatprep.mubr.f32.mxu0 0.0
        %2861 = vmatmul.mubr.f32.gmra.mxu0 %v1845
        %v2862 = vpop.f32.mrf.mxu0
        %v2863 = vadd.f32 %v1295, %v2862
        %v2864 = vpop.f32.mrf.mxu0
        %2865 = vmatprep.mubr.f32.mxu0 0.0
        %2866 = vmatmul.mubr.f32.gmra.mxu0 %v1848
        %v2867 = vpop.f32.mrf.mxu0
        %v2868 = vadd.f32 %v1295, %v2867
        %v2869 = vpop.f32.mrf.mxu0
        %2870 = vmatprep.mubr.f32.mxu0 0.0
        %2871 = vmatmul.mubr.f32.gmra.mxu0 %v1851
        %v2872 = vpop.f32.mrf.mxu0
        %v2873 = vadd.f32 %v1295, %v2872
        %v2874 = vpop.f32.mrf.mxu0
        %2875 = vmatprep.mubr.f32.mxu0 0.0
        %2876 = vmatmul.mubr.f32.gmra.mxu0 %v1854
        %v2877 = vpop.f32.mrf.mxu0
        %v2878 = vadd.f32 %v1295, %v2877
        %v2879 = vpop.f32.mrf.mxu0
        %2880 = vmatprep.mubr.f32.mxu0 0.0
        %2881 = vmatmul.mubr.f32.gmra.mxu0 %v1857
        %v2882 = vpop.f32.mrf.mxu0
        %v2883 = vadd.f32 %v1295, %v2882
        %v2884 = vpop.f32.mrf.mxu0
        %2885 = vmatprep.mubr.f32.mxu0 0.0
        %2886 = vmatmul.mubr.f32.gmra.mxu0 %v1860
        %v2887 = vpop.f32.mrf.mxu0
        %v2888 = vadd.f32 %v1295, %v2887
        %v2889 = vpop.f32.mrf.mxu0
        %2890 = vmatprep.mubr.f32.mxu0 0.0
        %2891 = vmatmul.mubr.f32.gmra.mxu0 %v1863
        %v2892 = vpop.f32.mrf.mxu0
        %v2893 = vadd.f32 %v1295, %v2892
        %v2894 = vpop.f32.mrf.mxu0
        %2895 = vmatprep.mubr.f32.mxu0 0.0
        %2896 = vmatmul.mubr.f32.gmra.mxu0 %v1866
        %v2897 = vpop.f32.mrf.mxu0
        %v2898 = vadd.f32 %v1295, %v2897
        %v2899 = vpop.f32.mrf.mxu0
        %2900 = vmatprep.mubr.f32.mxu0 0.0
        %2901 = vmatmul.mubr.f32.gmra.mxu0 %v1869
        %v2902 = vpop.f32.mrf.mxu0
        %v2903 = vadd.f32 %v1295, %v2902
        %v2904 = vpop.f32.mrf.mxu0
        %2905 = vmatprep.mubr.f32.mxu0 0.0
        %2906 = vmatmul.mubr.f32.gmra.mxu0 %v1872
        %v2907 = vpop.f32.mrf.mxu0
        %v2908 = vadd.f32 %v1295, %v2907
        %v2909 = vpop.f32.mrf.mxu0
        %2910 = vmatprep.mubr.f32.mxu0 0.0
        %2911 = vmatmul.mubr.f32.gmra.mxu0 %v1875
        %v2912 = vpop.f32.mrf.mxu0
        %v2913 = vadd.f32 %v1295, %v2912
        %v2914 = vpop.f32.mrf.mxu0
        %2915 = vmatprep.mubr.f32.mxu0 0.0
        %2916 = vmatmul.mubr.f32.gmra.mxu0 %v1878
        %v2917 = vpop.f32.mrf.mxu0
        %v2918 = vadd.f32 %v1295, %v2917
        %v2919 = vpop.f32.mrf.mxu0
        %2920 = vmatprep.mubr.f32.mxu0 0.0
        %2921 = vmatmul.mubr.f32.gmra.mxu0 %v1881
        %v2922 = vpop.f32.mrf.mxu0
        %v2923 = vadd.f32 %v1295, %v2922
        %v2924 = vpop.f32.mrf.mxu0
        %2925 = vmatprep.mubr.f32.mxu0 0.0
        %2926 = vmatmul.mubr.f32.gmra.mxu0 %v1884
        %v2927 = vpop.f32.mrf.mxu0
        %v2928 = vadd.f32 %v1295, %v2927
        %v2929 = vpop.f32.mrf.mxu0
        %2930 = vdwg.mxu0
        %v2931 = vmax.f32 %v1953, 0.0
        %v2932 = vmax.f32 %v1958, 0.0
        %v2933 = vmax.f32 %v1963, 0.0
        %v2934 = vmax.f32 %v1968, 0.0
        %v2935 = vmax.f32 %v1973, 0.0
        %v2936 = vmax.f32 %v1978, 0.0
        %v2937 = vmax.f32 %v1983, 0.0
        %v2938 = vmax.f32 %v1988, 0.0
        %v2939 = vmax.f32 %v1993, 0.0
        %v2940 = vmax.f32 %v1998, 0.0
        %v2941 = vmax.f32 %v2003, 0.0
        %v2942 = vmax.f32 %v2008, 0.0
        %v2943 = vmax.f32 %v2013, 0.0
        %v2944 = vmax.f32 %v2018, 0.0
        %v2945 = vmax.f32 %v2023, 0.0
        %v2946 = vmax.f32 %v2028, 0.0
        %v2947 = vmax.f32 %v2033, 0.0
        %v2948 = vmax.f32 %v2038, 0.0
        %v2949 = vmax.f32 %v2043, 0.0
        %v2950 = vmax.f32 %v2048, 0.0
        %v2951 = vmax.f32 %v2053, 0.0
        %v2952 = vmax.f32 %v2058, 0.0
        %v2953 = vmax.f32 %v2063, 0.0
        %v2954 = vmax.f32 %v2068, 0.0
        %v2955 = vmax.f32 %v2073, 0.0
        %v2956 = vmax.f32 %v2078, 0.0
        %v2957 = vmax.f32 %v2083, 0.0
        %v2958 = vmax.f32 %v2088, 0.0
        %v2959 = vmax.f32 %v2093, 0.0
        %v2960 = vmax.f32 %v2098, 0.0
        %v2961 = vmax.f32 %v2103, 0.0
        %v2962 = vmax.f32 %v2108, 0.0
        %v2963 = vmax.f32 %v2113, 0.0
        %v2964 = vmax.f32 %v2118, 0.0
        %v2965 = vmax.f32 %v2123, 0.0
        %v2966 = vmax.f32 %v2128, 0.0
        %v2967 = vmax.f32 %v2133, 0.0
        %v2968 = vmax.f32 %v2138, 0.0
        %v2969 = vmax.f32 %v2143, 0.0
        %v2970 = vmax.f32 %v2148, 0.0
        %v2971 = vmax.f32 %v2153, 0.0
        %v2972 = vmax.f32 %v2158, 0.0
        %v2973 = vmax.f32 %v2163, 0.0
        %v2974 = vmax.f32 %v2168, 0.0
        %v2975 = vmax.f32 %v2173, 0.0
        %v2976 = vmax.f32 %v2178, 0.0
        %v2977 = vmax.f32 %v2183, 0.0
        %v2978 = vmax.f32 %v2188, 0.0
        %v2979 = vmax.f32 %v2193, 0.0
        %v2980 = vmax.f32 %v2198, 0.0
        %v2981 = vmax.f32 %v2203, 0.0
        %v2982 = vmax.f32 %v2208, 0.0
        %v2983 = vmax.f32 %v2213, 0.0
        %v2984 = vmax.f32 %v2218, 0.0
        %v2985 = vmax.f32 %v2223, 0.0
        %v2986 = vmax.f32 %v2228, 0.0
        %v2987 = vmax.f32 %v2233, 0.0
        %v2988 = vmax.f32 %v2238, 0.0
        %v2989 = vmax.f32 %v2243, 0.0
        %v2990 = vmax.f32 %v2248, 0.0
        %v2991 = vmax.f32 %v2253, 0.0
        %v2992 = vmax.f32 %v2258, 0.0
        %v2993 = vmax.f32 %v2263, 0.0
        %v2994 = vmax.f32 %v2268, 0.0
        %v2995 = vmax.f32 %v2273, 0.0
        %v2996 = vmax.f32 %v2278, 0.0
        %v2997 = vmax.f32 %v2283, 0.0
        %v2998 = vmax.f32 %v2288, 0.0
        %v2999 = vmax.f32 %v2293, 0.0
        %v3000 = vmax.f32 %v2298, 0.0
        %v3001 = vmax.f32 %v2303, 0.0
        %v3002 = vmax.f32 %v2308, 0.0
        %v3003 = vmax.f32 %v2313, 0.0
        %v3004 = vmax.f32 %v2318, 0.0
        %v3005 = vmax.f32 %v2323, 0.0
        %v3006 = vmax.f32 %v2328, 0.0
        %v3007 = vmax.f32 %v2333, 0.0
        %v3008 = vmax.f32 %v2338, 0.0
        %v3009 = vmax.f32 %v2343, 0.0
        %v3010 = vmax.f32 %v2348, 0.0
        %v3011 = vmax.f32 %v2353, 0.0
        %v3012 = vmax.f32 %v2358, 0.0
        %v3013 = vmax.f32 %v2363, 0.0
        %v3014 = vmax.f32 %v2368, 0.0
        %v3015 = vmax.f32 %v2373, 0.0
        %v3016 = vmax.f32 %v2378, 0.0
        %v3017 = vmax.f32 %v2383, 0.0
        %v3018 = vmax.f32 %v2388, 0.0
        %v3019 = vmax.f32 %v2393, 0.0
        %v3020 = vmax.f32 %v2398, 0.0
        %v3021 = vmax.f32 %v2403, 0.0
        %v3022 = vmax.f32 %v2408, 0.0
        %v3023 = vmax.f32 %v2413, 0.0
        %v3024 = vmax.f32 %v2418, 0.0
        %v3025 = vmax.f32 %v2423, 0.0
        %v3026 = vmax.f32 %v2428, 0.0
        %v3027 = vmax.f32 %v2433, 0.0
        %v3028 = vmax.f32 %v2438, 0.0
        %v3029 = vmax.f32 %v2443, 0.0
        %v3030 = vmax.f32 %v2448, 0.0
        %v3031 = vmax.f32 %v2453, 0.0
        %v3032 = vmax.f32 %v2458, 0.0
        %v3033 = vmax.f32 %v2463, 0.0
        %v3034 = vmax.f32 %v2468, 0.0
        %v3035 = vmax.f32 %v2473, 0.0
        %v3036 = vmax.f32 %v2478, 0.0
        %v3037 = vmax.f32 %v2483, 0.0
        %v3038 = vmax.f32 %v2488, 0.0
        %v3039 = vmax.f32 %v2493, 0.0
        %v3040 = vmax.f32 %v2498, 0.0
        %v3041 = vmax.f32 %v2503, 0.0
        %v3042 = vmax.f32 %v2508, 0.0
        %v3043 = vmax.f32 %v2513, 0.0
        %v3044 = vmax.f32 %v2518, 0.0
        %v3045 = vmax.f32 %v2523, 0.0
        %v3046 = vmax.f32 %v2528, 0.0
        %v3047 = vmax.f32 %v2533, 0.0
        %v3048 = vmax.f32 %v2538, 0.0
        %v3049 = vmax.f32 %v2543, 0.0
        %v3050 = vmax.f32 %v2548, 0.0
        %v3051 = vmax.f32 %v2553, 0.0
        %v3052 = vmax.f32 %v2558, 0.0
        %v3053 = vmax.f32 %v2563, 0.0
        %v3054 = vmax.f32 %v2568, 0.0
        %v3055 = vmax.f32 %v2573, 0.0
        %v3056 = vmax.f32 %v2578, 0.0
        %v3057 = vmax.f32 %v2583, 0.0
        %v3058 = vmax.f32 %v2588, 0.0
        %v3059 = vmax.f32 %v2593, 0.0
        %v3060 = vmax.f32 %v2598, 0.0
        %v3061 = vmax.f32 %v2603, 0.0
        %v3062 = vmax.f32 %v2608, 0.0
        %v3063 = vmax.f32 %v2613, 0.0
        %v3064 = vmax.f32 %v2618, 0.0
        %v3065 = vmax.f32 %v2623, 0.0
        %v3066 = vmax.f32 %v2628, 0.0
        %v3067 = vmax.f32 %v2633, 0.0
        %v3068 = vmax.f32 %v2638, 0.0
        %v3069 = vmax.f32 %v2643, 0.0
        %v3070 = vmax.f32 %v2648, 0.0
        %v3071 = vmax.f32 %v2653, 0.0
        %v3072 = vmax.f32 %v2658, 0.0
        %v3073 = vmax.f32 %v2663, 0.0
        %v3074 = vmax.f32 %v2668, 0.0
        %v3075 = vmax.f32 %v2673, 0.0
        %v3076 = vmax.f32 %v2678, 0.0
        %v3077 = vmax.f32 %v2683, 0.0
        %v3078 = vmax.f32 %v2688, 0.0
        %v3079 = vmax.f32 %v2693, 0.0
        %v3080 = vmax.f32 %v2698, 0.0
        %v3081 = vmax.f32 %v2703, 0.0
        %v3082 = vmax.f32 %v2708, 0.0
        %v3083 = vmax.f32 %v2713, 0.0
        %v3084 = vmax.f32 %v2718, 0.0
        %v3085 = vmax.f32 %v2723, 0.0
        %v3086 = vmax.f32 %v2728, 0.0
        %v3087 = vmax.f32 %v2733, 0.0
        %v3088 = vmax.f32 %v2738, 0.0
        %v3089 = vmax.f32 %v2743, 0.0
        %v3090 = vmax.f32 %v2748, 0.0
        %v3091 = vmax.f32 %v2753, 0.0
        %v3092 = vmax.f32 %v2758, 0.0
        %v3093 = vmax.f32 %v2763, 0.0
        %v3094 = vmax.f32 %v2768, 0.0
        %v3095 = vmax.f32 %v2773, 0.0
        %v3096 = vmax.f32 %v2778, 0.0
        %v3097 = vmax.f32 %v2783, 0.0
        %v3098 = vmax.f32 %v2788, 0.0
        %v3099 = vmax.f32 %v2793, 0.0
        %v3100 = vmax.f32 %v2798, 0.0
        %v3101 = vmax.f32 %v2803, 0.0
        %v3102 = vmax.f32 %v2808, 0.0
        %v3103 = vmax.f32 %v2813, 0.0
        %v3104 = vmax.f32 %v2818, 0.0
        %v3105 = vmax.f32 %v2823, 0.0
        %v3106 = vmax.f32 %v2828, 0.0
        %v3107 = vmax.f32 %v2833, 0.0
        %v3108 = vmax.f32 %v2838, 0.0
        %v3109 = vmax.f32 %v2843, 0.0
        %v3110 = vmax.f32 %v2848, 0.0
        %v3111 = vmax.f32 %v2853, 0.0
        %v3112 = vmax.f32 %v2858, 0.0
        %v3113 = vmax.f32 %v2863, 0.0
        %v3114 = vmax.f32 %v2868, 0.0
        %v3115 = vmax.f32 %v2873, 0.0
        %v3116 = vmax.f32 %v2878, 0.0
        %v3117 = vmax.f32 %v2883, 0.0
        %v3118 = vmax.f32 %v2888, 0.0
        %v3119 = vmax.f32 %v2893, 0.0
        %v3120 = vmax.f32 %v2898, 0.0
        %v3121 = vmax.f32 %v2903, 0.0
        %v3122 = vmax.f32 %v2908, 0.0
        %v3123 = vmax.f32 %v2913, 0.0
        %v3124 = vmax.f32 %v2918, 0.0
        %v3125 = vmax.f32 %v2923, 0.0
        %v3126 = vmax.f32 %v2928, 0.0
        %v3127 = vmax.f32 %v2931, %v2945
        %v3128 = vmax.f32 %v2932, %v2946
        %v3129 = vmax.f32 %v2933, %v2947
        %v3130 = vmax.f32 %v2934, %v2948
        %v3131 = vmax.f32 %v2935, %v2949
        %v3132 = vmax.f32 %v2936, %v2950
        %v3133 = vmax.f32 %v2937, %v2951
        %v3134 = vmax.f32 %v2938, %v2952
        %v3135 = vmax.f32 %v2939, %v2953
        %v3136 = vmax.f32 %v2940, %v2954
        %v3137 = vmax.f32 %v2941, %v2955
        %v3138 = vmax.f32 %v2942, %v2956
        %v3139 = vmax.f32 %v2943, %v2957
        %v3140 = vmax.f32 %v2944, %v2958
        %v3141 = vmax.f32 %v2959, %v2973
        %v3142 = vmax.f32 %v2960, %v2974
        %v3143 = vmax.f32 %v2961, %v2975
        %v3144 = vmax.f32 %v2962, %v2976
        %v3145 = vmax.f32 %v2963, %v2977
        %v3146 = vmax.f32 %v2964, %v2978
        %v3147 = vmax.f32 %v2965, %v2979
        %v3148 = vmax.f32 %v2966, %v2980
        %v3149 = vmax.f32 %v2967, %v2981
        %v3150 = vmax.f32 %v2968, %v2982
        %v3151 = vmax.f32 %v2969, %v2983
        %v3152 = vmax.f32 %v2970, %v2984
        %v3153 = vmax.f32 %v2971, %v2985
        %v3154 = vmax.f32 %v2972, %v2986
        %v3155 = vmax.f32 %v2987, %v3001
        %v3156 = vmax.f32 %v2988, %v3002
        %v3157 = vmax.f32 %v2989, %v3003
        %v3158 = vmax.f32 %v2990, %v3004
        %v3159 = vmax.f32 %v2991, %v3005
        %v3160 = vmax.f32 %v2992, %v3006
        %v3161 = vmax.f32 %v2993, %v3007
        %v3162 = vmax.f32 %v2994, %v3008
        %v3163 = vmax.f32 %v2995, %v3009
        %v3164 = vmax.f32 %v2996, %v3010
        %v3165 = vmax.f32 %v2997, %v3011
        %v3166 = vmax.f32 %v2998, %v3012
        %v3167 = vmax.f32 %v2999, %v3013
        %v3168 = vmax.f32 %v3000, %v3014
        %v3169 = vmax.f32 %v3015, %v3029
        %v3170 = vmax.f32 %v3016, %v3030
        %v3171 = vmax.f32 %v3017, %v3031
        %v3172 = vmax.f32 %v3018, %v3032
        %v3173 = vmax.f32 %v3019, %v3033
        %v3174 = vmax.f32 %v3020, %v3034
        %v3175 = vmax.f32 %v3021, %v3035
        %v3176 = vmax.f32 %v3022, %v3036
        %v3177 = vmax.f32 %v3023, %v3037
        %v3178 = vmax.f32 %v3024, %v3038
        %v3179 = vmax.f32 %v3025, %v3039
        %v3180 = vmax.f32 %v3026, %v3040
        %v3181 = vmax.f32 %v3027, %v3041
        %v3182 = vmax.f32 %v3028, %v3042
        %v3183 = vmax.f32 %v3043, %v3057
        %v3184 = vmax.f32 %v3044, %v3058
        %v3185 = vmax.f32 %v3045, %v3059
        %v3186 = vmax.f32 %v3046, %v3060
        %v3187 = vmax.f32 %v3047, %v3061
        %v3188 = vmax.f32 %v3048, %v3062
        %v3189 = vmax.f32 %v3049, %v3063
        %v3190 = vmax.f32 %v3050, %v3064
        %v3191 = vmax.f32 %v3051, %v3065
        %v3192 = vmax.f32 %v3052, %v3066
        %v3193 = vmax.f32 %v3053, %v3067
        %v3194 = vmax.f32 %v3054, %v3068
        %v3195 = vmax.f32 %v3055, %v3069
        %v3196 = vmax.f32 %v3056, %v3070
        %v3197 = vmax.f32 %v3071, %v3085
        %v3198 = vmax.f32 %v3072, %v3086
        %v3199 = vmax.f32 %v3073, %v3087
        %v3200 = vmax.f32 %v3074, %v3088
        %v3201 = vmax.f32 %v3075, %v3089
        %v3202 = vmax.f32 %v3076, %v3090
        %v3203 = vmax.f32 %v3077, %v3091
        %v3204 = vmax.f32 %v3078, %v3092
        %v3205 = vmax.f32 %v3079, %v3093
        %v3206 = vmax.f32 %v3080, %v3094
        %v3207 = vmax.f32 %v3081, %v3095
        %v3208 = vmax.f32 %v3082, %v3096
        %v3209 = vmax.f32 %v3083, %v3097
        %v3210 = vmax.f32 %v3084, %v3098
        %v3211 = vmax.f32 %v3099, %v3113
        %v3212 = vmax.f32 %v3100, %v3114
        %v3213 = vmax.f32 %v3101, %v3115
        %v3214 = vmax.f32 %v3102, %v3116
        %v3215 = vmax.f32 %v3103, %v3117
        %v3216 = vmax.f32 %v3104, %v3118
        %v3217 = vmax.f32 %v3105, %v3119
        %v3218 = vmax.f32 %v3106, %v3120
        %v3219 = vmax.f32 %v3107, %v3121
        %v3220 = vmax.f32 %v3108, %v3122
        %v3221 = vmax.f32 %v3109, %v3123
        %v3222 = vmax.f32 %v3110, %v3124
        %v3223 = vmax.f32 %v3111, %v3125
        %v3224 = vmax.f32 %v3112, %v3126
        %v3225 = vmax.f32 %v3127, %v3128
        %v3226 = vmax.f32 %v3129, %v3130
        %v3227 = vmax.f32 %v3131, %v3132
        %v3228 = vmax.f32 %v3133, %v3134
        %v3229 = vmax.f32 %v3135, %v3136
        %v3230 = vmax.f32 %v3137, %v3138
        %v3231 = vmax.f32 %v3139, %v3140
        %v3232 = vmax.f32 %v3141, %v3142
        %v3233 = vmax.f32 %v3143, %v3144
        %v3234 = vmax.f32 %v3145, %v3146
        %v3235 = vmax.f32 %v3147, %v3148
        %v3236 = vmax.f32 %v3149, %v3150
        %v3237 = vmax.f32 %v3151, %v3152
        %v3238 = vmax.f32 %v3153, %v3154
        %v3239 = vmax.f32 %v3155, %v3156
        %v3240 = vmax.f32 %v3157, %v3158
        %v3241 = vmax.f32 %v3159, %v3160
        %v3242 = vmax.f32 %v3161, %v3162
        %v3243 = vmax.f32 %v3163, %v3164
        %v3244 = vmax.f32 %v3165, %v3166
        %v3245 = vmax.f32 %v3167, %v3168
        %v3246 = vmax.f32 %v3169, %v3170
        %v3247 = vmax.f32 %v3171, %v3172
        %v3248 = vmax.f32 %v3173, %v3174
        %v3249 = vmax.f32 %v3175, %v3176
        %v3250 = vmax.f32 %v3177, %v3178
        %v3251 = vmax.f32 %v3179, %v3180
        %v3252 = vmax.f32 %v3181, %v3182
        %v3253 = vmax.f32 %v3183, %v3184
        %v3254 = vmax.f32 %v3185, %v3186
        %v3255 = vmax.f32 %v3187, %v3188
        %v3256 = vmax.f32 %v3189, %v3190
        %v3257 = vmax.f32 %v3191, %v3192
        %v3258 = vmax.f32 %v3193, %v3194
        %v3259 = vmax.f32 %v3195, %v3196
        %v3260 = vmax.f32 %v3197, %v3198
        %v3261 = vmax.f32 %v3199, %v3200
        %v3262 = vmax.f32 %v3201, %v3202
        %v3263 = vmax.f32 %v3203, %v3204
        %v3264 = vmax.f32 %v3205, %v3206
        %v3265 = vmax.f32 %v3207, %v3208
        %v3266 = vmax.f32 %v3209, %v3210
        %v3267 = vmax.f32 %v3211, %v3212
        %v3268 = vmax.f32 %v3213, %v3214
        %v3269 = vmax.f32 %v3215, %v3216
        %v3270 = vmax.f32 %v3217, %v3218
        %v3271 = vmax.f32 %v3219, %v3220
        %v3272 = vmax.f32 %v3221, %v3222
        %v3273 = vmax.f32 %v3223, %v3224
        %v3274 = vld [vmem:[%s4] sm:$0x1]
        %v3276 = vlaneseq
        %v3277 = vshrl.u32 %v3276, 7
        %v3278 = vsub.s32 0, %v3277
        %v3279 = vrot.slane %v3274, %v3278
        %v3281 = vld [vmem:[%s3] sm:$0xff]
        %v3282 = vld [vmem:[%s3 + $0x8] sm:$0xff]
        %v3283 = vld [vmem:[%s3 + $0x10] sm:$0xff]
        %v3284 = vld [vmem:[%s3 + $0x18] sm:$0xff]
        %vm3285 = vcmask 261120
        %v3287 = vsel %vm3285, %v3225, 0
        %v3290 = vsel %vm3285, %v3226, 0
        %v3293 = vsel %vm3285, %v3227, 0
        %v3296 = vsel %vm3285, %v3228, 0
        %v3299 = vsel %vm3285, %v3229, 0
        %v3302 = vsel %vm3285, %v3232, 0
        %v3305 = vsel %vm3285, %v3233, 0
        %v3308 = vsel %vm3285, %v3234, 0
        %v3311 = vsel %vm3285, %v3235, 0
        %v3314 = vsel %vm3285, %v3236, 0
        %v3317 = vsel %vm3285, %v3239, 0
        %v3320 = vsel %vm3285, %v3240, 0
        %v3323 = vsel %vm3285, %v3241, 0
        %v3326 = vsel %vm3285, %v3242, 0
        %v3329 = vsel %vm3285, %v3243, 0
        %v3332 = vsel %vm3285, %v3246, 0
        %v3335 = vsel %vm3285, %v3247, 0
        %v3338 = vsel %vm3285, %v3248, 0
        %v3341 = vsel %vm3285, %v3249, 0
        %v3344 = vsel %vm3285, %v3250, 0
        %v3347 = vsel %vm3285, %v3253, 0
        %v3350 = vsel %vm3285, %v3254, 0
        %v3353 = vsel %vm3285, %v3255, 0
        %v3356 = vsel %vm3285, %v3256, 0
        %v3359 = vsel %vm3285, %v3257, 0
        %3361 = vmatprep.subr.mxu0 0.0
        %3362 = vmatpush1.msra.mxu0 0.0
        %3363 = vmatprep.subr.mxu0 0.0
        %3364 = vmatpush1.msra.mxu0 0.0
        %3365 = vmatprep.subr.mxu0 0.0
        %3366 = vmatpush1.msra.mxu0 0.0
        %3367 = vmatprep.subr.mxu0 0.0
        %3368 = vmatpush1.msra.mxu0 0.0
        %3369 = vmatprep.subr.mxu0 0.0
        %3370 = vmatpush1.msra.mxu0 0.0
        %3371 = vmatprep.subr.mxu0 0.0
        %3372 = vmatpush1.msra.mxu0 0.0
        %3373 = vmatprep.subr.mxu0 0.0
        %3374 = vmatpush1.msra.mxu0 0.0
        %3375 = vmatprep.subr.mxu0 0.0
        %3376 = vmatpush1.msra.mxu0 0.0
        %3377 = vmatprep.subr.mxu0 0.0
        %3378 = vmatpush1.msra.mxu0 0.0
        %3379 = vmatprep.subr.mxu0 0.0
        %3380 = vmatpush1.msra.mxu0 0.0
        %3381 = vmatprep.subr.mxu0 0.0
        %3382 = vmatpush1.msra.mxu0 0.0
        %3383 = vmatprep.subr.mxu0 0.0
        %3384 = vmatpush1.msra.mxu0 0.0
        %3385 = vmatprep.subr.mxu0 0.0
        %3386 = vmatpush1.msra.mxu0 %v3284
        %3387 = vmatprep.subr.mxu0 0.0
        %3388 = vmatpush1.msra.mxu0 %v3283
        %3389 = vmatprep.subr.mxu0 0.0
        %3390 = vmatpush1.msra.mxu0 %v3282
        %3391 = vmatprep.subr.mxu0 0.0
        %3392 = vmatpush1.msra.mxu0 %v3281
        %3393 = vmatprep.subr.mxu0 0.0
        %3394 = vmatpush2.msra.mxu0 0.0
        %3395 = vmatprep.subr.mxu0 0.0
        %3396 = vmatpush2.msra.mxu0 0.0
        %3397 = vmatprep.subr.mxu0 0.0
        %3398 = vmatpush2.msra.mxu0 0.0
        %3399 = vmatprep.subr.mxu0 0.0
        %3400 = vmatpush2.msra.mxu0 0.0
        %3401 = vmatprep.subr.mxu0 0.0
        %3402 = vmatpush2.msra.mxu0 0.0
        %3403 = vmatprep.subr.mxu0 0.0
        %3404 = vmatpush2.msra.mxu0 0.0
        %3405 = vmatprep.subr.mxu0 0.0
        %3406 = vmatpush2.msra.mxu0 0.0
        %3407 = vmatprep.subr.mxu0 0.0
        %3408 = vmatpush2.msra.mxu0 0.0
        %3409 = vmatprep.subr.mxu0 0.0
        %3410 = vmatpush2.msra.mxu0 0.0
        %3411 = vmatprep.subr.mxu0 0.0
        %3412 = vmatpush2.msra.mxu0 0.0
        %3413 = vmatprep.subr.mxu0 0.0
        %3414 = vmatpush2.msra.mxu0 0.0
        %3415 = vmatprep.subr.mxu0 0.0
        %3416 = vmatpush2.msra.mxu0 0.0
        %3417 = vmatprep.subr.mxu0 0.0
        %3418 = vmatpush2.msra.mxu0 0.0
        %3419 = vmatprep.subr.mxu0 0.0
        %3420 = vmatpush2.msra.mxu0 0.0
        %3421 = vmatprep.subr.mxu0 0.0
        %3422 = vmatpush2.msra.mxu0 0.0
        %3423 = vmatprep.subr.mxu0 0.0
        %3424 = vmatpush2.msra.mxu0 0.0
        %3425 = vmatprep.mubr.f32.mxu0 0.0
        %3426 = vmatmul.mubr.f32.gmra.mxu0 %v3287
        %v3427 = vpop.f32.mrf.mxu0
        %v3428 = vadd.f32 0.0, %v3427
        %v3429 = vpop.f32.mrf.mxu0
        %3430 = vmatprep.mubr.f32.mxu0 0.0
        %3431 = vmatmul.mubr.f32.gmra.mxu0 %v3290
        %v3432 = vpop.f32.mrf.mxu0
        %v3433 = vadd.f32 0.0, %v3432
        %v3434 = vpop.f32.mrf.mxu0
        %3435 = vmatprep.mubr.f32.mxu0 0.0
        %3436 = vmatmul.mubr.f32.gmra.mxu0 %v3293
        %v3437 = vpop.f32.mrf.mxu0
        %v3438 = vadd.f32 0.0, %v3437
        %v3439 = vpop.f32.mrf.mxu0
        %3440 = vmatprep.mubr.f32.mxu0 0.0
        %3441 = vmatmul.mubr.f32.gmra.mxu0 %v3296
        %v3442 = vpop.f32.mrf.mxu0
        %v3443 = vadd.f32 0.0, %v3442
        %v3444 = vpop.f32.mrf.mxu0
        %3445 = vmatprep.mubr.f32.mxu0 0.0
        %3446 = vmatmul.mubr.f32.gmra.mxu0 %v3299
        %v3447 = vpop.f32.mrf.mxu0
        %v3448 = vpop.f32.mrf.mxu0
        %3449 = vmatprep.mubr.f32.mxu0 0.0
        %3450 = vmatmul.mubr.f32.gmra.mxu0 %v3302
        %v3451 = vpop.f32.mrf.mxu0
        %v3452 = vadd.f32 0.0, %v3451
        %v3453 = vpop.f32.mrf.mxu0
        %3454 = vmatprep.mubr.f32.mxu0 0.0
        %3455 = vmatmul.mubr.f32.gmra.mxu0 %v3305
        %v3456 = vpop.f32.mrf.mxu0
        %v3457 = vadd.f32 0.0, %v3456
        %v3458 = vpop.f32.mrf.mxu0
        %3459 = vmatprep.mubr.f32.mxu0 0.0
        %3460 = vmatmul.mubr.f32.gmra.mxu0 %v3308
        %v3461 = vpop.f32.mrf.mxu0
        %v3462 = vadd.f32 0.0, %v3461
        %v3463 = vpop.f32.mrf.mxu0
        %3464 = vmatprep.mubr.f32.mxu0 0.0
        %3465 = vmatmul.mubr.f32.gmra.mxu0 %v3311
        %v3466 = vpop.f32.mrf.mxu0
        %v3467 = vadd.f32 0.0, %v3466
        %v3468 = vpop.f32.mrf.mxu0
        %3469 = vmatprep.mubr.f32.mxu0 0.0
        %3470 = vmatmul.mubr.f32.gmra.mxu0 %v3314
        %v3471 = vpop.f32.mrf.mxu0
        %v3472 = vpop.f32.mrf.mxu0
        %3473 = vmatprep.mubr.f32.mxu0 0.0
        %3474 = vmatmul.mubr.f32.gmra.mxu0 %v3317
        %v3475 = vpop.f32.mrf.mxu0
        %v3476 = vadd.f32 0.0, %v3475
        %v3477 = vpop.f32.mrf.mxu0
        %3478 = vmatprep.mubr.f32.mxu0 0.0
        %3479 = vmatmul.mubr.f32.gmra.mxu0 %v3320
        %v3480 = vpop.f32.mrf.mxu0
        %v3481 = vadd.f32 0.0, %v3480
        %v3482 = vpop.f32.mrf.mxu0
        %3483 = vmatprep.mubr.f32.mxu0 0.0
        %3484 = vmatmul.mubr.f32.gmra.mxu0 %v3323
        %v3485 = vpop.f32.mrf.mxu0
        %v3486 = vadd.f32 0.0, %v3485
        %v3487 = vpop.f32.mrf.mxu0
        %3488 = vmatprep.mubr.f32.mxu0 0.0
        %3489 = vmatmul.mubr.f32.gmra.mxu0 %v3326
        %v3490 = vpop.f32.mrf.mxu0
        %v3491 = vadd.f32 0.0, %v3490
        %v3492 = vpop.f32.mrf.mxu0
        %3493 = vmatprep.mubr.f32.mxu0 0.0
        %3494 = vmatmul.mubr.f32.gmra.mxu0 %v3329
        %v3495 = vpop.f32.mrf.mxu0
        %v3496 = vpop.f32.mrf.mxu0
        %3497 = vmatprep.mubr.f32.mxu0 0.0
        %3498 = vmatmul.mubr.f32.gmra.mxu0 %v3332
        %v3499 = vpop.f32.mrf.mxu0
        %v3500 = vadd.f32 0.0, %v3499
        %v3501 = vpop.f32.mrf.mxu0
        %3502 = vmatprep.mubr.f32.mxu0 0.0
        %3503 = vmatmul.mubr.f32.gmra.mxu0 %v3335
        %v3504 = vpop.f32.mrf.mxu0
        %v3505 = vadd.f32 0.0, %v3504
        %v3506 = vpop.f32.mrf.mxu0
        %3507 = vmatprep.mubr.f32.mxu0 0.0
        %3508 = vmatmul.mubr.f32.gmra.mxu0 %v3338
        %v3509 = vpop.f32.mrf.mxu0
        %v3510 = vadd.f32 0.0, %v3509
        %v3511 = vpop.f32.mrf.mxu0
        %3512 = vmatprep.mubr.f32.mxu0 0.0
        %3513 = vmatmul.mubr.f32.gmra.mxu0 %v3341
        %v3514 = vpop.f32.mrf.mxu0
        %v3515 = vadd.f32 0.0, %v3514
        %v3516 = vpop.f32.mrf.mxu0
        %3517 = vmatprep.mubr.f32.mxu0 0.0
        %3518 = vmatmul.mubr.f32.gmra.mxu0 %v3344
        %v3519 = vpop.f32.mrf.mxu0
        %v3520 = vpop.f32.mrf.mxu0
        %3521 = vmatprep.mubr.f32.mxu0 0.0
        %3522 = vmatmul.mubr.f32.gmra.mxu0 %v3347
        %v3523 = vpop.f32.mrf.mxu0
        %v3524 = vpop.f32.mrf.mxu0
        %3525 = vmatprep.mubr.f32.mxu0 0.0
        %3526 = vmatmul.mubr.f32.gmra.mxu0 %v3350
        %v3527 = vpop.f32.mrf.mxu0
        %v3528 = vpop.f32.mrf.mxu0
        %3529 = vmatprep.mubr.f32.mxu0 0.0
        %3530 = vmatmul.mubr.f32.gmra.mxu0 %v3353
        %v3531 = vpop.f32.mrf.mxu0
        %v3532 = vpop.f32.mrf.mxu0
        %3533 = vmatprep.mubr.f32.mxu0 0.0
        %3534 = vmatmul.mubr.f32.gmra.mxu0 %v3356
        %v3535 = vpop.f32.mrf.mxu0
        %v3536 = vpop.f32.mrf.mxu0
        %3537 = vmatprep.mubr.f32.mxu0 0.0
        %3538 = vmatmul.mubr.f32.gmra.mxu0 %v3359
        %v3539 = vpop.f32.mrf.mxu0
        %v3540 = vpop.f32.mrf.mxu0
        %3541 = vdwg.mxu0
        %v3542 = vadd.f32 %v3279, %v3428
        %v3543 = vadd.f32 %v3279, %v3433
        %v3544 = vadd.f32 %v3279, %v3438
        %v3545 = vadd.f32 %v3279, %v3443
        %v3546 = vadd.f32 %v3279, %v3452
        %v3547 = vadd.f32 %v3279, %v3457
        %v3548 = vadd.f32 %v3279, %v3462
        %v3549 = vadd.f32 %v3279, %v3467
        %v3550 = vadd.f32 %v3279, %v3476
        %v3551 = vadd.f32 %v3279, %v3481
        %v3552 = vadd.f32 %v3279, %v3486
        %v3553 = vadd.f32 %v3279, %v3491
        %v3554 = vadd.f32 %v3279, %v3500
        %v3555 = vadd.f32 %v3279, %v3505
        %v3556 = vadd.f32 %v3279, %v3510
        %v3557 = vadd.f32 %v3279, %v3515
        %s3558 = scalar_lea.vmem %s3, 32
        %v3559 = vld [vmem:[%s3558] sm:$0xff]
        %v3560 = vld [vmem:[%s3558 + $0x8] sm:$0xff]
        %v3561 = vld [vmem:[%s3558 + $0x10] sm:$0xff]
        %v3562 = vld [vmem:[%s3558 + $0x18] sm:$0xff]
        %v3564 = vsel %vm3285, %v3230, 0
        %v3567 = vsel %vm3285, %v3237, 0
        %v3570 = vsel %vm3285, %v3244, 0
        %v3573 = vsel %vm3285, %v3251, 0
        %v3576 = vsel %vm3285, %v3258, 0
        %3578 = vmatprep.subr.mxu0 0.0
        %3579 = vmatpush1.msra.mxu0 0.0
        %3580 = vmatprep.subr.mxu0 0.0
        %3581 = vmatpush1.msra.mxu0 0.0
        %3582 = vmatprep.subr.mxu0 0.0
        %3583 = vmatpush1.msra.mxu0 0.0
        %3584 = vmatprep.subr.mxu0 0.0
        %3585 = vmatpush1.msra.mxu0 0.0
        %3586 = vmatprep.subr.mxu0 0.0
        %3587 = vmatpush1.msra.mxu0 0.0
        %3588 = vmatprep.subr.mxu0 0.0
        %3589 = vmatpush1.msra.mxu0 0.0
        %3590 = vmatprep.subr.mxu0 0.0
        %3591 = vmatpush1.msra.mxu0 0.0
        %3592 = vmatprep.subr.mxu0 0.0
        %3593 = vmatpush1.msra.mxu0 0.0
        %3594 = vmatprep.subr.mxu0 0.0
        %3595 = vmatpush1.msra.mxu0 0.0
        %3596 = vmatprep.subr.mxu0 0.0
        %3597 = vmatpush1.msra.mxu0 0.0
        %3598 = vmatprep.subr.mxu0 0.0
        %3599 = vmatpush1.msra.mxu0 0.0
        %3600 = vmatprep.subr.mxu0 0.0
        %3601 = vmatpush1.msra.mxu0 0.0
        %3602 = vmatprep.subr.mxu0 0.0
        %3603 = vmatpush1.msra.mxu0 %v3562
        %3604 = vmatprep.subr.mxu0 0.0
        %3605 = vmatpush1.msra.mxu0 %v3561
        %3606 = vmatprep.subr.mxu0 0.0
        %3607 = vmatpush1.msra.mxu0 %v3560
        %3608 = vmatprep.subr.mxu0 0.0
        %3609 = vmatpush1.msra.mxu0 %v3559
        %3610 = vmatprep.subr.mxu0 0.0
        %3611 = vmatpush2.msra.mxu0 0.0
        %3612 = vmatprep.subr.mxu0 0.0
        %3613 = vmatpush2.msra.mxu0 0.0
        %3614 = vmatprep.subr.mxu0 0.0
        %3615 = vmatpush2.msra.mxu0 0.0
        %3616 = vmatprep.subr.mxu0 0.0
        %3617 = vmatpush2.msra.mxu0 0.0
        %3618 = vmatprep.subr.mxu0 0.0
        %3619 = vmatpush2.msra.mxu0 0.0
        %3620 = vmatprep.subr.mxu0 0.0
        %3621 = vmatpush2.msra.mxu0 0.0
        %3622 = vmatprep.subr.mxu0 0.0
        %3623 = vmatpush2.msra.mxu0 0.0
        %3624 = vmatprep.subr.mxu0 0.0
        %3625 = vmatpush2.msra.mxu0 0.0
        %3626 = vmatprep.subr.mxu0 0.0
        %3627 = vmatpush2.msra.mxu0 0.0
        %3628 = vmatprep.subr.mxu0 0.0
        %3629 = vmatpush2.msra.mxu0 0.0
        %3630 = vmatprep.subr.mxu0 0.0
        %3631 = vmatpush2.msra.mxu0 0.0
        %3632 = vmatprep.subr.mxu0 0.0
        %3633 = vmatpush2.msra.mxu0 0.0
        %3634 = vmatprep.subr.mxu0 0.0
        %3635 = vmatpush2.msra.mxu0 0.0
        %3636 = vmatprep.subr.mxu0 0.0
        %3637 = vmatpush2.msra.mxu0 0.0
        %3638 = vmatprep.subr.mxu0 0.0
        %3639 = vmatpush2.msra.mxu0 0.0
        %3640 = vmatprep.subr.mxu0 0.0
        %3641 = vmatpush2.msra.mxu0 0.0
        %3642 = vmatprep.mubr.f32.mxu0 0.0
        %3643 = vmatmul.mubr.f32.gmra.mxu0 %v3290
        %v3644 = vpop.f32.mrf.mxu0
        %v3645 = vadd.f32 0.0, %v3644
        %v3646 = vpop.f32.mrf.mxu0
        %3647 = vmatprep.mubr.f32.mxu0 0.0
        %3648 = vmatmul.mubr.f32.gmra.mxu0 %v3293
        %v3649 = vpop.f32.mrf.mxu0
        %v3650 = vadd.f32 0.0, %v3649
        %v3651 = vpop.f32.mrf.mxu0
        %3652 = vmatprep.mubr.f32.mxu0 0.0
        %3653 = vmatmul.mubr.f32.gmra.mxu0 %v3296
        %v3654 = vpop.f32.mrf.mxu0
        %v3655 = vadd.f32 0.0, %v3654
        %v3656 = vpop.f32.mrf.mxu0
        %3657 = vmatprep.mubr.f32.mxu0 0.0
        %3658 = vmatmul.mubr.f32.gmra.mxu0 %v3299
        %v3659 = vpop.f32.mrf.mxu0
        %v3660 = vadd.f32 0.0, %v3659
        %v3661 = vpop.f32.mrf.mxu0
        %3662 = vmatprep.mubr.f32.mxu0 0.0
        %3663 = vmatmul.mubr.f32.gmra.mxu0 %v3564
        %v3664 = vpop.f32.mrf.mxu0
        %v3665 = vpop.f32.mrf.mxu0
        %3666 = vmatprep.mubr.f32.mxu0 0.0
        %3667 = vmatmul.mubr.f32.gmra.mxu0 %v3305
        %v3668 = vpop.f32.mrf.mxu0
        %v3669 = vadd.f32 0.0, %v3668
        %v3670 = vpop.f32.mrf.mxu0
        %3671 = vmatprep.mubr.f32.mxu0 0.0
        %3672 = vmatmul.mubr.f32.gmra.mxu0 %v3308
        %v3673 = vpop.f32.mrf.mxu0
        %v3674 = vadd.f32 0.0, %v3673
        %v3675 = vpop.f32.mrf.mxu0
        %3676 = vmatprep.mubr.f32.mxu0 0.0
        %3677 = vmatmul.mubr.f32.gmra.mxu0 %v3311
        %v3678 = vpop.f32.mrf.mxu0
        %v3679 = vadd.f32 0.0, %v3678
        %v3680 = vpop.f32.mrf.mxu0
        %3681 = vmatprep.mubr.f32.mxu0 0.0
        %3682 = vmatmul.mubr.f32.gmra.mxu0 %v3314
        %v3683 = vpop.f32.mrf.mxu0
        %v3684 = vadd.f32 0.0, %v3683
        %v3685 = vpop.f32.mrf.mxu0
        %3686 = vmatprep.mubr.f32.mxu0 0.0
        %3687 = vmatmul.mubr.f32.gmra.mxu0 %v3567
        %v3688 = vpop.f32.mrf.mxu0
        %v3689 = vpop.f32.mrf.mxu0
        %3690 = vmatprep.mubr.f32.mxu0 0.0
        %3691 = vmatmul.mubr.f32.gmra.mxu0 %v3320
        %v3692 = vpop.f32.mrf.mxu0
        %v3693 = vadd.f32 0.0, %v3692
        %v3694 = vpop.f32.mrf.mxu0
        %3695 = vmatprep.mubr.f32.mxu0 0.0
        %3696 = vmatmul.mubr.f32.gmra.mxu0 %v3323
        %v3697 = vpop.f32.mrf.mxu0
        %v3698 = vadd.f32 0.0, %v3697
        %v3699 = vpop.f32.mrf.mxu0
        %3700 = vmatprep.mubr.f32.mxu0 0.0
        %3701 = vmatmul.mubr.f32.gmra.mxu0 %v3326
        %v3702 = vpop.f32.mrf.mxu0
        %v3703 = vadd.f32 0.0, %v3702
        %v3704 = vpop.f32.mrf.mxu0
        %3705 = vmatprep.mubr.f32.mxu0 0.0
        %3706 = vmatmul.mubr.f32.gmra.mxu0 %v3329
        %v3707 = vpop.f32.mrf.mxu0
        %v3708 = vadd.f32 0.0, %v3707
        %v3709 = vpop.f32.mrf.mxu0
        %3710 = vmatprep.mubr.f32.mxu0 0.0
        %3711 = vmatmul.mubr.f32.gmra.mxu0 %v3570
        %v3712 = vpop.f32.mrf.mxu0
        %v3713 = vpop.f32.mrf.mxu0
        %3714 = vmatprep.mubr.f32.mxu0 0.0
        %3715 = vmatmul.mubr.f32.gmra.mxu0 %v3335
        %v3716 = vpop.f32.mrf.mxu0
        %v3717 = vadd.f32 0.0, %v3716
        %v3718 = vpop.f32.mrf.mxu0
        %3719 = vmatprep.mubr.f32.mxu0 0.0
        %3720 = vmatmul.mubr.f32.gmra.mxu0 %v3338
        %v3721 = vpop.f32.mrf.mxu0
        %v3722 = vadd.f32 0.0, %v3721
        %v3723 = vpop.f32.mrf.mxu0
        %3724 = vmatprep.mubr.f32.mxu0 0.0
        %3725 = vmatmul.mubr.f32.gmra.mxu0 %v3341
        %v3726 = vpop.f32.mrf.mxu0
        %v3727 = vadd.f32 0.0, %v3726
        %v3728 = vpop.f32.mrf.mxu0
        %3729 = vmatprep.mubr.f32.mxu0 0.0
        %3730 = vmatmul.mubr.f32.gmra.mxu0 %v3344
        %v3731 = vpop.f32.mrf.mxu0
        %v3732 = vadd.f32 0.0, %v3731
        %v3733 = vpop.f32.mrf.mxu0
        %3734 = vmatprep.mubr.f32.mxu0 0.0
        %3735 = vmatmul.mubr.f32.gmra.mxu0 %v3573
        %v3736 = vpop.f32.mrf.mxu0
        %v3737 = vpop.f32.mrf.mxu0
        %3738 = vmatprep.mubr.f32.mxu0 0.0
        %3739 = vmatmul.mubr.f32.gmra.mxu0 %v3350
        %v3740 = vpop.f32.mrf.mxu0
        %v3741 = vpop.f32.mrf.mxu0
        %3742 = vmatprep.mubr.f32.mxu0 0.0
        %3743 = vmatmul.mubr.f32.gmra.mxu0 %v3353
        %v3744 = vpop.f32.mrf.mxu0
        %v3745 = vpop.f32.mrf.mxu0
        %3746 = vmatprep.mubr.f32.mxu0 0.0
        %3747 = vmatmul.mubr.f32.gmra.mxu0 %v3356
        %v3748 = vpop.f32.mrf.mxu0
        %v3749 = vpop.f32.mrf.mxu0
        %3750 = vmatprep.mubr.f32.mxu0 0.0
        %3751 = vmatmul.mubr.f32.gmra.mxu0 %v3359
        %v3752 = vpop.f32.mrf.mxu0
        %v3753 = vpop.f32.mrf.mxu0
        %3754 = vmatprep.mubr.f32.mxu0 0.0
        %3755 = vmatmul.mubr.f32.gmra.mxu0 %v3576
        %v3756 = vpop.f32.mrf.mxu0
        %v3757 = vpop.f32.mrf.mxu0
        %3758 = vdwg.mxu0
        %v3759 = vadd.f32 %v3542, %v3645
        %v3760 = vadd.f32 %v3543, %v3650
        %v3761 = vadd.f32 %v3544, %v3655
        %v3762 = vadd.f32 %v3545, %v3660
        %v3763 = vadd.f32 %v3546, %v3669
        %v3764 = vadd.f32 %v3547, %v3674
        %v3765 = vadd.f32 %v3548, %v3679
        %v3766 = vadd.f32 %v3549, %v3684
        %v3767 = vadd.f32 %v3550, %v3693
        %v3768 = vadd.f32 %v3551, %v3698
        %v3769 = vadd.f32 %v3552, %v3703
        %v3770 = vadd.f32 %v3553, %v3708
        %v3771 = vadd.f32 %v3554, %v3717
        %v3772 = vadd.f32 %v3555, %v3722
        %v3773 = vadd.f32 %v3556, %v3727
        %v3774 = vadd.f32 %v3557, %v3732
        %s3775 = scalar_lea.vmem %s3, 64
        %v3776 = vld [vmem:[%s3775] sm:$0xff]
        %v3777 = vld [vmem:[%s3775 + $0x8] sm:$0xff]
        %v3778 = vld [vmem:[%s3775 + $0x10] sm:$0xff]
        %v3779 = vld [vmem:[%s3775 + $0x18] sm:$0xff]
        %v3781 = vsel %vm3285, %v3231, 0
        %v3784 = vsel %vm3285, %v3238, 0
        %v3787 = vsel %vm3285, %v3245, 0
        %v3790 = vsel %vm3285, %v3252, 0
        %v3793 = vsel %vm3285, %v3259, 0
        %3795 = vmatprep.subr.mxu0 0.0
        %3796 = vmatpush1.msra.mxu0 0.0
        %3797 = vmatprep.subr.mxu0 0.0
        %3798 = vmatpush1.msra.mxu0 0.0
        %3799 = vmatprep.subr.mxu0 0.0
        %3800 = vmatpush1.msra.mxu0 0.0
        %3801 = vmatprep.subr.mxu0 0.0
        %3802 = vmatpush1.msra.mxu0 0.0
        %3803 = vmatprep.subr.mxu0 0.0
        %3804 = vmatpush1.msra.mxu0 0.0
        %3805 = vmatprep.subr.mxu0 0.0
        %3806 = vmatpush1.msra.mxu0 0.0
        %3807 = vmatprep.subr.mxu0 0.0
        %3808 = vmatpush1.msra.mxu0 0.0
        %3809 = vmatprep.subr.mxu0 0.0
        %3810 = vmatpush1.msra.mxu0 0.0
        %3811 = vmatprep.subr.mxu0 0.0
        %3812 = vmatpush1.msra.mxu0 0.0
        %3813 = vmatprep.subr.mxu0 0.0
        %3814 = vmatpush1.msra.mxu0 0.0
        %3815 = vmatprep.subr.mxu0 0.0
        %3816 = vmatpush1.msra.mxu0 0.0
        %3817 = vmatprep.subr.mxu0 0.0
        %3818 = vmatpush1.msra.mxu0 0.0
        %3819 = vmatprep.subr.mxu0 0.0
        %3820 = vmatpush1.msra.mxu0 %v3779
        %3821 = vmatprep.subr.mxu0 0.0
        %3822 = vmatpush1.msra.mxu0 %v3778
        %3823 = vmatprep.subr.mxu0 0.0
        %3824 = vmatpush1.msra.mxu0 %v3777
        %3825 = vmatprep.subr.mxu0 0.0
        %3826 = vmatpush1.msra.mxu0 %v3776
        %3827 = vmatprep.subr.mxu0 0.0
        %3828 = vmatpush2.msra.mxu0 0.0
        %3829 = vmatprep.subr.mxu0 0.0
        %3830 = vmatpush2.msra.mxu0 0.0
        %3831 = vmatprep.subr.mxu0 0.0
        %3832 = vmatpush2.msra.mxu0 0.0
        %3833 = vmatprep.subr.mxu0 0.0
        %3834 = vmatpush2.msra.mxu0 0.0
        %3835 = vmatprep.subr.mxu0 0.0
        %3836 = vmatpush2.msra.mxu0 0.0
        %3837 = vmatprep.subr.mxu0 0.0
        %3838 = vmatpush2.msra.mxu0 0.0
        %3839 = vmatprep.subr.mxu0 0.0
        %3840 = vmatpush2.msra.mxu0 0.0
        %3841 = vmatprep.subr.mxu0 0.0
        %3842 = vmatpush2.msra.mxu0 0.0
        %3843 = vmatprep.subr.mxu0 0.0
        %3844 = vmatpush2.msra.mxu0 0.0
        %3845 = vmatprep.subr.mxu0 0.0
        %3846 = vmatpush2.msra.mxu0 0.0
        %3847 = vmatprep.subr.mxu0 0.0
        %3848 = vmatpush2.msra.mxu0 0.0
        %3849 = vmatprep.subr.mxu0 0.0
        %3850 = vmatpush2.msra.mxu0 0.0
        %3851 = vmatprep.subr.mxu0 0.0
        %3852 = vmatpush2.msra.mxu0 0.0
        %3853 = vmatprep.subr.mxu0 0.0
        %3854 = vmatpush2.msra.mxu0 0.0
        %3855 = vmatprep.subr.mxu0 0.0
        %3856 = vmatpush2.msra.mxu0 0.0
        %3857 = vmatprep.subr.mxu0 0.0
        %3858 = vmatpush2.msra.mxu0 0.0
        %3859 = vmatprep.mubr.f32.mxu0 0.0
        %3860 = vmatmul.mubr.f32.gmra.mxu0 %v3293
        %v3861 = vpop.f32.mrf.mxu0
        %v3862 = vadd.f32 0.0, %v3861
        %v3863 = vpop.f32.mrf.mxu0
        %3864 = vmatprep.mubr.f32.mxu0 0.0
        %3865 = vmatmul.mubr.f32.gmra.mxu0 %v3296
        %v3866 = vpop.f32.mrf.mxu0
        %v3867 = vadd.f32 0.0, %v3866
        %v3868 = vpop.f32.mrf.mxu0
        %3869 = vmatprep.mubr.f32.mxu0 0.0
        %3870 = vmatmul.mubr.f32.gmra.mxu0 %v3299
        %v3871 = vpop.f32.mrf.mxu0
        %v3872 = vadd.f32 0.0, %v3871
        %v3873 = vpop.f32.mrf.mxu0
        %3874 = vmatprep.mubr.f32.mxu0 0.0
        %3875 = vmatmul.mubr.f32.gmra.mxu0 %v3564
        %v3876 = vpop.f32.mrf.mxu0
        %v3877 = vadd.f32 0.0, %v3876
        %v3878 = vpop.f32.mrf.mxu0
        %3879 = vmatprep.mubr.f32.mxu0 0.0
        %3880 = vmatmul.mubr.f32.gmra.mxu0 %v3781
        %v3881 = vpop.f32.mrf.mxu0
        %v3882 = vpop.f32.mrf.mxu0
        %3883 = vmatprep.mubr.f32.mxu0 0.0
        %3884 = vmatmul.mubr.f32.gmra.mxu0 %v3308
        %v3885 = vpop.f32.mrf.mxu0
        %v3886 = vadd.f32 0.0, %v3885
        %v3887 = vpop.f32.mrf.mxu0
        %3888 = vmatprep.mubr.f32.mxu0 0.0
        %3889 = vmatmul.mubr.f32.gmra.mxu0 %v3311
        %v3890 = vpop.f32.mrf.mxu0
        %v3891 = vadd.f32 0.0, %v3890
        %v3892 = vpop.f32.mrf.mxu0
        %3893 = vmatprep.mubr.f32.mxu0 0.0
        %3894 = vmatmul.mubr.f32.gmra.mxu0 %v3314
        %v3895 = vpop.f32.mrf.mxu0
        %v3896 = vadd.f32 0.0, %v3895
        %v3897 = vpop.f32.mrf.mxu0
        %3898 = vmatprep.mubr.f32.mxu0 0.0
        %3899 = vmatmul.mubr.f32.gmra.mxu0 %v3567
        %v3900 = vpop.f32.mrf.mxu0
        %v3901 = vadd.f32 0.0, %v3900
        %v3902 = vpop.f32.mrf.mxu0
        %3903 = vmatprep.mubr.f32.mxu0 0.0
        %3904 = vmatmul.mubr.f32.gmra.mxu0 %v3784
        %v3905 = vpop.f32.mrf.mxu0
        %v3906 = vpop.f32.mrf.mxu0
        %3907 = vmatprep.mubr.f32.mxu0 0.0
        %3908 = vmatmul.mubr.f32.gmra.mxu0 %v3323
        %v3909 = vpop.f32.mrf.mxu0
        %v3910 = vadd.f32 0.0, %v3909
        %v3911 = vpop.f32.mrf.mxu0
        %3912 = vmatprep.mubr.f32.mxu0 0.0
        %3913 = vmatmul.mubr.f32.gmra.mxu0 %v3326
        %v3914 = vpop.f32.mrf.mxu0
        %v3915 = vadd.f32 0.0, %v3914
        %v3916 = vpop.f32.mrf.mxu0
        %3917 = vmatprep.mubr.f32.mxu0 0.0
        %3918 = vmatmul.mubr.f32.gmra.mxu0 %v3329
        %v3919 = vpop.f32.mrf.mxu0
        %v3920 = vadd.f32 0.0, %v3919
        %v3921 = vpop.f32.mrf.mxu0
        %3922 = vmatprep.mubr.f32.mxu0 0.0
        %3923 = vmatmul.mubr.f32.gmra.mxu0 %v3570
        %v3924 = vpop.f32.mrf.mxu0
        %v3925 = vadd.f32 0.0, %v3924
        %v3926 = vpop.f32.mrf.mxu0
        %3927 = vmatprep.mubr.f32.mxu0 0.0
        %3928 = vmatmul.mubr.f32.gmra.mxu0 %v3787
        %v3929 = vpop.f32.mrf.mxu0
        %v3930 = vpop.f32.mrf.mxu0
        %3931 = vmatprep.mubr.f32.mxu0 0.0
        %3932 = vmatmul.mubr.f32.gmra.mxu0 %v3338
        %v3933 = vpop.f32.mrf.mxu0
        %v3934 = vadd.f32 0.0, %v3933
        %v3935 = vpop.f32.mrf.mxu0
        %3936 = vmatprep.mubr.f32.mxu0 0.0
        %3937 = vmatmul.mubr.f32.gmra.mxu0 %v3341
        %v3938 = vpop.f32.mrf.mxu0
        %v3939 = vadd.f32 0.0, %v3938
        %v3940 = vpop.f32.mrf.mxu0
        %3941 = vmatprep.mubr.f32.mxu0 0.0
        %3942 = vmatmul.mubr.f32.gmra.mxu0 %v3344
        %v3943 = vpop.f32.mrf.mxu0
        %v3944 = vadd.f32 0.0, %v3943
        %v3945 = vpop.f32.mrf.mxu0
        %3946 = vmatprep.mubr.f32.mxu0 0.0
        %3947 = vmatmul.mubr.f32.gmra.mxu0 %v3573
        %v3948 = vpop.f32.mrf.mxu0
        %v3949 = vadd.f32 0.0, %v3948
        %v3950 = vpop.f32.mrf.mxu0
        %3951 = vmatprep.mubr.f32.mxu0 0.0
        %3952 = vmatmul.mubr.f32.gmra.mxu0 %v3790
        %v3953 = vpop.f32.mrf.mxu0
        %v3954 = vpop.f32.mrf.mxu0
        %3955 = vmatprep.mubr.f32.mxu0 0.0
        %3956 = vmatmul.mubr.f32.gmra.mxu0 %v3353
        %v3957 = vpop.f32.mrf.mxu0
        %v3958 = vpop.f32.mrf.mxu0
        %3959 = vmatprep.mubr.f32.mxu0 0.0
        %3960 = vmatmul.mubr.f32.gmra.mxu0 %v3356
        %v3961 = vpop.f32.mrf.mxu0
        %v3962 = vpop.f32.mrf.mxu0
        %3963 = vmatprep.mubr.f32.mxu0 0.0
        %3964 = vmatmul.mubr.f32.gmra.mxu0 %v3359
        %v3965 = vpop.f32.mrf.mxu0
        %v3966 = vpop.f32.mrf.mxu0
        %3967 = vmatprep.mubr.f32.mxu0 0.0
        %3968 = vmatmul.mubr.f32.gmra.mxu0 %v3576
        %v3969 = vpop.f32.mrf.mxu0
        %v3970 = vpop.f32.mrf.mxu0
        %3971 = vmatprep.mubr.f32.mxu0 0.0
        %3972 = vmatmul.mubr.f32.gmra.mxu0 %v3793
        %v3973 = vpop.f32.mrf.mxu0
        %v3974 = vpop.f32.mrf.mxu0
        %3975 = vdwg.mxu0
        %v3976 = vadd.f32 %v3759, %v3862
        %v3977 = vadd.f32 %v3760, %v3867
        %v3978 = vadd.f32 %v3761, %v3872
        %v3979 = vadd.f32 %v3762, %v3877
        %v3980 = vadd.f32 %v3763, %v3886
        %v3981 = vadd.f32 %v3764, %v3891
        %v3982 = vadd.f32 %v3765, %v3896
        %v3983 = vadd.f32 %v3766, %v3901
        %v3984 = vadd.f32 %v3767, %v3910
        %v3985 = vadd.f32 %v3768, %v3915
        %v3986 = vadd.f32 %v3769, %v3920
        %v3987 = vadd.f32 %v3770, %v3925
        %v3988 = vadd.f32 %v3771, %v3934
        %v3989 = vadd.f32 %v3772, %v3939
        %v3990 = vadd.f32 %v3773, %v3944
        %v3991 = vadd.f32 %v3774, %v3949
        %s3992 = scalar_lea.vmem %s3, 96
        %v3993 = vld [vmem:[%s3992] sm:$0xff]
        %v3994 = vld [vmem:[%s3992 + $0x8] sm:$0xff]
        %v3995 = vld [vmem:[%s3992 + $0x10] sm:$0xff]
        %v3996 = vld [vmem:[%s3992 + $0x18] sm:$0xff]
        %v3998 = vsel %vm3285, %v3260, 0
        %v4001 = vsel %vm3285, %v3261, 0
        %v4004 = vsel %vm3285, %v3262, 0
        %v4007 = vsel %vm3285, %v3263, 0
        %v4010 = vsel %vm3285, %v3264, 0
        %4012 = vmatprep.subr.mxu0 0.0
        %4013 = vmatpush1.msra.mxu0 0.0
        %4014 = vmatprep.subr.mxu0 0.0
        %4015 = vmatpush1.msra.mxu0 0.0
        %4016 = vmatprep.subr.mxu0 0.0
        %4017 = vmatpush1.msra.mxu0 0.0
        %4018 = vmatprep.subr.mxu0 0.0
        %4019 = vmatpush1.msra.mxu0 0.0
        %4020 = vmatprep.subr.mxu0 0.0
        %4021 = vmatpush1.msra.mxu0 0.0
        %4022 = vmatprep.subr.mxu0 0.0
        %4023 = vmatpush1.msra.mxu0 0.0
        %4024 = vmatprep.subr.mxu0 0.0
        %4025 = vmatpush1.msra.mxu0 0.0
        %4026 = vmatprep.subr.mxu0 0.0
        %4027 = vmatpush1.msra.mxu0 0.0
        %4028 = vmatprep.subr.mxu0 0.0
        %4029 = vmatpush1.msra.mxu0 0.0
        %4030 = vmatprep.subr.mxu0 0.0
        %4031 = vmatpush1.msra.mxu0 0.0
        %4032 = vmatprep.subr.mxu0 0.0
        %4033 = vmatpush1.msra.mxu0 0.0
        %4034 = vmatprep.subr.mxu0 0.0
        %4035 = vmatpush1.msra.mxu0 0.0
        %4036 = vmatprep.subr.mxu0 0.0
        %4037 = vmatpush1.msra.mxu0 %v3996
        %4038 = vmatprep.subr.mxu0 0.0
        %4039 = vmatpush1.msra.mxu0 %v3995
        %4040 = vmatprep.subr.mxu0 0.0
        %4041 = vmatpush1.msra.mxu0 %v3994
        %4042 = vmatprep.subr.mxu0 0.0
        %4043 = vmatpush1.msra.mxu0 %v3993
        %4044 = vmatprep.subr.mxu0 0.0
        %4045 = vmatpush2.msra.mxu0 0.0
        %4046 = vmatprep.subr.mxu0 0.0
        %4047 = vmatpush2.msra.mxu0 0.0
        %4048 = vmatprep.subr.mxu0 0.0
        %4049 = vmatpush2.msra.mxu0 0.0
        %4050 = vmatprep.subr.mxu0 0.0
        %4051 = vmatpush2.msra.mxu0 0.0
        %4052 = vmatprep.subr.mxu0 0.0
        %4053 = vmatpush2.msra.mxu0 0.0
        %4054 = vmatprep.subr.mxu0 0.0
        %4055 = vmatpush2.msra.mxu0 0.0
        %4056 = vmatprep.subr.mxu0 0.0
        %4057 = vmatpush2.msra.mxu0 0.0
        %4058 = vmatprep.subr.mxu0 0.0
        %4059 = vmatpush2.msra.mxu0 0.0
        %4060 = vmatprep.subr.mxu0 0.0
        %4061 = vmatpush2.msra.mxu0 0.0
        %4062 = vmatprep.subr.mxu0 0.0
        %4063 = vmatpush2.msra.mxu0 0.0
        %4064 = vmatprep.subr.mxu0 0.0
        %4065 = vmatpush2.msra.mxu0 0.0
        %4066 = vmatprep.subr.mxu0 0.0
        %4067 = vmatpush2.msra.mxu0 0.0
        %4068 = vmatprep.subr.mxu0 0.0
        %4069 = vmatpush2.msra.mxu0 0.0
        %4070 = vmatprep.subr.mxu0 0.0
        %4071 = vmatpush2.msra.mxu0 0.0
        %4072 = vmatprep.subr.mxu0 0.0
        %4073 = vmatpush2.msra.mxu0 0.0
        %4074 = vmatprep.subr.mxu0 0.0
        %4075 = vmatpush2.msra.mxu0 0.0
        %4076 = vmatprep.mubr.f32.mxu0 0.0
        %4077 = vmatmul.mubr.f32.gmra.mxu0 %v3302
        %v4078 = vpop.f32.mrf.mxu0
        %v4079 = vadd.f32 0.0, %v4078
        %v4080 = vpop.f32.mrf.mxu0
        %4081 = vmatprep.mubr.f32.mxu0 0.0
        %4082 = vmatmul.mubr.f32.gmra.mxu0 %v3305
        %v4083 = vpop.f32.mrf.mxu0
        %v4084 = vadd.f32 0.0, %v4083
        %v4085 = vpop.f32.mrf.mxu0
        %4086 = vmatprep.mubr.f32.mxu0 0.0
        %4087 = vmatmul.mubr.f32.gmra.mxu0 %v3308
        %v4088 = vpop.f32.mrf.mxu0
        %v4089 = vadd.f32 0.0, %v4088
        %v4090 = vpop.f32.mrf.mxu0
        %4091 = vmatprep.mubr.f32.mxu0 0.0
        %4092 = vmatmul.mubr.f32.gmra.mxu0 %v3311
        %v4093 = vpop.f32.mrf.mxu0
        %v4094 = vadd.f32 0.0, %v4093
        %v4095 = vpop.f32.mrf.mxu0
        %4096 = vmatprep.mubr.f32.mxu0 0.0
        %4097 = vmatmul.mubr.f32.gmra.mxu0 %v3314
        %v4098 = vpop.f32.mrf.mxu0
        %v4099 = vpop.f32.mrf.mxu0
        %4100 = vmatprep.mubr.f32.mxu0 0.0
        %4101 = vmatmul.mubr.f32.gmra.mxu0 %v3317
        %v4102 = vpop.f32.mrf.mxu0
        %v4103 = vadd.f32 0.0, %v4102
        %v4104 = vpop.f32.mrf.mxu0
        %4105 = vmatprep.mubr.f32.mxu0 0.0
        %4106 = vmatmul.mubr.f32.gmra.mxu0 %v3320
        %v4107 = vpop.f32.mrf.mxu0
        %v4108 = vadd.f32 0.0, %v4107
        %v4109 = vpop.f32.mrf.mxu0
        %4110 = vmatprep.mubr.f32.mxu0 0.0
        %4111 = vmatmul.mubr.f32.gmra.mxu0 %v3323
        %v4112 = vpop.f32.mrf.mxu0
        %v4113 = vadd.f32 0.0, %v4112
        %v4114 = vpop.f32.mrf.mxu0
        %4115 = vmatprep.mubr.f32.mxu0 0.0
        %4116 = vmatmul.mubr.f32.gmra.mxu0 %v3326
        %v4117 = vpop.f32.mrf.mxu0
        %v4118 = vadd.f32 0.0, %v4117
        %v4119 = vpop.f32.mrf.mxu0
        %4120 = vmatprep.mubr.f32.mxu0 0.0
        %4121 = vmatmul.mubr.f32.gmra.mxu0 %v3329
        %v4122 = vpop.f32.mrf.mxu0
        %v4123 = vpop.f32.mrf.mxu0
        %4124 = vmatprep.mubr.f32.mxu0 0.0
        %4125 = vmatmul.mubr.f32.gmra.mxu0 %v3332
        %v4126 = vpop.f32.mrf.mxu0
        %v4127 = vadd.f32 0.0, %v4126
        %v4128 = vpop.f32.mrf.mxu0
        %4129 = vmatprep.mubr.f32.mxu0 0.0
        %4130 = vmatmul.mubr.f32.gmra.mxu0 %v3335
        %v4131 = vpop.f32.mrf.mxu0
        %v4132 = vadd.f32 0.0, %v4131
        %v4133 = vpop.f32.mrf.mxu0
        %4134 = vmatprep.mubr.f32.mxu0 0.0
        %4135 = vmatmul.mubr.f32.gmra.mxu0 %v3338
        %v4136 = vpop.f32.mrf.mxu0
        %v4137 = vadd.f32 0.0, %v4136
        %v4138 = vpop.f32.mrf.mxu0
        %4139 = vmatprep.mubr.f32.mxu0 0.0
        %4140 = vmatmul.mubr.f32.gmra.mxu0 %v3341
        %v4141 = vpop.f32.mrf.mxu0
        %v4142 = vadd.f32 0.0, %v4141
        %v4143 = vpop.f32.mrf.mxu0
        %4144 = vmatprep.mubr.f32.mxu0 0.0
        %4145 = vmatmul.mubr.f32.gmra.mxu0 %v3344
        %v4146 = vpop.f32.mrf.mxu0
        %v4147 = vpop.f32.mrf.mxu0
        %4148 = vmatprep.mubr.f32.mxu0 0.0
        %4149 = vmatmul.mubr.f32.gmra.mxu0 %v3347
        %v4150 = vpop.f32.mrf.mxu0
        %v4151 = vadd.f32 0.0, %v4150
        %v4152 = vpop.f32.mrf.mxu0
        %4153 = vmatprep.mubr.f32.mxu0 0.0
        %4154 = vmatmul.mubr.f32.gmra.mxu0 %v3350
        %v4155 = vpop.f32.mrf.mxu0
        %v4156 = vadd.f32 0.0, %v4155
        %v4157 = vpop.f32.mrf.mxu0
        %4158 = vmatprep.mubr.f32.mxu0 0.0
        %4159 = vmatmul.mubr.f32.gmra.mxu0 %v3353
        %v4160 = vpop.f32.mrf.mxu0
        %v4161 = vadd.f32 0.0, %v4160
        %v4162 = vpop.f32.mrf.mxu0
        %4163 = vmatprep.mubr.f32.mxu0 0.0
        %4164 = vmatmul.mubr.f32.gmra.mxu0 %v3356
        %v4165 = vpop.f32.mrf.mxu0
        %v4166 = vadd.f32 0.0, %v4165
        %v4167 = vpop.f32.mrf.mxu0
        %4168 = vmatprep.mubr.f32.mxu0 0.0
        %4169 = vmatmul.mubr.f32.gmra.mxu0 %v3359
        %v4170 = vpop.f32.mrf.mxu0
        %v4171 = vpop.f32.mrf.mxu0
        %4172 = vmatprep.mubr.f32.mxu0 0.0
        %4173 = vmatmul.mubr.f32.gmra.mxu0 %v3998
        %v4174 = vpop.f32.mrf.mxu0
        %v4175 = vpop.f32.mrf.mxu0
        %4176 = vmatprep.mubr.f32.mxu0 0.0
        %4177 = vmatmul.mubr.f32.gmra.mxu0 %v4001
        %v4178 = vpop.f32.mrf.mxu0
        %v4179 = vpop.f32.mrf.mxu0
        %4180 = vmatprep.mubr.f32.mxu0 0.0
        %4181 = vmatmul.mubr.f32.gmra.mxu0 %v4004
        %v4182 = vpop.f32.mrf.mxu0
        %v4183 = vpop.f32.mrf.mxu0
        %4184 = vmatprep.mubr.f32.mxu0 0.0
        %4185 = vmatmul.mubr.f32.gmra.mxu0 %v4007
        %v4186 = vpop.f32.mrf.mxu0
        %v4187 = vpop.f32.mrf.mxu0
        %4188 = vmatprep.mubr.f32.mxu0 0.0
        %4189 = vmatmul.mubr.f32.gmra.mxu0 %v4010
        %v4190 = vpop.f32.mrf.mxu0
        %v4191 = vpop.f32.mrf.mxu0
        %4192 = vdwg.mxu0
        %v4193 = vadd.f32 %v3976, %v4079
        %v4194 = vadd.f32 %v3977, %v4084
        %v4195 = vadd.f32 %v3978, %v4089
        %v4196 = vadd.f32 %v3979, %v4094
        %v4197 = vadd.f32 %v3980, %v4103
        %v4198 = vadd.f32 %v3981, %v4108
        %v4199 = vadd.f32 %v3982, %v4113
        %v4200 = vadd.f32 %v3983, %v4118
        %v4201 = vadd.f32 %v3984, %v4127
        %v4202 = vadd.f32 %v3985, %v4132
        %v4203 = vadd.f32 %v3986, %v4137
        %v4204 = vadd.f32 %v3987, %v4142
        %v4205 = vadd.f32 %v3988, %v4151
        %v4206 = vadd.f32 %v3989, %v4156
        %v4207 = vadd.f32 %v3990, %v4161
        %v4208 = vadd.f32 %v3991, %v4166
        %s4209 = scalar_lea.vmem %s3, 128
        %v4210 = vld [vmem:[%s4209] sm:$0xff]
        %v4211 = vld [vmem:[%s4209 + $0x8] sm:$0xff]
        %v4212 = vld [vmem:[%s4209 + $0x10] sm:$0xff]
        %v4213 = vld [vmem:[%s4209 + $0x18] sm:$0xff]
        %v4215 = vsel %vm3285, %v3265, 0
        %4217 = vmatprep.subr.mxu0 0.0
        %4218 = vmatpush1.msra.mxu0 0.0
        %4219 = vmatprep.subr.mxu0 0.0
        %4220 = vmatpush1.msra.mxu0 0.0
        %4221 = vmatprep.subr.mxu0 0.0
        %4222 = vmatpush1.msra.mxu0 0.0
        %4223 = vmatprep.subr.mxu0 0.0
        %4224 = vmatpush1.msra.mxu0 0.0
        %4225 = vmatprep.subr.mxu0 0.0
        %4226 = vmatpush1.msra.mxu0 0.0
        %4227 = vmatprep.subr.mxu0 0.0
        %4228 = vmatpush1.msra.mxu0 0.0
        %4229 = vmatprep.subr.mxu0 0.0
        %4230 = vmatpush1.msra.mxu0 0.0
        %4231 = vmatprep.subr.mxu0 0.0
        %4232 = vmatpush1.msra.mxu0 0.0
        %4233 = vmatprep.subr.mxu0 0.0
        %4234 = vmatpush1.msra.mxu0 0.0
        %4235 = vmatprep.subr.mxu0 0.0
        %4236 = vmatpush1.msra.mxu0 0.0
        %4237 = vmatprep.subr.mxu0 0.0
        %4238 = vmatpush1.msra.mxu0 0.0
        %4239 = vmatprep.subr.mxu0 0.0
        %4240 = vmatpush1.msra.mxu0 0.0
        %4241 = vmatprep.subr.mxu0 0.0
        %4242 = vmatpush1.msra.mxu0 %v4213
        %4243 = vmatprep.subr.mxu0 0.0
        %4244 = vmatpush1.msra.mxu0 %v4212
        %4245 = vmatprep.subr.mxu0 0.0
        %4246 = vmatpush1.msra.mxu0 %v4211
        %4247 = vmatprep.subr.mxu0 0.0
        %4248 = vmatpush1.msra.mxu0 %v4210
        %4249 = vmatprep.subr.mxu0 0.0
        %4250 = vmatpush2.msra.mxu0 0.0
        %4251 = vmatprep.subr.mxu0 0.0
        %4252 = vmatpush2.msra.mxu0 0.0
        %4253 = vmatprep.subr.mxu0 0.0
        %4254 = vmatpush2.msra.mxu0 0.0
        %4255 = vmatprep.subr.mxu0 0.0
        %4256 = vmatpush2.msra.mxu0 0.0
        %4257 = vmatprep.subr.mxu0 0.0
        %4258 = vmatpush2.msra.mxu0 0.0
        %4259 = vmatprep.subr.mxu0 0.0
        %4260 = vmatpush2.msra.mxu0 0.0
        %4261 = vmatprep.subr.mxu0 0.0
        %4262 = vmatpush2.msra.mxu0 0.0
        %4263 = vmatprep.subr.mxu0 0.0
        %4264 = vmatpush2.msra.mxu0 0.0
        %4265 = vmatprep.subr.mxu0 0.0
        %4266 = vmatpush2.msra.mxu0 0.0
        %4267 = vmatprep.subr.mxu0 0.0
        %4268 = vmatpush2.msra.mxu0 0.0
        %4269 = vmatprep.subr.mxu0 0.0
        %4270 = vmatpush2.msra.mxu0 0.0
        %4271 = vmatprep.subr.mxu0 0.0
        %4272 = vmatpush2.msra.mxu0 0.0
        %4273 = vmatprep.subr.mxu0 0.0
        %4274 = vmatpush2.msra.mxu0 0.0
        %4275 = vmatprep.subr.mxu0 0.0
        %4276 = vmatpush2.msra.mxu0 0.0
        %4277 = vmatprep.subr.mxu0 0.0
        %4278 = vmatpush2.msra.mxu0 0.0
        %4279 = vmatprep.subr.mxu0 0.0
        %4280 = vmatpush2.msra.mxu0 0.0
        %4281 = vmatprep.mubr.f32.mxu0 0.0
        %4282 = vmatmul.mubr.f32.gmra.mxu0 %v3305
        %v4283 = vpop.f32.mrf.mxu0
        %v4284 = vadd.f32 0.0, %v4283
        %v4285 = vpop.f32.mrf.mxu0
        %4286 = vmatprep.mubr.f32.mxu0 0.0
        %4287 = vmatmul.mubr.f32.gmra.mxu0 %v3308
        %v4288 = vpop.f32.mrf.mxu0
        %v4289 = vadd.f32 0.0, %v4288
        %v4290 = vpop.f32.mrf.mxu0
        %4291 = vmatprep.mubr.f32.mxu0 0.0
        %4292 = vmatmul.mubr.f32.gmra.mxu0 %v3311
        %v4293 = vpop.f32.mrf.mxu0
        %v4294 = vadd.f32 0.0, %v4293
        %v4295 = vpop.f32.mrf.mxu0
        %4296 = vmatprep.mubr.f32.mxu0 0.0
        %4297 = vmatmul.mubr.f32.gmra.mxu0 %v3314
        %v4298 = vpop.f32.mrf.mxu0
        %v4299 = vadd.f32 0.0, %v4298
        %v4300 = vpop.f32.mrf.mxu0
        %4301 = vmatprep.mubr.f32.mxu0 0.0
        %4302 = vmatmul.mubr.f32.gmra.mxu0 %v3567
        %v4303 = vpop.f32.mrf.mxu0
        %v4304 = vpop.f32.mrf.mxu0
        %4305 = vmatprep.mubr.f32.mxu0 0.0
        %4306 = vmatmul.mubr.f32.gmra.mxu0 %v3320
        %v4307 = vpop.f32.mrf.mxu0
        %v4308 = vadd.f32 0.0, %v4307
        %v4309 = vpop.f32.mrf.mxu0
        %4310 = vmatprep.mubr.f32.mxu0 0.0
        %4311 = vmatmul.mubr.f32.gmra.mxu0 %v3323
        %v4312 = vpop.f32.mrf.mxu0
        %v4313 = vadd.f32 0.0, %v4312
        %v4314 = vpop.f32.mrf.mxu0
        %4315 = vmatprep.mubr.f32.mxu0 0.0
        %4316 = vmatmul.mubr.f32.gmra.mxu0 %v3326
        %v4317 = vpop.f32.mrf.mxu0
        %v4318 = vadd.f32 0.0, %v4317
        %v4319 = vpop.f32.mrf.mxu0
        %4320 = vmatprep.mubr.f32.mxu0 0.0
        %4321 = vmatmul.mubr.f32.gmra.mxu0 %v3329
        %v4322 = vpop.f32.mrf.mxu0
        %v4323 = vadd.f32 0.0, %v4322
        %v4324 = vpop.f32.mrf.mxu0
        %4325 = vmatprep.mubr.f32.mxu0 0.0
        %4326 = vmatmul.mubr.f32.gmra.mxu0 %v3570
        %v4327 = vpop.f32.mrf.mxu0
        %v4328 = vpop.f32.mrf.mxu0
        %4329 = vmatprep.mubr.f32.mxu0 0.0
        %4330 = vmatmul.mubr.f32.gmra.mxu0 %v3335
        %v4331 = vpop.f32.mrf.mxu0
        %v4332 = vadd.f32 0.0, %v4331
        %v4333 = vpop.f32.mrf.mxu0
        %4334 = vmatprep.mubr.f32.mxu0 0.0
        %4335 = vmatmul.mubr.f32.gmra.mxu0 %v3338
        %v4336 = vpop.f32.mrf.mxu0
        %v4337 = vadd.f32 0.0, %v4336
        %v4338 = vpop.f32.mrf.mxu0
        %4339 = vmatprep.mubr.f32.mxu0 0.0
        %4340 = vmatmul.mubr.f32.gmra.mxu0 %v3341
        %v4341 = vpop.f32.mrf.mxu0
        %v4342 = vadd.f32 0.0, %v4341
        %v4343 = vpop.f32.mrf.mxu0
        %4344 = vmatprep.mubr.f32.mxu0 0.0
        %4345 = vmatmul.mubr.f32.gmra.mxu0 %v3344
        %v4346 = vpop.f32.mrf.mxu0
        %v4347 = vadd.f32 0.0, %v4346
        %v4348 = vpop.f32.mrf.mxu0
        %4349 = vmatprep.mubr.f32.mxu0 0.0
        %4350 = vmatmul.mubr.f32.gmra.mxu0 %v3573
        %v4351 = vpop.f32.mrf.mxu0
        %v4352 = vpop.f32.mrf.mxu0
        %4353 = vmatprep.mubr.f32.mxu0 0.0
        %4354 = vmatmul.mubr.f32.gmra.mxu0 %v3350
        %v4355 = vpop.f32.mrf.mxu0
        %v4356 = vadd.f32 0.0, %v4355
        %v4357 = vpop.f32.mrf.mxu0
        %4358 = vmatprep.mubr.f32.mxu0 0.0
        %4359 = vmatmul.mubr.f32.gmra.mxu0 %v3353
        %v4360 = vpop.f32.mrf.mxu0
        %v4361 = vadd.f32 0.0, %v4360
        %v4362 = vpop.f32.mrf.mxu0
        %4363 = vmatprep.mubr.f32.mxu0 0.0
        %4364 = vmatmul.mubr.f32.gmra.mxu0 %v3356
        %v4365 = vpop.f32.mrf.mxu0
        %v4366 = vadd.f32 0.0, %v4365
        %v4367 = vpop.f32.mrf.mxu0
        %4368 = vmatprep.mubr.f32.mxu0 0.0
        %4369 = vmatmul.mubr.f32.gmra.mxu0 %v3359
        %v4370 = vpop.f32.mrf.mxu0
        %v4371 = vadd.f32 0.0, %v4370
        %v4372 = vpop.f32.mrf.mxu0
        %4373 = vmatprep.mubr.f32.mxu0 0.0
        %4374 = vmatmul.mubr.f32.gmra.mxu0 %v3576
        %v4375 = vpop.f32.mrf.mxu0
        %v4376 = vpop.f32.mrf.mxu0
        %4377 = vmatprep.mubr.f32.mxu0 0.0
        %4378 = vmatmul.mubr.f32.gmra.mxu0 %v4001
        %v4379 = vpop.f32.mrf.mxu0
        %v4380 = vpop.f32.mrf.mxu0
        %4381 = vmatprep.mubr.f32.mxu0 0.0
        %4382 = vmatmul.mubr.f32.gmra.mxu0 %v4004
        %v4383 = vpop.f32.mrf.mxu0
        %v4384 = vpop.f32.mrf.mxu0
        %4385 = vmatprep.mubr.f32.mxu0 0.0
        %4386 = vmatmul.mubr.f32.gmra.mxu0 %v4007
        %v4387 = vpop.f32.mrf.mxu0
        %v4388 = vpop.f32.mrf.mxu0
        %4389 = vmatprep.mubr.f32.mxu0 0.0
        %4390 = vmatmul.mubr.f32.gmra.mxu0 %v4010
        %v4391 = vpop.f32.mrf.mxu0
        %v4392 = vpop.f32.mrf.mxu0
        %4393 = vmatprep.mubr.f32.mxu0 0.0
        %4394 = vmatmul.mubr.f32.gmra.mxu0 %v4215
        %v4395 = vpop.f32.mrf.mxu0
        %v4396 = vpop.f32.mrf.mxu0
        %4397 = vdwg.mxu0
        %v4398 = vadd.f32 %v4193, %v4284
        %v4399 = vadd.f32 %v4194, %v4289
        %v4400 = vadd.f32 %v4195, %v4294
        %v4401 = vadd.f32 %v4196, %v4299
        %v4402 = vadd.f32 %v4197, %v4308
        %v4403 = vadd.f32 %v4198, %v4313
        %v4404 = vadd.f32 %v4199, %v4318
        %v4405 = vadd.f32 %v4200, %v4323
        %v4406 = vadd.f32 %v4201, %v4332
        %v4407 = vadd.f32 %v4202, %v4337
        %v4408 = vadd.f32 %v4203, %v4342
        %v4409 = vadd.f32 %v4204, %v4347
        %v4410 = vadd.f32 %v4205, %v4356
        %v4411 = vadd.f32 %v4206, %v4361
        %v4412 = vadd.f32 %v4207, %v4366
        %v4413 = vadd.f32 %v4208, %v4371
        %s4414 = scalar_lea.vmem %s3, 160
        %v4415 = vld [vmem:[%s4414] sm:$0xff]
        %v4416 = vld [vmem:[%s4414 + $0x8] sm:$0xff]
        %v4417 = vld [vmem:[%s4414 + $0x10] sm:$0xff]
        %v4418 = vld [vmem:[%s4414 + $0x18] sm:$0xff]
        %v4420 = vsel %vm3285, %v3266, 0
        %4422 = vmatprep.subr.mxu0 0.0
        %4423 = vmatpush1.msra.mxu0 0.0
        %4424 = vmatprep.subr.mxu0 0.0
        %4425 = vmatpush1.msra.mxu0 0.0
        %4426 = vmatprep.subr.mxu0 0.0
        %4427 = vmatpush1.msra.mxu0 0.0
        %4428 = vmatprep.subr.mxu0 0.0
        %4429 = vmatpush1.msra.mxu0 0.0
        %4430 = vmatprep.subr.mxu0 0.0
        %4431 = vmatpush1.msra.mxu0 0.0
        %4432 = vmatprep.subr.mxu0 0.0
        %4433 = vmatpush1.msra.mxu0 0.0
        %4434 = vmatprep.subr.mxu0 0.0
        %4435 = vmatpush1.msra.mxu0 0.0
        %4436 = vmatprep.subr.mxu0 0.0
        %4437 = vmatpush1.msra.mxu0 0.0
        %4438 = vmatprep.subr.mxu0 0.0
        %4439 = vmatpush1.msra.mxu0 0.0
        %4440 = vmatprep.subr.mxu0 0.0
        %4441 = vmatpush1.msra.mxu0 0.0
        %4442 = vmatprep.subr.mxu0 0.0
        %4443 = vmatpush1.msra.mxu0 0.0
        %4444 = vmatprep.subr.mxu0 0.0
        %4445 = vmatpush1.msra.mxu0 0.0
        %4446 = vmatprep.subr.mxu0 0.0
        %4447 = vmatpush1.msra.mxu0 %v4418
        %4448 = vmatprep.subr.mxu0 0.0
        %4449 = vmatpush1.msra.mxu0 %v4417
        %4450 = vmatprep.subr.mxu0 0.0
        %4451 = vmatpush1.msra.mxu0 %v4416
        %4452 = vmatprep.subr.mxu0 0.0
        %4453 = vmatpush1.msra.mxu0 %v4415
        %4454 = vmatprep.subr.mxu0 0.0
        %4455 = vmatpush2.msra.mxu0 0.0
        %4456 = vmatprep.subr.mxu0 0.0
        %4457 = vmatpush2.msra.mxu0 0.0
        %4458 = vmatprep.subr.mxu0 0.0
        %4459 = vmatpush2.msra.mxu0 0.0
        %4460 = vmatprep.subr.mxu0 0.0
        %4461 = vmatpush2.msra.mxu0 0.0
        %4462 = vmatprep.subr.mxu0 0.0
        %4463 = vmatpush2.msra.mxu0 0.0
        %4464 = vmatprep.subr.mxu0 0.0
        %4465 = vmatpush2.msra.mxu0 0.0
        %4466 = vmatprep.subr.mxu0 0.0
        %4467 = vmatpush2.msra.mxu0 0.0
        %4468 = vmatprep.subr.mxu0 0.0
        %4469 = vmatpush2.msra.mxu0 0.0
        %4470 = vmatprep.subr.mxu0 0.0
        %4471 = vmatpush2.msra.mxu0 0.0
        %4472 = vmatprep.subr.mxu0 0.0
        %4473 = vmatpush2.msra.mxu0 0.0
        %4474 = vmatprep.subr.mxu0 0.0
        %4475 = vmatpush2.msra.mxu0 0.0
        %4476 = vmatprep.subr.mxu0 0.0
        %4477 = vmatpush2.msra.mxu0 0.0
        %4478 = vmatprep.subr.mxu0 0.0
        %4479 = vmatpush2.msra.mxu0 0.0
        %4480 = vmatprep.subr.mxu0 0.0
        %4481 = vmatpush2.msra.mxu0 0.0
        %4482 = vmatprep.subr.mxu0 0.0
        %4483 = vmatpush2.msra.mxu0 0.0
        %4484 = vmatprep.subr.mxu0 0.0
        %4485 = vmatpush2.msra.mxu0 0.0
        %4486 = vmatprep.mubr.f32.mxu0 0.0
        %4487 = vmatmul.mubr.f32.gmra.mxu0 %v3308
        %v4488 = vpop.f32.mrf.mxu0
        %v4489 = vadd.f32 0.0, %v4488
        %v4490 = vpop.f32.mrf.mxu0
        %4491 = vmatprep.mubr.f32.mxu0 0.0
        %4492 = vmatmul.mubr.f32.gmra.mxu0 %v3311
        %v4493 = vpop.f32.mrf.mxu0
        %v4494 = vadd.f32 0.0, %v4493
        %v4495 = vpop.f32.mrf.mxu0
        %4496 = vmatprep.mubr.f32.mxu0 0.0
        %4497 = vmatmul.mubr.f32.gmra.mxu0 %v3314
        %v4498 = vpop.f32.mrf.mxu0
        %v4499 = vadd.f32 0.0, %v4498
        %v4500 = vpop.f32.mrf.mxu0
        %4501 = vmatprep.mubr.f32.mxu0 0.0
        %4502 = vmatmul.mubr.f32.gmra.mxu0 %v3567
        %v4503 = vpop.f32.mrf.mxu0
        %v4504 = vadd.f32 0.0, %v4503
        %v4505 = vpop.f32.mrf.mxu0
        %4506 = vmatprep.mubr.f32.mxu0 0.0
        %4507 = vmatmul.mubr.f32.gmra.mxu0 %v3784
        %v4508 = vpop.f32.mrf.mxu0
        %v4509 = vpop.f32.mrf.mxu0
        %4510 = vmatprep.mubr.f32.mxu0 0.0
        %4511 = vmatmul.mubr.f32.gmra.mxu0 %v3323
        %v4512 = vpop.f32.mrf.mxu0
        %v4513 = vadd.f32 0.0, %v4512
        %v4514 = vpop.f32.mrf.mxu0
        %4515 = vmatprep.mubr.f32.mxu0 0.0
        %4516 = vmatmul.mubr.f32.gmra.mxu0 %v3326
        %v4517 = vpop.f32.mrf.mxu0
        %v4518 = vadd.f32 0.0, %v4517
        %v4519 = vpop.f32.mrf.mxu0
        %4520 = vmatprep.mubr.f32.mxu0 0.0
        %4521 = vmatmul.mubr.f32.gmra.mxu0 %v3329
        %v4522 = vpop.f32.mrf.mxu0
        %v4523 = vadd.f32 0.0, %v4522
        %v4524 = vpop.f32.mrf.mxu0
        %4525 = vmatprep.mubr.f32.mxu0 0.0
        %4526 = vmatmul.mubr.f32.gmra.mxu0 %v3570
        %v4527 = vpop.f32.mrf.mxu0
        %v4528 = vadd.f32 0.0, %v4527
        %v4529 = vpop.f32.mrf.mxu0
        %4530 = vmatprep.mubr.f32.mxu0 0.0
        %4531 = vmatmul.mubr.f32.gmra.mxu0 %v3787
        %v4532 = vpop.f32.mrf.mxu0
        %v4533 = vpop.f32.mrf.mxu0
        %4534 = vmatprep.mubr.f32.mxu0 0.0
        %4535 = vmatmul.mubr.f32.gmra.mxu0 %v3338
        %v4536 = vpop.f32.mrf.mxu0
        %v4537 = vadd.f32 0.0, %v4536
        %v4538 = vpop.f32.mrf.mxu0
        %4539 = vmatprep.mubr.f32.mxu0 0.0
        %4540 = vmatmul.mubr.f32.gmra.mxu0 %v3341
        %v4541 = vpop.f32.mrf.mxu0
        %v4542 = vadd.f32 0.0, %v4541
        %v4543 = vpop.f32.mrf.mxu0
        %4544 = vmatprep.mubr.f32.mxu0 0.0
        %4545 = vmatmul.mubr.f32.gmra.mxu0 %v3344
        %v4546 = vpop.f32.mrf.mxu0
        %v4547 = vadd.f32 0.0, %v4546
        %v4548 = vpop.f32.mrf.mxu0
        %4549 = vmatprep.mubr.f32.mxu0 0.0
        %4550 = vmatmul.mubr.f32.gmra.mxu0 %v3573
        %v4551 = vpop.f32.mrf.mxu0
        %v4552 = vadd.f32 0.0, %v4551
        %v4553 = vpop.f32.mrf.mxu0
        %4554 = vmatprep.mubr.f32.mxu0 0.0
        %4555 = vmatmul.mubr.f32.gmra.mxu0 %v3790
        %v4556 = vpop.f32.mrf.mxu0
        %v4557 = vpop.f32.mrf.mxu0
        %4558 = vmatprep.mubr.f32.mxu0 0.0
        %4559 = vmatmul.mubr.f32.gmra.mxu0 %v3353
        %v4560 = vpop.f32.mrf.mxu0
        %v4561 = vadd.f32 0.0, %v4560
        %v4562 = vpop.f32.mrf.mxu0
        %4563 = vmatprep.mubr.f32.mxu0 0.0
        %4564 = vmatmul.mubr.f32.gmra.mxu0 %v3356
        %v4565 = vpop.f32.mrf.mxu0
        %v4566 = vadd.f32 0.0, %v4565
        %v4567 = vpop.f32.mrf.mxu0
        %4568 = vmatprep.mubr.f32.mxu0 0.0
        %4569 = vmatmul.mubr.f32.gmra.mxu0 %v3359
        %v4570 = vpop.f32.mrf.mxu0
        %v4571 = vadd.f32 0.0, %v4570
        %v4572 = vpop.f32.mrf.mxu0
        %4573 = vmatprep.mubr.f32.mxu0 0.0
        %4574 = vmatmul.mubr.f32.gmra.mxu0 %v3576
        %v4575 = vpop.f32.mrf.mxu0
        %v4576 = vadd.f32 0.0, %v4575
        %v4577 = vpop.f32.mrf.mxu0
        %4578 = vmatprep.mubr.f32.mxu0 0.0
        %4579 = vmatmul.mubr.f32.gmra.mxu0 %v3793
        %v4580 = vpop.f32.mrf.mxu0
        %v4581 = vpop.f32.mrf.mxu0
        %4582 = vmatprep.mubr.f32.mxu0 0.0
        %4583 = vmatmul.mubr.f32.gmra.mxu0 %v4004
        %v4584 = vpop.f32.mrf.mxu0
        %v4585 = vpop.f32.mrf.mxu0
        %4586 = vmatprep.mubr.f32.mxu0 0.0
        %4587 = vmatmul.mubr.f32.gmra.mxu0 %v4007
        %v4588 = vpop.f32.mrf.mxu0
        %v4589 = vpop.f32.mrf.mxu0
        %4590 = vmatprep.mubr.f32.mxu0 0.0
        %4591 = vmatmul.mubr.f32.gmra.mxu0 %v4010
        %v4592 = vpop.f32.mrf.mxu0
        %v4593 = vpop.f32.mrf.mxu0
        %4594 = vmatprep.mubr.f32.mxu0 0.0
        %4595 = vmatmul.mubr.f32.gmra.mxu0 %v4215
        %v4596 = vpop.f32.mrf.mxu0
        %v4597 = vpop.f32.mrf.mxu0
        %4598 = vmatprep.mubr.f32.mxu0 0.0
        %4599 = vmatmul.mubr.f32.gmra.mxu0 %v4420
        %v4600 = vpop.f32.mrf.mxu0
        %v4601 = vpop.f32.mrf.mxu0
        %4602 = vdwg.mxu0
        %v4603 = vadd.f32 %v4398, %v4489
        %v4604 = vadd.f32 %v4399, %v4494
        %v4605 = vadd.f32 %v4400, %v4499
        %v4606 = vadd.f32 %v4401, %v4504
        %v4607 = vadd.f32 %v4402, %v4513
        %v4608 = vadd.f32 %v4403, %v4518
        %v4609 = vadd.f32 %v4404, %v4523
        %v4610 = vadd.f32 %v4405, %v4528
        %v4611 = vadd.f32 %v4406, %v4537
        %v4612 = vadd.f32 %v4407, %v4542
        %v4613 = vadd.f32 %v4408, %v4547
        %v4614 = vadd.f32 %v4409, %v4552
        %v4615 = vadd.f32 %v4410, %v4561
        %v4616 = vadd.f32 %v4411, %v4566
        %v4617 = vadd.f32 %v4412, %v4571
        %v4618 = vadd.f32 %v4413, %v4576
        %s4619 = scalar_lea.vmem %s3, 192
        %v4620 = vld [vmem:[%s4619] sm:$0xff]
        %v4621 = vld [vmem:[%s4619 + $0x8] sm:$0xff]
        %v4622 = vld [vmem:[%s4619 + $0x10] sm:$0xff]
        %v4623 = vld [vmem:[%s4619 + $0x18] sm:$0xff]
        %v4625 = vsel %vm3285, %v3267, 0
        %v4628 = vsel %vm3285, %v3268, 0
        %v4631 = vsel %vm3285, %v3269, 0
        %v4634 = vsel %vm3285, %v3270, 0
        %v4637 = vsel %vm3285, %v3271, 0
        %4639 = vmatprep.subr.mxu0 0.0
        %4640 = vmatpush1.msra.mxu0 0.0
        %4641 = vmatprep.subr.mxu0 0.0
        %4642 = vmatpush1.msra.mxu0 0.0
        %4643 = vmatprep.subr.mxu0 0.0
        %4644 = vmatpush1.msra.mxu0 0.0
        %4645 = vmatprep.subr.mxu0 0.0
        %4646 = vmatpush1.msra.mxu0 0.0
        %4647 = vmatprep.subr.mxu0 0.0
        %4648 = vmatpush1.msra.mxu0 0.0
        %4649 = vmatprep.subr.mxu0 0.0
        %4650 = vmatpush1.msra.mxu0 0.0
        %4651 = vmatprep.subr.mxu0 0.0
        %4652 = vmatpush1.msra.mxu0 0.0
        %4653 = vmatprep.subr.mxu0 0.0
        %4654 = vmatpush1.msra.mxu0 0.0
        %4655 = vmatprep.subr.mxu0 0.0
        %4656 = vmatpush1.msra.mxu0 0.0
        %4657 = vmatprep.subr.mxu0 0.0
        %4658 = vmatpush1.msra.mxu0 0.0
        %4659 = vmatprep.subr.mxu0 0.0
        %4660 = vmatpush1.msra.mxu0 0.0
        %4661 = vmatprep.subr.mxu0 0.0
        %4662 = vmatpush1.msra.mxu0 0.0
        %4663 = vmatprep.subr.mxu0 0.0
        %4664 = vmatpush1.msra.mxu0 %v4623
        %4665 = vmatprep.subr.mxu0 0.0
        %4666 = vmatpush1.msra.mxu0 %v4622
        %4667 = vmatprep.subr.mxu0 0.0
        %4668 = vmatpush1.msra.mxu0 %v4621
        %4669 = vmatprep.subr.mxu0 0.0
        %4670 = vmatpush1.msra.mxu0 %v4620
        %4671 = vmatprep.subr.mxu0 0.0
        %4672 = vmatpush2.msra.mxu0 0.0
        %4673 = vmatprep.subr.mxu0 0.0
        %4674 = vmatpush2.msra.mxu0 0.0
        %4675 = vmatprep.subr.mxu0 0.0
        %4676 = vmatpush2.msra.mxu0 0.0
        %4677 = vmatprep.subr.mxu0 0.0
        %4678 = vmatpush2.msra.mxu0 0.0
        %4679 = vmatprep.subr.mxu0 0.0
        %4680 = vmatpush2.msra.mxu0 0.0
        %4681 = vmatprep.subr.mxu0 0.0
        %4682 = vmatpush2.msra.mxu0 0.0
        %4683 = vmatprep.subr.mxu0 0.0
        %4684 = vmatpush2.msra.mxu0 0.0
        %4685 = vmatprep.subr.mxu0 0.0
        %4686 = vmatpush2.msra.mxu0 0.0
        %4687 = vmatprep.subr.mxu0 0.0
        %4688 = vmatpush2.msra.mxu0 0.0
        %4689 = vmatprep.subr.mxu0 0.0
        %4690 = vmatpush2.msra.mxu0 0.0
        %4691 = vmatprep.subr.mxu0 0.0
        %4692 = vmatpush2.msra.mxu0 0.0
        %4693 = vmatprep.subr.mxu0 0.0
        %4694 = vmatpush2.msra.mxu0 0.0
        %4695 = vmatprep.subr.mxu0 0.0
        %4696 = vmatpush2.msra.mxu0 0.0
        %4697 = vmatprep.subr.mxu0 0.0
        %4698 = vmatpush2.msra.mxu0 0.0
        %4699 = vmatprep.subr.mxu0 0.0
        %4700 = vmatpush2.msra.mxu0 0.0
        %4701 = vmatprep.subr.mxu0 0.0
        %4702 = vmatpush2.msra.mxu0 0.0
        %4703 = vmatprep.mubr.f32.mxu0 0.0
        %4704 = vmatmul.mubr.f32.gmra.mxu0 %v3317
        %v4705 = vpop.f32.mrf.mxu0
        %v4706 = vadd.f32 0.0, %v4705
        %v4707 = vpop.f32.mrf.mxu0
        %4708 = vmatprep.mubr.f32.mxu0 0.0
        %4709 = vmatmul.mubr.f32.gmra.mxu0 %v3320
        %v4710 = vpop.f32.mrf.mxu0
        %v4711 = vadd.f32 0.0, %v4710
        %v4712 = vpop.f32.mrf.mxu0
        %4713 = vmatprep.mubr.f32.mxu0 0.0
        %4714 = vmatmul.mubr.f32.gmra.mxu0 %v3323
        %v4715 = vpop.f32.mrf.mxu0
        %v4716 = vadd.f32 0.0, %v4715
        %v4717 = vpop.f32.mrf.mxu0
        %4718 = vmatprep.mubr.f32.mxu0 0.0
        %4719 = vmatmul.mubr.f32.gmra.mxu0 %v3326
        %v4720 = vpop.f32.mrf.mxu0
        %v4721 = vadd.f32 0.0, %v4720
        %v4722 = vpop.f32.mrf.mxu0
        %4723 = vmatprep.mubr.f32.mxu0 0.0
        %4724 = vmatmul.mubr.f32.gmra.mxu0 %v3329
        %v4725 = vpop.f32.mrf.mxu0
        %v4726 = vpop.f32.mrf.mxu0
        %4727 = vmatprep.mubr.f32.mxu0 0.0
        %4728 = vmatmul.mubr.f32.gmra.mxu0 %v3332
        %v4729 = vpop.f32.mrf.mxu0
        %v4730 = vadd.f32 0.0, %v4729
        %v4731 = vpop.f32.mrf.mxu0
        %4732 = vmatprep.mubr.f32.mxu0 0.0
        %4733 = vmatmul.mubr.f32.gmra.mxu0 %v3335
        %v4734 = vpop.f32.mrf.mxu0
        %v4735 = vadd.f32 0.0, %v4734
        %v4736 = vpop.f32.mrf.mxu0
        %4737 = vmatprep.mubr.f32.mxu0 0.0
        %4738 = vmatmul.mubr.f32.gmra.mxu0 %v3338
        %v4739 = vpop.f32.mrf.mxu0
        %v4740 = vadd.f32 0.0, %v4739
        %v4741 = vpop.f32.mrf.mxu0
        %4742 = vmatprep.mubr.f32.mxu0 0.0
        %4743 = vmatmul.mubr.f32.gmra.mxu0 %v3341
        %v4744 = vpop.f32.mrf.mxu0
        %v4745 = vadd.f32 0.0, %v4744
        %v4746 = vpop.f32.mrf.mxu0
        %4747 = vmatprep.mubr.f32.mxu0 0.0
        %4748 = vmatmul.mubr.f32.gmra.mxu0 %v3344
        %v4749 = vpop.f32.mrf.mxu0
        %v4750 = vpop.f32.mrf.mxu0
        %4751 = vmatprep.mubr.f32.mxu0 0.0
        %4752 = vmatmul.mubr.f32.gmra.mxu0 %v3347
        %v4753 = vpop.f32.mrf.mxu0
        %v4754 = vadd.f32 0.0, %v4753
        %v4755 = vpop.f32.mrf.mxu0
        %4756 = vmatprep.mubr.f32.mxu0 0.0
        %4757 = vmatmul.mubr.f32.gmra.mxu0 %v3350
        %v4758 = vpop.f32.mrf.mxu0
        %v4759 = vadd.f32 0.0, %v4758
        %v4760 = vpop.f32.mrf.mxu0
        %4761 = vmatprep.mubr.f32.mxu0 0.0
        %4762 = vmatmul.mubr.f32.gmra.mxu0 %v3353
        %v4763 = vpop.f32.mrf.mxu0
        %v4764 = vadd.f32 0.0, %v4763
        %v4765 = vpop.f32.mrf.mxu0
        %4766 = vmatprep.mubr.f32.mxu0 0.0
        %4767 = vmatmul.mubr.f32.gmra.mxu0 %v3356
        %v4768 = vpop.f32.mrf.mxu0
        %v4769 = vadd.f32 0.0, %v4768
        %v4770 = vpop.f32.mrf.mxu0
        %4771 = vmatprep.mubr.f32.mxu0 0.0
        %4772 = vmatmul.mubr.f32.gmra.mxu0 %v3359
        %v4773 = vpop.f32.mrf.mxu0
        %v4774 = vpop.f32.mrf.mxu0
        %4775 = vmatprep.mubr.f32.mxu0 0.0
        %4776 = vmatmul.mubr.f32.gmra.mxu0 %v3998
        %v4777 = vpop.f32.mrf.mxu0
        %v4778 = vadd.f32 0.0, %v4777
        %v4779 = vpop.f32.mrf.mxu0
        %4780 = vmatprep.mubr.f32.mxu0 0.0
        %4781 = vmatmul.mubr.f32.gmra.mxu0 %v4001
        %v4782 = vpop.f32.mrf.mxu0
        %v4783 = vadd.f32 0.0, %v4782
        %v4784 = vpop.f32.mrf.mxu0
        %4785 = vmatprep.mubr.f32.mxu0 0.0
        %4786 = vmatmul.mubr.f32.gmra.mxu0 %v4004
        %v4787 = vpop.f32.mrf.mxu0
        %v4788 = vadd.f32 0.0, %v4787
        %v4789 = vpop.f32.mrf.mxu0
        %4790 = vmatprep.mubr.f32.mxu0 0.0
        %4791 = vmatmul.mubr.f32.gmra.mxu0 %v4007
        %v4792 = vpop.f32.mrf.mxu0
        %v4793 = vadd.f32 0.0, %v4792
        %v4794 = vpop.f32.mrf.mxu0
        %4795 = vmatprep.mubr.f32.mxu0 0.0
        %4796 = vmatmul.mubr.f32.gmra.mxu0 %v4010
        %v4797 = vpop.f32.mrf.mxu0
        %v4798 = vpop.f32.mrf.mxu0
        %4799 = vmatprep.mubr.f32.mxu0 0.0
        %4800 = vmatmul.mubr.f32.gmra.mxu0 %v4625
        %v4801 = vpop.f32.mrf.mxu0
        %v4802 = vpop.f32.mrf.mxu0
        %4803 = vmatprep.mubr.f32.mxu0 0.0
        %4804 = vmatmul.mubr.f32.gmra.mxu0 %v4628
        %v4805 = vpop.f32.mrf.mxu0
        %v4806 = vpop.f32.mrf.mxu0
        %4807 = vmatprep.mubr.f32.mxu0 0.0
        %4808 = vmatmul.mubr.f32.gmra.mxu0 %v4631
        %v4809 = vpop.f32.mrf.mxu0
        %v4810 = vpop.f32.mrf.mxu0
        %4811 = vmatprep.mubr.f32.mxu0 0.0
        %4812 = vmatmul.mubr.f32.gmra.mxu0 %v4634
        %v4813 = vpop.f32.mrf.mxu0
        %v4814 = vpop.f32.mrf.mxu0
        %4815 = vmatprep.mubr.f32.mxu0 0.0
        %4816 = vmatmul.mubr.f32.gmra.mxu0 %v4637
        %v4817 = vpop.f32.mrf.mxu0
        %v4818 = vpop.f32.mrf.mxu0
        %4819 = vdwg.mxu0
        %v4820 = vadd.f32 %v4603, %v4706
        %v4821 = vadd.f32 %v4604, %v4711
        %v4822 = vadd.f32 %v4605, %v4716
        %v4823 = vadd.f32 %v4606, %v4721
        %v4824 = vadd.f32 %v4607, %v4730
        %v4825 = vadd.f32 %v4608, %v4735
        %v4826 = vadd.f32 %v4609, %v4740
        %v4827 = vadd.f32 %v4610, %v4745
        %v4828 = vadd.f32 %v4611, %v4754
        %v4829 = vadd.f32 %v4612, %v4759
        %v4830 = vadd.f32 %v4613, %v4764
        %v4831 = vadd.f32 %v4614, %v4769
        %v4832 = vadd.f32 %v4615, %v4778
        %v4833 = vadd.f32 %v4616, %v4783
        %v4834 = vadd.f32 %v4617, %v4788
        %v4835 = vadd.f32 %v4618, %v4793
        %s4836 = scalar_lea.vmem %s3, 224
        %v4837 = vld [vmem:[%s4836] sm:$0xff]
        %v4838 = vld [vmem:[%s4836 + $0x8] sm:$0xff]
        %v4839 = vld [vmem:[%s4836 + $0x10] sm:$0xff]
        %v4840 = vld [vmem:[%s4836 + $0x18] sm:$0xff]
        %v4842 = vsel %vm3285, %v3272, 0
        %4844 = vmatprep.subr.mxu0 0.0
        %4845 = vmatpush1.msra.mxu0 0.0
        %4846 = vmatprep.subr.mxu0 0.0
        %4847 = vmatpush1.msra.mxu0 0.0
        %4848 = vmatprep.subr.mxu0 0.0
        %4849 = vmatpush1.msra.mxu0 0.0
        %4850 = vmatprep.subr.mxu0 0.0
        %4851 = vmatpush1.msra.mxu0 0.0
        %4852 = vmatprep.subr.mxu0 0.0
        %4853 = vmatpush1.msra.mxu0 0.0
        %4854 = vmatprep.subr.mxu0 0.0
        %4855 = vmatpush1.msra.mxu0 0.0
        %4856 = vmatprep.subr.mxu0 0.0
        %4857 = vmatpush1.msra.mxu0 0.0
        %4858 = vmatprep.subr.mxu0 0.0
        %4859 = vmatpush1.msra.mxu0 0.0
        %4860 = vmatprep.subr.mxu0 0.0
        %4861 = vmatpush1.msra.mxu0 0.0
        %4862 = vmatprep.subr.mxu0 0.0
        %4863 = vmatpush1.msra.mxu0 0.0
        %4864 = vmatprep.subr.mxu0 0.0
        %4865 = vmatpush1.msra.mxu0 0.0
        %4866 = vmatprep.subr.mxu0 0.0
        %4867 = vmatpush1.msra.mxu0 0.0
        %4868 = vmatprep.subr.mxu0 0.0
        %4869 = vmatpush1.msra.mxu0 %v4840
        %4870 = vmatprep.subr.mxu0 0.0
        %4871 = vmatpush1.msra.mxu0 %v4839
        %4872 = vmatprep.subr.mxu0 0.0
        %4873 = vmatpush1.msra.mxu0 %v4838
        %4874 = vmatprep.subr.mxu0 0.0
        %4875 = vmatpush1.msra.mxu0 %v4837
        %4876 = vmatprep.subr.mxu0 0.0
        %4877 = vmatpush2.msra.mxu0 0.0
        %4878 = vmatprep.subr.mxu0 0.0
        %4879 = vmatpush2.msra.mxu0 0.0
        %4880 = vmatprep.subr.mxu0 0.0
        %4881 = vmatpush2.msra.mxu0 0.0
        %4882 = vmatprep.subr.mxu0 0.0
        %4883 = vmatpush2.msra.mxu0 0.0
        %4884 = vmatprep.subr.mxu0 0.0
        %4885 = vmatpush2.msra.mxu0 0.0
        %4886 = vmatprep.subr.mxu0 0.0
        %4887 = vmatpush2.msra.mxu0 0.0
        %4888 = vmatprep.subr.mxu0 0.0
        %4889 = vmatpush2.msra.mxu0 0.0
        %4890 = vmatprep.subr.mxu0 0.0
        %4891 = vmatpush2.msra.mxu0 0.0
        %4892 = vmatprep.subr.mxu0 0.0
        %4893 = vmatpush2.msra.mxu0 0.0
        %4894 = vmatprep.subr.mxu0 0.0
        %4895 = vmatpush2.msra.mxu0 0.0
        %4896 = vmatprep.subr.mxu0 0.0
        %4897 = vmatpush2.msra.mxu0 0.0
        %4898 = vmatprep.subr.mxu0 0.0
        %4899 = vmatpush2.msra.mxu0 0.0
        %4900 = vmatprep.subr.mxu0 0.0
        %4901 = vmatpush2.msra.mxu0 0.0
        %4902 = vmatprep.subr.mxu0 0.0
        %4903 = vmatpush2.msra.mxu0 0.0
        %4904 = vmatprep.subr.mxu0 0.0
        %4905 = vmatpush2.msra.mxu0 0.0
        %4906 = vmatprep.subr.mxu0 0.0
        %4907 = vmatpush2.msra.mxu0 0.0
        %4908 = vmatprep.mubr.f32.mxu0 0.0
        %4909 = vmatmul.mubr.f32.gmra.mxu0 %v3320
        %v4910 = vpop.f32.mrf.mxu0
        %v4911 = vadd.f32 0.0, %v4910
        %v4912 = vpop.f32.mrf.mxu0
        %4913 = vmatprep.mubr.f32.mxu0 0.0
        %4914 = vmatmul.mubr.f32.gmra.mxu0 %v3323
        %v4915 = vpop.f32.mrf.mxu0
        %v4916 = vadd.f32 0.0, %v4915
        %v4917 = vpop.f32.mrf.mxu0
        %4918 = vmatprep.mubr.f32.mxu0 0.0
        %4919 = vmatmul.mubr.f32.gmra.mxu0 %v3326
        %v4920 = vpop.f32.mrf.mxu0
        %v4921 = vadd.f32 0.0, %v4920
        %v4922 = vpop.f32.mrf.mxu0
        %4923 = vmatprep.mubr.f32.mxu0 0.0
        %4924 = vmatmul.mubr.f32.gmra.mxu0 %v3329
        %v4925 = vpop.f32.mrf.mxu0
        %v4926 = vadd.f32 0.0, %v4925
        %v4927 = vpop.f32.mrf.mxu0
        %4928 = vmatprep.mubr.f32.mxu0 0.0
        %4929 = vmatmul.mubr.f32.gmra.mxu0 %v3570
        %v4930 = vpop.f32.mrf.mxu0
        %v4931 = vpop.f32.mrf.mxu0
        %4932 = vmatprep.mubr.f32.mxu0 0.0
        %4933 = vmatmul.mubr.f32.gmra.mxu0 %v3335
        %v4934 = vpop.f32.mrf.mxu0
        %v4935 = vadd.f32 0.0, %v4934
        %v4936 = vpop.f32.mrf.mxu0
        %4937 = vmatprep.mubr.f32.mxu0 0.0
        %4938 = vmatmul.mubr.f32.gmra.mxu0 %v3338
        %v4939 = vpop.f32.mrf.mxu0
        %v4940 = vadd.f32 0.0, %v4939
        %v4941 = vpop.f32.mrf.mxu0
        %4942 = vmatprep.mubr.f32.mxu0 0.0
        %4943 = vmatmul.mubr.f32.gmra.mxu0 %v3341
        %v4944 = vpop.f32.mrf.mxu0
        %v4945 = vadd.f32 0.0, %v4944
        %v4946 = vpop.f32.mrf.mxu0
        %4947 = vmatprep.mubr.f32.mxu0 0.0
        %4948 = vmatmul.mubr.f32.gmra.mxu0 %v3344
        %v4949 = vpop.f32.mrf.mxu0
        %v4950 = vadd.f32 0.0, %v4949
        %v4951 = vpop.f32.mrf.mxu0
        %4952 = vmatprep.mubr.f32.mxu0 0.0
        %4953 = vmatmul.mubr.f32.gmra.mxu0 %v3573
        %v4954 = vpop.f32.mrf.mxu0
        %v4955 = vpop.f32.mrf.mxu0
        %4956 = vmatprep.mubr.f32.mxu0 0.0
        %4957 = vmatmul.mubr.f32.gmra.mxu0 %v3350
        %v4958 = vpop.f32.mrf.mxu0
        %v4959 = vadd.f32 0.0, %v4958
        %v4960 = vpop.f32.mrf.mxu0
        %4961 = vmatprep.mubr.f32.mxu0 0.0
        %4962 = vmatmul.mubr.f32.gmra.mxu0 %v3353
        %v4963 = vpop.f32.mrf.mxu0
        %v4964 = vadd.f32 0.0, %v4963
        %v4965 = vpop.f32.mrf.mxu0
        %4966 = vmatprep.mubr.f32.mxu0 0.0
        %4967 = vmatmul.mubr.f32.gmra.mxu0 %v3356
        %v4968 = vpop.f32.mrf.mxu0
        %v4969 = vadd.f32 0.0, %v4968
        %v4970 = vpop.f32.mrf.mxu0
        %4971 = vmatprep.mubr.f32.mxu0 0.0
        %4972 = vmatmul.mubr.f32.gmra.mxu0 %v3359
        %v4973 = vpop.f32.mrf.mxu0
        %v4974 = vadd.f32 0.0, %v4973
        %v4975 = vpop.f32.mrf.mxu0
        %4976 = vmatprep.mubr.f32.mxu0 0.0
        %4977 = vmatmul.mubr.f32.gmra.mxu0 %v3576
        %v4978 = vpop.f32.mrf.mxu0
        %v4979 = vpop.f32.mrf.mxu0
        %4980 = vmatprep.mubr.f32.mxu0 0.0
        %4981 = vmatmul.mubr.f32.gmra.mxu0 %v4001
        %v4982 = vpop.f32.mrf.mxu0
        %v4983 = vadd.f32 0.0, %v4982
        %v4984 = vpop.f32.mrf.mxu0
        %4985 = vmatprep.mubr.f32.mxu0 0.0
        %4986 = vmatmul.mubr.f32.gmra.mxu0 %v4004
        %v4987 = vpop.f32.mrf.mxu0
        %v4988 = vadd.f32 0.0, %v4987
        %v4989 = vpop.f32.mrf.mxu0
        %4990 = vmatprep.mubr.f32.mxu0 0.0
        %4991 = vmatmul.mubr.f32.gmra.mxu0 %v4007
        %v4992 = vpop.f32.mrf.mxu0
        %v4993 = vadd.f32 0.0, %v4992
        %v4994 = vpop.f32.mrf.mxu0
        %4995 = vmatprep.mubr.f32.mxu0 0.0
        %4996 = vmatmul.mubr.f32.gmra.mxu0 %v4010
        %v4997 = vpop.f32.mrf.mxu0
        %v4998 = vadd.f32 0.0, %v4997
        %v4999 = vpop.f32.mrf.mxu0
        %5000 = vmatprep.mubr.f32.mxu0 0.0
        %5001 = vmatmul.mubr.f32.gmra.mxu0 %v4215
        %v5002 = vpop.f32.mrf.mxu0
        %v5003 = vpop.f32.mrf.mxu0
        %5004 = vmatprep.mubr.f32.mxu0 0.0
        %5005 = vmatmul.mubr.f32.gmra.mxu0 %v4628
        %v5006 = vpop.f32.mrf.mxu0
        %v5007 = vpop.f32.mrf.mxu0
        %5008 = vmatprep.mubr.f32.mxu0 0.0
        %5009 = vmatmul.mubr.f32.gmra.mxu0 %v4631
        %v5010 = vpop.f32.mrf.mxu0
        %v5011 = vpop.f32.mrf.mxu0
        %5012 = vmatprep.mubr.f32.mxu0 0.0
        %5013 = vmatmul.mubr.f32.gmra.mxu0 %v4634
        %v5014 = vpop.f32.mrf.mxu0
        %v5015 = vpop.f32.mrf.mxu0
        %5016 = vmatprep.mubr.f32.mxu0 0.0
        %5017 = vmatmul.mubr.f32.gmra.mxu0 %v4637
        %v5018 = vpop.f32.mrf.mxu0
        %v5019 = vpop.f32.mrf.mxu0
        %5020 = vmatprep.mubr.f32.mxu0 0.0
        %5021 = vmatmul.mubr.f32.gmra.mxu0 %v4842
        %v5022 = vpop.f32.mrf.mxu0
        %v5023 = vpop.f32.mrf.mxu0
        %5024 = vdwg.mxu0
        %v5025 = vadd.f32 %v4820, %v4911
        %v5026 = vadd.f32 %v4821, %v4916
        %v5027 = vadd.f32 %v4822, %v4921
        %v5028 = vadd.f32 %v4823, %v4926
        %v5029 = vadd.f32 %v4824, %v4935
        %v5030 = vadd.f32 %v4825, %v4940
        %v5031 = vadd.f32 %v4826, %v4945
        %v5032 = vadd.f32 %v4827, %v4950
        %v5033 = vadd.f32 %v4828, %v4959
        %v5034 = vadd.f32 %v4829, %v4964
        %v5035 = vadd.f32 %v4830, %v4969
        %v5036 = vadd.f32 %v4831, %v4974
        %v5037 = vadd.f32 %v4832, %v4983
        %v5038 = vadd.f32 %v4833, %v4988
        %v5039 = vadd.f32 %v4834, %v4993
        %v5040 = vadd.f32 %v4835, %v4998
        %s5041 = scalar_lea.vmem %s3, 256
        %v5042 = vld [vmem:[%s5041] sm:$0xff]
        %v5043 = vld [vmem:[%s5041 + $0x8] sm:$0xff]
        %v5044 = vld [vmem:[%s5041 + $0x10] sm:$0xff]
        %v5045 = vld [vmem:[%s5041 + $0x18] sm:$0xff]
        %v5047 = vsel %vm3285, %v3273, 0
        %5049 = vmatprep.subr.mxu0 0.0
        %5050 = vmatpush1.msra.mxu0 0.0
        %5051 = vmatprep.subr.mxu0 0.0
        %5052 = vmatpush1.msra.mxu0 0.0
        %5053 = vmatprep.subr.mxu0 0.0
        %5054 = vmatpush1.msra.mxu0 0.0
        %5055 = vmatprep.subr.mxu0 0.0
        %5056 = vmatpush1.msra.mxu0 0.0
        %5057 = vmatprep.subr.mxu0 0.0
        %5058 = vmatpush1.msra.mxu0 0.0
        %5059 = vmatprep.subr.mxu0 0.0
        %5060 = vmatpush1.msra.mxu0 0.0
        %5061 = vmatprep.subr.mxu0 0.0
        %5062 = vmatpush1.msra.mxu0 0.0
        %5063 = vmatprep.subr.mxu0 0.0
        %5064 = vmatpush1.msra.mxu0 0.0
        %5065 = vmatprep.subr.mxu0 0.0
        %5066 = vmatpush1.msra.mxu0 0.0
        %5067 = vmatprep.subr.mxu0 0.0
        %5068 = vmatpush1.msra.mxu0 0.0
        %5069 = vmatprep.subr.mxu0 0.0
        %5070 = vmatpush1.msra.mxu0 0.0
        %5071 = vmatprep.subr.mxu0 0.0
        %5072 = vmatpush1.msra.mxu0 0.0
        %5073 = vmatprep.subr.mxu0 0.0
        %5074 = vmatpush1.msra.mxu0 %v5045
        %5075 = vmatprep.subr.mxu0 0.0
        %5076 = vmatpush1.msra.mxu0 %v5044
        %5077 = vmatprep.subr.mxu0 0.0
        %5078 = vmatpush1.msra.mxu0 %v5043
        %5079 = vmatprep.subr.mxu0 0.0
        %5080 = vmatpush1.msra.mxu0 %v5042
        %5081 = vmatprep.subr.mxu0 0.0
        %5082 = vmatpush2.msra.mxu0 0.0
        %5083 = vmatprep.subr.mxu0 0.0
        %5084 = vmatpush2.msra.mxu0 0.0
        %5085 = vmatprep.subr.mxu0 0.0
        %5086 = vmatpush2.msra.mxu0 0.0
        %5087 = vmatprep.subr.mxu0 0.0
        %5088 = vmatpush2.msra.mxu0 0.0
        %5089 = vmatprep.subr.mxu0 0.0
        %5090 = vmatpush2.msra.mxu0 0.0
        %5091 = vmatprep.subr.mxu0 0.0
        %5092 = vmatpush2.msra.mxu0 0.0
        %5093 = vmatprep.subr.mxu0 0.0
        %5094 = vmatpush2.msra.mxu0 0.0
        %5095 = vmatprep.subr.mxu0 0.0
        %5096 = vmatpush2.msra.mxu0 0.0
        %5097 = vmatprep.subr.mxu0 0.0
        %5098 = vmatpush2.msra.mxu0 0.0
        %5099 = vmatprep.subr.mxu0 0.0
        %5100 = vmatpush2.msra.mxu0 0.0
        %5101 = vmatprep.subr.mxu0 0.0
        %5102 = vmatpush2.msra.mxu0 0.0
        %5103 = vmatprep.subr.mxu0 0.0
        %5104 = vmatpush2.msra.mxu0 0.0
        %5105 = vmatprep.subr.mxu0 0.0
        %5106 = vmatpush2.msra.mxu0 0.0
        %5107 = vmatprep.subr.mxu0 0.0
        %5108 = vmatpush2.msra.mxu0 0.0
        %5109 = vmatprep.subr.mxu0 0.0
        %5110 = vmatpush2.msra.mxu0 0.0
        %5111 = vmatprep.subr.mxu0 0.0
        %5112 = vmatpush2.msra.mxu0 0.0
        %5113 = vmatprep.mubr.f32.mxu0 0.0
        %5114 = vmatmul.mubr.f32.gmra.mxu0 %v3323
        %v5115 = vpop.f32.mrf.mxu0
        %v5116 = vadd.f32 0.0, %v5115
        %v5117 = vpop.f32.mrf.mxu0
        %5118 = vmatprep.mubr.f32.mxu0 0.0
        %5119 = vmatmul.mubr.f32.gmra.mxu0 %v3326
        %v5120 = vpop.f32.mrf.mxu0
        %v5121 = vadd.f32 0.0, %v5120
        %v5122 = vpop.f32.mrf.mxu0
        %5123 = vmatprep.mubr.f32.mxu0 0.0
        %5124 = vmatmul.mubr.f32.gmra.mxu0 %v3329
        %v5125 = vpop.f32.mrf.mxu0
        %v5126 = vadd.f32 0.0, %v5125
        %v5127 = vpop.f32.mrf.mxu0
        %5128 = vmatprep.mubr.f32.mxu0 0.0
        %5129 = vmatmul.mubr.f32.gmra.mxu0 %v3570
        %v5130 = vpop.f32.mrf.mxu0
        %v5131 = vadd.f32 0.0, %v5130
        %v5132 = vpop.f32.mrf.mxu0
        %5133 = vmatprep.mubr.f32.mxu0 0.0
        %5134 = vmatmul.mubr.f32.gmra.mxu0 %v3787
        %v5135 = vpop.f32.mrf.mxu0
        %v5136 = vpop.f32.mrf.mxu0
        %5137 = vmatprep.mubr.f32.mxu0 0.0
        %5138 = vmatmul.mubr.f32.gmra.mxu0 %v3338
        %v5139 = vpop.f32.mrf.mxu0
        %v5140 = vadd.f32 0.0, %v5139
        %v5141 = vpop.f32.mrf.mxu0
        %5142 = vmatprep.mubr.f32.mxu0 0.0
        %5143 = vmatmul.mubr.f32.gmra.mxu0 %v3341
        %v5144 = vpop.f32.mrf.mxu0
        %v5145 = vadd.f32 0.0, %v5144
        %v5146 = vpop.f32.mrf.mxu0
        %5147 = vmatprep.mubr.f32.mxu0 0.0
        %5148 = vmatmul.mubr.f32.gmra.mxu0 %v3344
        %v5149 = vpop.f32.mrf.mxu0
        %v5150 = vadd.f32 0.0, %v5149
        %v5151 = vpop.f32.mrf.mxu0
        %5152 = vmatprep.mubr.f32.mxu0 0.0
        %5153 = vmatmul.mubr.f32.gmra.mxu0 %v3573
        %v5154 = vpop.f32.mrf.mxu0
        %v5155 = vadd.f32 0.0, %v5154
        %v5156 = vpop.f32.mrf.mxu0
        %5157 = vmatprep.mubr.f32.mxu0 0.0
        %5158 = vmatmul.mubr.f32.gmra.mxu0 %v3790
        %v5159 = vpop.f32.mrf.mxu0
        %v5160 = vpop.f32.mrf.mxu0
        %5161 = vmatprep.mubr.f32.mxu0 0.0
        %5162 = vmatmul.mubr.f32.gmra.mxu0 %v3353
        %v5163 = vpop.f32.mrf.mxu0
        %v5164 = vadd.f32 0.0, %v5163
        %v5165 = vpop.f32.mrf.mxu0
        %5166 = vmatprep.mubr.f32.mxu0 0.0
        %5167 = vmatmul.mubr.f32.gmra.mxu0 %v3356
        %v5168 = vpop.f32.mrf.mxu0
        %v5169 = vadd.f32 0.0, %v5168
        %v5170 = vpop.f32.mrf.mxu0
        %5171 = vmatprep.mubr.f32.mxu0 0.0
        %5172 = vmatmul.mubr.f32.gmra.mxu0 %v3359
        %v5173 = vpop.f32.mrf.mxu0
        %v5174 = vadd.f32 0.0, %v5173
        %v5175 = vpop.f32.mrf.mxu0
        %5176 = vmatprep.mubr.f32.mxu0 0.0
        %5177 = vmatmul.mubr.f32.gmra.mxu0 %v3576
        %v5178 = vpop.f32.mrf.mxu0
        %v5179 = vadd.f32 0.0, %v5178
        %v5180 = vpop.f32.mrf.mxu0
        %5181 = vmatprep.mubr.f32.mxu0 0.0
        %5182 = vmatmul.mubr.f32.gmra.mxu0 %v3793
        %v5183 = vpop.f32.mrf.mxu0
        %v5184 = vpop.f32.mrf.mxu0
        %5185 = vmatprep.mubr.f32.mxu0 0.0
        %5186 = vmatmul.mubr.f32.gmra.mxu0 %v4004
        %v5187 = vpop.f32.mrf.mxu0
        %v5188 = vadd.f32 0.0, %v5187
        %v5189 = vpop.f32.mrf.mxu0
        %5190 = vmatprep.mubr.f32.mxu0 0.0
        %5191 = vmatmul.mubr.f32.gmra.mxu0 %v4007
        %v5192 = vpop.f32.mrf.mxu0
        %v5193 = vadd.f32 0.0, %v5192
        %v5194 = vpop.f32.mrf.mxu0
        %5195 = vmatprep.mubr.f32.mxu0 0.0
        %5196 = vmatmul.mubr.f32.gmra.mxu0 %v4010
        %v5197 = vpop.f32.mrf.mxu0
        %v5198 = vadd.f32 0.0, %v5197
        %v5199 = vpop.f32.mrf.mxu0
        %5200 = vmatprep.mubr.f32.mxu0 0.0
        %5201 = vmatmul.mubr.f32.gmra.mxu0 %v4215
        %v5202 = vpop.f32.mrf.mxu0
        %v5203 = vadd.f32 0.0, %v5202
        %v5204 = vpop.f32.mrf.mxu0
        %5205 = vmatprep.mubr.f32.mxu0 0.0
        %5206 = vmatmul.mubr.f32.gmra.mxu0 %v4420
        %v5207 = vpop.f32.mrf.mxu0
        %v5208 = vpop.f32.mrf.mxu0
        %5209 = vmatprep.mubr.f32.mxu0 0.0
        %5210 = vmatmul.mubr.f32.gmra.mxu0 %v4631
        %v5211 = vpop.f32.mrf.mxu0
        %v5212 = vpop.f32.mrf.mxu0
        %5213 = vmatprep.mubr.f32.mxu0 0.0
        %5214 = vmatmul.mubr.f32.gmra.mxu0 %v4634
        %v5215 = vpop.f32.mrf.mxu0
        %v5216 = vpop.f32.mrf.mxu0
        %5217 = vmatprep.mubr.f32.mxu0 0.0
        %5218 = vmatmul.mubr.f32.gmra.mxu0 %v4637
        %v5219 = vpop.f32.mrf.mxu0
        %v5220 = vpop.f32.mrf.mxu0
        %5221 = vmatprep.mubr.f32.mxu0 0.0
        %5222 = vmatmul.mubr.f32.gmra.mxu0 %v4842
        %v5223 = vpop.f32.mrf.mxu0
        %v5224 = vpop.f32.mrf.mxu0
        %5225 = vmatprep.mubr.f32.mxu0 0.0
        %5226 = vmatmul.mubr.f32.gmra.mxu0 %v5047
        %v5227 = vpop.f32.mrf.mxu0
        %v5228 = vpop.f32.mrf.mxu0
        %5229 = vdwg.mxu0
        %v5230 = vadd.f32 %v5025, %v5116
        %v5231 = vadd.f32 %v5026, %v5121
        %v5232 = vadd.f32 %v5027, %v5126
        %v5233 = vadd.f32 %v5028, %v5131
        %v5234 = vadd.f32 %v5029, %v5140
        %v5235 = vadd.f32 %v5030, %v5145
        %v5236 = vadd.f32 %v5031, %v5150
        %v5237 = vadd.f32 %v5032, %v5155
        %v5238 = vadd.f32 %v5033, %v5164
        %v5239 = vadd.f32 %v5034, %v5169
        %v5240 = vadd.f32 %v5035, %v5174
        %v5241 = vadd.f32 %v5036, %v5179
        %v5242 = vadd.f32 %v5037, %v5188
        %v5243 = vadd.f32 %v5038, %v5193
        %v5244 = vadd.f32 %v5039, %v5198
        %v5245 = vadd.f32 %v5040, %v5203
        %v5246 = vmax.f32 %v5230, 0.0
        %v5247 = vmax.f32 %v5231, 0.0
        %v5248 = vmax.f32 %v5232, 0.0
        %v5249 = vmax.f32 %v5233, 0.0
        %v5250 = vmax.f32 %v5234, 0.0
        %v5251 = vmax.f32 %v5235, 0.0
        %v5252 = vmax.f32 %v5236, 0.0
        %v5253 = vmax.f32 %v5237, 0.0
        %v5254 = vmax.f32 %v5238, 0.0
        %v5255 = vmax.f32 %v5239, 0.0
        %v5256 = vmax.f32 %v5240, 0.0
        %v5257 = vmax.f32 %v5241, 0.0
        %v5258 = vmax.f32 %v5242, 0.0
        %v5259 = vmax.f32 %v5243, 0.0
        %v5260 = vmax.f32 %v5244, 0.0
        %v5261 = vmax.f32 %v5245, 0.0
        %v5262 = vmax.f32 %v5246, %v5250
        %v5263 = vmax.f32 %v5247, %v5251
        %v5264 = vmax.f32 %v5248, %v5252
        %v5265 = vmax.f32 %v5249, %v5253
        %v5266 = vmax.f32 %v5254, %v5258
        %v5267 = vmax.f32 %v5255, %v5259
        %v5268 = vmax.f32 %v5256, %v5260
        %v5269 = vmax.f32 %v5257, %v5261
        %v5270 = vmax.f32 %v5262, %v5263
        %v5271 = vmax.f32 %v5264, %v5265
        %v5272 = vmax.f32 %v5266, %v5267
        %v5273 = vmax.f32 %v5268, %v5269
        %vm5274 = vcmask 523264
        %v5275 = vsel %vm5274, %v5270, 0.0
        %v5276 = vsel %vm5274, %v5271, 0.0
        %v5277 = vadd.f32 %v5275, %v5276
        %v5278 = vsel %vm5274, %v5272, 0.0
        %v5279 = vadd.f32 %v5277, %v5278
        %v5280 = vsel %vm5274, %v5273, 0.0
        %v5281 = vadd.f32 %v5279, %v5280
        %v5282 = vmul.f32 %v5281, 0.25
        %v5283 = vld [vmem:[%s5] sm:$0xff]
        %v5284 = vld [vmem:[%s5 + $0x8] sm:$0xff]
        %v5285 = vld [vmem:[%s5 + $0x10] sm:$0xff]
        %v5286 = vld [vmem:[%s5 + $0x18] sm:$0xff]
        %v5287 = vld [vmem:[%s5 + $0x20] sm:$0xff]
        %v5288 = vld [vmem:[%s5 + $0x28] sm:$0xff]
        %v5289 = vld [vmem:[%s5 + $0x30] sm:$0xff]
        %v5290 = vld [vmem:[%s5 + $0x38] sm:$0xff]
        %v5291 = vld [vmem:[%s6] sm:$0x1]
        %v5293 = vlaneseq
        %v5294 = vshrl.u32 %v5293, 7
        %v5295 = vsub.s32 0, %v5294
        %v5296 = vrot.slane %v5291, %v5295
        %v5299 = vsel %vm5274, %v5282, 0
        %5301 = vmatprep.subr.mxu0 0.0
        %5302 = vmatpush1.msra.mxu0 0.0
        %5303 = vmatprep.subr.mxu0 0.0
        %5304 = vmatpush1.msra.mxu0 0.0
        %5305 = vmatprep.subr.mxu0 0.0
        %5306 = vmatpush1.msra.mxu0 0.0
        %5307 = vmatprep.subr.mxu0 0.0
        %5308 = vmatpush1.msra.mxu0 0.0
        %5309 = vmatprep.subr.mxu0 0.0
        %5310 = vmatpush1.msra.mxu0 0.0
        %5311 = vmatprep.subr.mxu0 0.0
        %5312 = vmatpush1.msra.mxu0 0.0
        %5313 = vmatprep.subr.mxu0 0.0
        %5314 = vmatpush1.msra.mxu0 0.0
        %5315 = vmatprep.subr.mxu0 0.0
        %5316 = vmatpush1.msra.mxu0 0.0
        %5317 = vmatprep.subr.mxu0 0.0
        %5318 = vmatpush1.msra.mxu0 %v5290
        %5319 = vmatprep.subr.mxu0 0.0
        %5320 = vmatpush1.msra.mxu0 %v5289
        %5321 = vmatprep.subr.mxu0 0.0
        %5322 = vmatpush1.msra.mxu0 %v5288
        %5323 = vmatprep.subr.mxu0 0.0
        %5324 = vmatpush1.msra.mxu0 %v5287
        %5325 = vmatprep.subr.mxu0 0.0
        %5326 = vmatpush1.msra.mxu0 %v5286
        %5327 = vmatprep.subr.mxu0 0.0
        %5328 = vmatpush1.msra.mxu0 %v5285
        %5329 = vmatprep.subr.mxu0 0.0
        %5330 = vmatpush1.msra.mxu0 %v5284
        %5331 = vmatprep.subr.mxu0 0.0
        %5332 = vmatpush1.msra.mxu0 %v5283
        %5333 = vmatprep.subr.mxu0 0.0
        %5334 = vmatpush2.msra.mxu0 0.0
        %5335 = vmatprep.subr.mxu0 0.0
        %5336 = vmatpush2.msra.mxu0 0.0
        %5337 = vmatprep.subr.mxu0 0.0
        %5338 = vmatpush2.msra.mxu0 0.0
        %5339 = vmatprep.subr.mxu0 0.0
        %5340 = vmatpush2.msra.mxu0 0.0
        %5341 = vmatprep.subr.mxu0 0.0
        %5342 = vmatpush2.msra.mxu0 0.0
        %5343 = vmatprep.subr.mxu0 0.0
        %5344 = vmatpush2.msra.mxu0 0.0
        %5345 = vmatprep.subr.mxu0 0.0
        %5346 = vmatpush2.msra.mxu0 0.0
        %5347 = vmatprep.subr.mxu0 0.0
        %5348 = vmatpush2.msra.mxu0 0.0
        %5349 = vmatprep.subr.mxu0 0.0
        %5350 = vmatpush2.msra.mxu0 0.0
        %5351 = vmatprep.subr.mxu0 0.0
        %5352 = vmatpush2.msra.mxu0 0.0
        %5353 = vmatprep.subr.mxu0 0.0
        %5354 = vmatpush2.msra.mxu0 0.0
        %5355 = vmatprep.subr.mxu0 0.0
        %5356 = vmatpush2.msra.mxu0 0.0
        %5357 = vmatprep.subr.mxu0 0.0
        %5358 = vmatpush2.msra.mxu0 0.0
        %5359 = vmatprep.subr.mxu0 0.0
        %5360 = vmatpush2.msra.mxu0 0.0
        %5361 = vmatprep.subr.mxu0 0.0
        %5362 = vmatpush2.msra.mxu0 0.0
        %5363 = vmatprep.subr.mxu0 0.0
        %5364 = vmatpush2.msra.mxu0 0.0
        %5365 = vmatprep.mubr.f32.mxu0 0.0
        %5366 = vmatmul.mubr.f32.gmra.mxu0 %v5299
        %v5367 = vpop.f32.mrf.mxu0
        %v5368 = vadd.f32 %v5296, %v5367
        %v5369 = vpop.f32.mrf.mxu0
        %5370 = vdwg.mxu0
        %vm5371 = vcmask 80896
        %5372 = vst.msk [vmem:[%s1091] sm:$0xff] %vm5371, %v5368
        %s5373 = sand.u32 %s181, 1
        %s5374 = scalar_lea.sflag [#allocation4], %s5373
        %s5375 = sand.u32 %s181, 1
        %s5376 = smul.addr %s5375, 8
        %s5377 = scalar_lea.vmem [#allocation3], %s5376
        // Predicated region
        $region87: #{cnn_forward.1} parent=81 // pred_check
          %p5378 = pneg %p191
        $region88: #{cnn_forward.1} parent=81 // pred_check_branch
          %5380 = sbr.rel (%p5378) target = $region90
        $region89: #{cnn_forward.1} parent=81 // pred_region
          %s5382 = ssub.s32 128, 128
          %5383 = vsyncadd %s5374, %s5382
          %s5384 = smul.addr %s21, 128
          %s5385 = scalar_lea.hbm %s7, %s5384
          %s5387 = sshll.u32 %s5377, 4
          %s5388 = int_to_ptr.vmem [resolvable:$true] %s5387
          %5390 = dma.vmem_to_hbm [thread:$0]  %s5388, 128, %s5385, %s5374
        $region90: #{cnn_forward.1} parent=81 // pred_fallthru
          _
      $region82: #{cnn_forward.1} parent=5 // pred_fallthru
        _
      %p5391 = scmp.le.s32.totalorder 2, %s16
      // Predicated region
      $region91: #{cnn_forward.1} parent=5 // pred_check
        %p5392 = pneg %p5391
      $region92: #{cnn_forward.1} parent=5 // pred_check_branch
        %5394 = sbr.rel (%p5392) target = $region94
      $region93: #{cnn_forward.1} parent=5 // pred_region
        %s5395 = ssub.s32 %s16, 2
        // Predicated region
        $region95: #{cnn_forward.1} parent=93 // pred_check
          %p5396 = pneg %p197
        $region96: #{cnn_forward.1} parent=93 // pred_check_branch
          %5398 = sbr.rel (%p5396) target = $region98
        $region97: #{cnn_forward.1} parent=93 // pred_region
          %s5399 = sand.u32 %s182, 1
          %s5400 = scalar_lea.sflag [#allocation4], %s5399
          %s5401 = sand.u32 %s182, 1
          %s5402 = smul.addr %s5401, 8
          %s5403 = scalar_lea.vmem [#allocation3], %s5402
          %5404 = dma.done %s5400, 128
        $region98: #{cnn_forward.1} parent=93 // pred_fallthru
          _
      $region94: #{cnn_forward.1} parent=5 // pred_fallthru
        _
    $region6: #{cnn_forward.1} parent=1 // loop_footer
      %s20 = sadd.s32 1, %s16
    $region7: #{cnn_forward.1} parent=1 // loop_footer_branch
      %15 = sbr.rel target = $region3
    $region8: #{cnn_forward.1} parent=1 // loop_exit
      _
    %5405 = vsyncpa [#allocation4], 1
    %s5406 = scalar_lea.sflag [#allocation4], 1
    %5407 = vsyncpa %s5406, 1

</llo_original>
